<compile_context>
chip_gen: v6e
topology: v6e:2x2x1
jax: 0.10.0
libtpu: 0.0.40
codegen_flags: <defaults>
</compile_context>

<pallas_src>
from functools import partial

import jax
import jax.numpy as jnp
from jax import lax
from jax.experimental import pallas as pl
from jax.experimental.pallas import tpu as pltpu


def _attention_kernel(n_heads, d_head, tq, t_actual, mxu_dtype,
                      x_ref, wqkv_ref, bqkv_ref, wo_ref, bo_ref,
                      out_ref, qkv_scratch, o_scratch):
    qi = pl.program_id(1)
    T_pad = x_ref.shape[1]
    Hdh = n_heads * d_head

    # ---- once per batch element: fused QKV projection for the whole token slab,
    #      chunked over rows so the f32 transient is only (tq, 3*Hdh).
    @pl.when(qi == 0)
    def _():
        n_chunks = T_pad // tq

        @pl.loop(0, n_chunks)
        def _(c):
            r0 = pl.multiple_of(c * tq, tq)
            xc = x_ref[0, pl.ds(r0, tq), :]                       # bf16 (tq, D)
            qkv = jnp.dot(xc, wqkv_ref[...],
                          preferred_element_type=jnp.float32)     # f32 accumulate
            qkv = qkv + bqkv_ref[...]
            qkv_scratch[pl.ds(r0, tq), :] = qkv.astype(qkv_scratch.dtype)

    # ---- this query block.
    q_start = pl.multiple_of(qi * tq, tq)

    # Key-padding mask (only materialized when T was padded to T_pad).
    if t_actual != T_pad:
        col = lax.broadcasted_iota(jnp.int32, (1, T_pad), 1)
        kv_valid = col < t_actual                                  # (1, T_pad)

    for h in range(n_heads):
        lo = h * d_head
        q_h = qkv_scratch[pl.ds(q_start, tq), pl.ds(lo, d_head)]            # (tq, dh)
        k_h = qkv_scratch[pl.ds(0, T_pad), pl.ds(Hdh + lo, d_head)]         # (T,  dh)
        v_h = qkv_scratch[pl.ds(0, T_pad), pl.ds(2 * Hdh + lo, d_head)]     # (T,  dh)

        # scores: contract d_head of both operands (no in-kernel transpose);
        # the 1/sqrt(d_head) scale is already folded into the Q weights/bias.
        s = lax.dot_general(q_h, k_h, (((1,), (1,)), ((), ())),
                            preferred_element_type=jnp.float32)             # (tq, T) f32
        if t_actual != T_pad:
            s = jnp.where(kv_valid, s, -1e30)
        m = jnp.max(s, axis=-1, keepdims=True)
        p = jnp.exp(s - m)                                                   # f32 softmax math
        l = jnp.sum(p, axis=-1, keepdims=True)
        o_h = jnp.dot(p.astype(mxu_dtype), v_h,
                      preferred_element_type=jnp.float32)                    # (tq, dh) f32
        # fold 1/l into the small per-head output (EUP approx reciprocal) and
        # write it straight into the stacked head-output scratch.
        o_scratch[:, pl.ds(lo, d_head)] = (
            o_h * pl.reciprocal(l, approx=True)).astype(o_scratch.dtype)

    # ---- single stacked output projection: (tq, H*dh) @ (H*dh, D).
    out = jnp.dot(o_scratch[...], wo_ref[...],
                  preferred_element_type=jnp.float32)                        # (tq, D)
    out = out + bo_ref[...]
    out_ref[0] = out.astype(out_ref.dtype)


def _const_spec(shape):
    """BlockSpec for a tile whose block index never changes (weights/biases)."""
    index_map = lambda b, q: (0,) * len(shape)
    try:
        # single-buffer: constant index means double-buffering buys nothing.
        return pl.BlockSpec(shape, index_map, pipeline_mode=pl.Buffered(1))
    except Exception:
        return pl.BlockSpec(shape, index_map)


def _vmem_limit_bytes():
    """Generation-gated scoped-VMEM budget with headroom for Mosaic scratch."""
    try:
        cap = pltpu.get_tpu_info().vmem_capacity_bytes
    except Exception:
        cap = 64 * 1024 * 1024          # conservative (v7x per-TC); safe everywhere
    return int(min(cap - 16 * 1024 * 1024, 100 * 1024 * 1024))


def attention_pallas(x, params, *, mxu_dtype=jnp.bfloat16):
    wq, bq, wk, bk, wv, bv, wo, bo = params
    B, T, D = x.shape
    H, dh, _ = wq.shape
    Hdh = H * dh
    scale = 1.0 / (dh ** 0.5)

    # ---- wrapper-side layout plumbing: fuse heads, pre-transpose, fold the
    #      1/sqrt(d_head) scale into the Q weights/bias, pre-cast to bf16.
    w_qkv = jnp.concatenate(
        [scale * wq.reshape(Hdh, D), wk.reshape(Hdh, D), wv.reshape(Hdh, D)],
        axis=0).T.astype(mxu_dtype)                                           # (D, 3*Hdh)
    b_qkv = jnp.concatenate(
        [scale * bq.reshape(-1), bk.reshape(-1), bv.reshape(-1)]
    )[None, :].astype(jnp.float32)                                            # (1, 3*Hdh)
    w_o = jnp.transpose(wo, (0, 2, 1)).reshape(Hdh, D).astype(mxu_dtype)      # (H*dh, D)
    b_o = bo[None, :].astype(jnp.float32)                                     # (1, D)

    # ---- generation-gated tiling.
    vmem_limit = _vmem_limit_bytes()
    tq = 256 if vmem_limit >= 96 * 1024 * 1024 else 128   # bigger blocks where VMEM allows
    tq = min(tq, ((T + 127) // 128) * 128)                # don't exceed (padded) seq length
    T_pad = pl.cdiv(T, tq) * tq
    nq = T_pad // tq

    x_in = x.astype(mxu_dtype)                            # half-width input DMA / slab
    if T_pad != T:
        x_in = jnp.pad(x_in, ((0, 0), (0, T_pad - T), (0, 0)))

    kernel = partial(_attention_kernel, H, dh, tq, T, mxu_dtype)

    out = pl.pallas_call(
        kernel,
        out_shape=jax.ShapeDtypeStruct((B, T_pad, D), x.dtype),
        grid=(B, nq),
        in_specs=[
            # x: one batch element's full (padded) token slab; block index only
            # changes with b, so it is not re-DMAed across q blocks.
            pl.BlockSpec((1, T_pad, D), lambda b, q: (b, 0, 0)),
            _const_spec((D, 3 * Hdh)),      # fused, pre-transposed QKV weights
            _const_spec((1, 3 * Hdh)),      # fused QKV bias (Q part pre-scaled)
            _const_spec((Hdh, D)),          # stacked output weights
            _const_spec((1, D)),            # output bias
        ],
        out_specs=pl.BlockSpec((1, tq, D), lambda b, q: (b, q, 0)),  # lane-dense D
        scratch_shapes=[
            pltpu.VMEM((T_pad, 3 * Hdh), mxu_dtype),   # per-batch QKV, persists across q blocks
            pltpu.VMEM((tq, Hdh), mxu_dtype),          # per-step normalized head outputs
        ],
        compiler_params=pltpu.CompilerParams(
            dimension_semantics=("parallel", "arbitrary"),
            vmem_limit_bytes=vmem_limit,
        ),
    )(x_in, w_qkv, b_qkv, w_o, b_o)

    if T_pad != T:
        out = out[:, :T, :]
    return out


def attention_ref(x, params):
    """Pure-JAX reference matching the PyTorch forward exactly."""
    wq, bq, wk, bk, wv, bv, wo, bo = params
    dh = wq.shape[1]
    Q = jnp.einsum('btd,hed->bthe', x, wq) + bq
    K = jnp.einsum('btd,hed->bthe', x, wk) + bk
    V = jnp.einsum('btd,hed->bthe', x, wv) + bv
    s = jnp.einsum('bqhe,bkhe->bhqk', Q, K) / (dh ** 0.5)
    a = jax.nn.softmax(s, axis=-1)
    o = jnp.einsum('bhqk,bkhe->bqhe', a, V)
    return jnp.einsum('bqhe,hde->bqd', o, wo) + bo


def init_params(key, d_model, d_head, n_heads):
    """Deterministic kaiming-normal-style init (std = sqrt(2 / fan_in))."""
    k1, k2, k3, k4 = jax.random.split(key, 4)
    std = (2.0 / (d_head * d_model)) ** 0.5       # fan_in = size(1) * prod(sizes[2:])
    wq = std * jax.random.normal(k1, (n_heads, d_head, d_model), jnp.float32)
    wk = std * jax.random.normal(k2, (n_heads, d_head, d_model), jnp.float32)
    wv = std * jax.random.normal(k3, (n_heads, d_head, d_model), jnp.float32)
    wo = std * jax.random.normal(k4, (n_heads, d_model, d_head), jnp.float32)
    bq = jnp.zeros((n_heads, d_head), jnp.float32)
    bk = jnp.zeros((n_heads, d_head), jnp.float32)
    bv = jnp.zeros((n_heads, d_head), jnp.float32)
    bo = jnp.zeros((d_model,), jnp.float32)
    return (wq, bq, wk, bk, wv, bv, wo, bo)


if __name__ == "__main__":
    # Small lane-aligned shapes that still exercise multi-head fusion, query-block
    # tiling, and the fused QKV / output projections.
    batch, tok, d_model, d_head, n_heads = 2, 256, 256, 128, 2

    key = jax.random.PRNGKey(0)
    kx, kp = jax.random.split(key)
    x = jax.random.normal(kx, (batch, tok, d_model), jnp.float32)
    params = init_params(kp, d_model, d_head, n_heads)

    out = attention_pallas(x, params)               # bf16-MXU / f32-accumulate path
    out = jax.block_until_ready(out)

    ref = attention_ref(x, params)
    assert out.shape == (batch, tok, d_model)
    rel_err = jnp.linalg.norm(out - ref) / jnp.linalg.norm(ref)
    assert bool(rel_err < 3e-2), f"relative error too large: {rel_err}"

    print("KERNEL_OK")
</pallas_src>

<mosaic_0001>
module attributes {stable_mosaic.version = 11 : i64} {
  func.func @_attention_kernel(%arg0: i32, %arg1: i32, %arg2: memref<1x256x256xbf16, #tpu.memory_space<vmem>>, %arg3: memref<256x768xbf16, #tpu.memory_space<vmem>>, %arg4: memref<1x768xf32, #tpu.memory_space<vmem>>, %arg5: memref<256x256xbf16, #tpu.memory_space<vmem>>, %arg6: memref<1x256xf32, #tpu.memory_space<vmem>>, %arg7: memref<1x128x256xf32, #tpu.memory_space<vmem>>, %arg8: memref<256x768xbf16, #tpu.memory_space<vmem>>, %arg9: memref<128x256xbf16, #tpu.memory_space<vmem>>) attributes {dimension_semantics = [#tpu.dimension_semantics<parallel>, #tpu.dimension_semantics<arbitrary>], iteration_bounds = array<i64: 2, 2>, scalar_prefetch = 0 : i64, scratch_operands = 2 : i64, tpu.core_type = #tpu.core_type<tc>, window_params = [{transform_indices = @transform_0, window_bounds = array<i64: 1, 256, 256>}, {pipeline_mode = #tpu.pipeline_mode<synchronous>, transform_indices = @transform_1, window_bounds = array<i64: 256, 768>}, {pipeline_mode = #tpu.pipeline_mode<synchronous>, transform_indices = @transform_2, window_bounds = array<i64: 1, 768>}, {pipeline_mode = #tpu.pipeline_mode<synchronous>, transform_indices = @transform_3, window_bounds = array<i64: 256, 256>}, {pipeline_mode = #tpu.pipeline_mode<synchronous>, transform_indices = @transform_4, window_bounds = array<i64: 1, 256>}, {transform_indices = @transform_5, window_bounds = array<i64: 1, 128, 256>}]} {
    %c0_i32 = arith.constant 0 : i32
    %0 = arith.cmpi eq, %arg1, %c0_i32 : i32
    %1 = arith.extui %0 : i1 to i32
    %c0_i32_0 = arith.constant 0 : i32
    %2 = arith.cmpi ne, %1, %c0_i32_0 : i32
    scf.if %2 {
      %c0_i32_26 = arith.constant 0 : i32
      %c2_i32 = arith.constant 2 : i32
      %52 = arith.addi %c0_i32_26, %c2_i32 : i32
      %c1_i32 = arith.constant 1 : i32
      scf.for %arg10 = %c0_i32_26 to %52 step %c1_i32  : i32 {
        %c1_i32_28 = arith.constant 1 : i32
        %53 = arith.muli %arg10, %c1_i32_28 : i32
        %c0_i32_29 = arith.constant 0 : i32
        %54 = arith.addi %c0_i32_29, %53 : i32
        %c128_i32_30 = arith.constant 128 : i32
        %55 = arith.muli %54, %c128_i32_30 : i32
        %56 = tpu.assume_multiple %55, 128 : i32
        %c0_31 = arith.constant 0 : index
        %57 = arith.index_cast %56 : i32 to index
        %c0_32 = arith.constant 0 : index
        %58 = vector.load %arg2[%c0_31, %57, %c0_32] : memref<1x256x256xbf16, #tpu.memory_space<vmem>>, vector<1x128x256xbf16>
        %59 = vector.shape_cast %58 : vector<1x128x256xbf16> to vector<128x256xbf16>
        %c0_33 = arith.constant 0 : index
        %c0_34 = arith.constant 0 : index
        %60 = vector.load %arg3[%c0_33, %c0_34] : memref<256x768xbf16, #tpu.memory_space<vmem>>, vector<256x768xbf16>
        %cst_35 = arith.constant dense<0.000000e+00> : vector<128x768xf32>
        %61 = tpu.matmul %59, %60, %cst_35 {dimension_numbers = #tpu.dot_dimension_numbers<[1], [0], [0], [1], [0, 0, 1, 1], [], []>} : vector<128x256xbf16>, vector<256x768xbf16>, vector<128x768xf32> -> vector<128x768xf32>
        %c0_36 = arith.constant 0 : index
        %c0_37 = arith.constant 0 : index
        %62 = vector.load %arg4[%c0_36, %c0_37] : memref<1x768xf32, #tpu.memory_space<vmem>>, vector<1x768xf32>
        %63 = vector.broadcast %62 : vector<1x768xf32> to vector<128x768xf32>
        %64 = arith.addf %61, %63 : vector<128x768xf32>
        %65 = arith.truncf %64 : vector<128x768xf32> to vector<128x768xbf16>
        %66 = arith.index_cast %56 : i32 to index
        %c0_38 = arith.constant 0 : index
        %67 = vector.load %arg8[%66, %c0_38] : memref<256x768xbf16, #tpu.memory_space<vmem>>, vector<128x768xbf16>
        tpu.vector_store %arg8[%66, %c0_38], %65 {strides = array<i32>} : memref<256x768xbf16, #tpu.memory_space<vmem>>, vector<128x768xbf16>,
      }
      %c2_i32_27 = arith.constant 2 : i32
    } else {
    }
    %c128_i32 = arith.constant 128 : i32
    %3 = arith.muli %arg1, %c128_i32 : i32
    %4 = tpu.assume_multiple %3, 128 : i32
    %5 = arith.index_cast %4 : i32 to index
    %c0 = arith.constant 0 : index
    %6 = vector.load %arg8[%5, %c0] : memref<256x768xbf16, #tpu.memory_space<vmem>>, vector<128x128xbf16>
    %c0_1 = arith.constant 0 : index
    %c256 = arith.constant 256 : index
    %7 = vector.load %arg8[%c0_1, %c256] : memref<256x768xbf16, #tpu.memory_space<vmem>>, vector<256x128xbf16>
    %c0_2 = arith.constant 0 : index
    %c512 = arith.constant 512 : index
    %8 = vector.load %arg8[%c0_2, %c512] : memref<256x768xbf16, #tpu.memory_space<vmem>>, vector<256x128xbf16>
    %cst = arith.constant dense<0.000000e+00> : vector<128x256xf32>
    %9 = tpu.matmul %6, %7, %cst {dimension_numbers = #tpu.dot_dimension_numbers<[1], [1], [0], [0], [0, 0, 1, 0], [], []>} : vector<128x128xbf16>, vector<256x128xbf16>, vector<128x256xf32> -> vector<128x256xf32>
    %cst_3 = arith.constant dense<0xFF800000> : vector<128xf32>
    %10 = vector.multi_reduction <maximumf>, %9, %cst_3 [1] : vector<128x256xf32> to vector<128xf32>
    %11 = vector.shape_cast %10 : vector<128xf32> to vector<128x1xf32>
    %12 = vector.broadcast %11 : vector<128x1xf32> to vector<128x256xf32>
    %13 = arith.subf %9, %12 : vector<128x256xf32>
    %14 = math.exp %13 : vector<128x256xf32>
    %cst_4 = arith.constant dense<0.000000e+00> : vector<128xf32>
    %15 = vector.multi_reduction <add>, %14, %cst_4 [1] : vector<128x256xf32> to vector<128xf32>
    %16 = vector.shape_cast %15 : vector<128xf32> to vector<128x1xf32>
    %17 = arith.truncf %14 : vector<128x256xf32> to vector<128x256xbf16>
    %cst_5 = arith.constant dense<0.000000e+00> : vector<128x128xf32>
    %18 = tpu.matmul %17, %8, %cst_5 {dimension_numbers = #tpu.dot_dimension_numbers<[1], [0], [0], [1], [0, 0, 1, 1], [], []>} : vector<128x256xbf16>, vector<256x128xbf16>, vector<128x128xf32> -> vector<128x128xf32>
    %19 = tpu.reciprocal %16 {approx = true} : vector<128x1xf32> -> vector<128x1xf32>
    %20 = vector.broadcast %19 : vector<128x1xf32> to vector<128x128xf32>
    %21 = arith.mulf %18, %20 : vector<128x128xf32>
    %22 = arith.truncf %21 : vector<128x128xf32> to vector<128x128xbf16>
    %c0_6 = arith.constant 0 : index
    %c0_7 = arith.constant 0 : index
    %23 = vector.load %arg9[%c0_6, %c0_7] : memref<128x256xbf16, #tpu.memory_space<vmem>>, vector<128x128xbf16>
    tpu.vector_store %arg9[%c0_6, %c0_7], %22 {strides = array<i32>} : memref<128x256xbf16, #tpu.memory_space<vmem>>, vector<128x128xbf16>,
    %24 = arith.index_cast %4 : i32 to index
    %c128 = arith.constant 128 : index
    %25 = vector.load %arg8[%24, %c128] : memref<256x768xbf16, #tpu.memory_space<vmem>>, vector<128x128xbf16>
    %c0_8 = arith.constant 0 : index
    %c384 = arith.constant 384 : index
    %26 = vector.load %arg8[%c0_8, %c384] : memref<256x768xbf16, #tpu.memory_space<vmem>>, vector<256x128xbf16>
    %c0_9 = arith.constant 0 : index
    %c640 = arith.constant 640 : index
    %27 = vector.load %arg8[%c0_9, %c640] : memref<256x768xbf16, #tpu.memory_space<vmem>>, vector<256x128xbf16>
    %cst_10 = arith.constant dense<0.000000e+00> : vector<128x256xf32>
    %28 = tpu.matmul %25, %26, %cst_10 {dimension_numbers = #tpu.dot_dimension_numbers<[1], [1], [0], [0], [0, 0, 1, 0], [], []>} : vector<128x128xbf16>, vector<256x128xbf16>, vector<128x256xf32> -> vector<128x256xf32>
    %cst_11 = arith.constant dense<0xFF800000> : vector<128xf32>
    %29 = vector.multi_reduction <maximumf>, %28, %cst_11 [1] : vector<128x256xf32> to vector<128xf32>
    %30 = vector.shape_cast %29 : vector<128xf32> to vector<128x1xf32>
    %31 = vector.broadcast %30 : vector<128x1xf32> to vector<128x256xf32>
    %32 = arith.subf %28, %31 : vector<128x256xf32>
    %33 = math.exp %32 : vector<128x256xf32>
    %cst_12 = arith.constant dense<0.000000e+00> : vector<128xf32>
    %34 = vector.multi_reduction <add>, %33, %cst_12 [1] : vector<128x256xf32> to vector<128xf32>
    %35 = vector.shape_cast %34 : vector<128xf32> to vector<128x1xf32>
    %36 = arith.truncf %33 : vector<128x256xf32> to vector<128x256xbf16>
    %cst_13 = arith.constant dense<0.000000e+00> : vector<128x128xf32>
    %37 = tpu.matmul %36, %27, %cst_13 {dimension_numbers = #tpu.dot_dimension_numbers<[1], [0], [0], [1], [0, 0, 1, 1], [], []>} : vector<128x256xbf16>, vector<256x128xbf16>, vector<128x128xf32> -> vector<128x128xf32>
    %38 = tpu.reciprocal %35 {approx = true} : vector<128x1xf32> -> vector<128x1xf32>
    %39 = vector.broadcast %38 : vector<128x1xf32> to vector<128x128xf32>
    %40 = arith.mulf %37, %39 : vector<128x128xf32>
    %41 = arith.truncf %40 : vector<128x128xf32> to vector<128x128xbf16>
    %c0_14 = arith.constant 0 : index
    %c128_15 = arith.constant 128 : index
    %42 = vector.load %arg9[%c0_14, %c128_15] : memref<128x256xbf16, #tpu.memory_space<vmem>>, vector<128x128xbf16>
    tpu.vector_store %arg9[%c0_14, %c128_15], %41 {strides = array<i32>} : memref<128x256xbf16, #tpu.memory_space<vmem>>, vector<128x128xbf16>,
    %c0_16 = arith.constant 0 : index
    %c0_17 = arith.constant 0 : index
    %43 = vector.load %arg9[%c0_16, %c0_17] : memref<128x256xbf16, #tpu.memory_space<vmem>>, vector<128x256xbf16>
    %c0_18 = arith.constant 0 : index
    %c0_19 = arith.constant 0 : index
    %44 = vector.load %arg5[%c0_18, %c0_19] : memref<256x256xbf16, #tpu.memory_space<vmem>>, vector<256x256xbf16>
    %cst_20 = arith.constant dense<0.000000e+00> : vector<128x256xf32>
    %45 = tpu.matmul %43, %44, %cst_20 {dimension_numbers = #tpu.dot_dimension_numbers<[1], [0], [0], [1], [0, 0, 1, 1], [], []>} : vector<128x256xbf16>, vector<256x256xbf16>, vector<128x256xf32> -> vector<128x256xf32>
    %c0_21 = arith.constant 0 : index
    %c0_22 = arith.constant 0 : index
    %46 = vector.load %arg6[%c0_21, %c0_22] : memref<1x256xf32, #tpu.memory_space<vmem>>, vector<1x256xf32>
    %47 = vector.broadcast %46 : vector<1x256xf32> to vector<128x256xf32>
    %48 = arith.addf %45, %47 : vector<128x256xf32>
    %c0_23 = arith.constant 0 : index
    %c0_24 = arith.constant 0 : index
    %c0_25 = arith.constant 0 : index
    %49 = vector.load %arg7[%c0_23, %c0_24, %c0_25] : memref<1x128x256xf32, #tpu.memory_space<vmem>>, vector<1x128x256xf32>
    %50 = vector.shape_cast %49 : vector<1x128x256xf32> to vector<128x256xf32>
    %51 = vector.shape_cast %48 : vector<128x256xf32> to vector<1x128x256xf32>
    tpu.vector_store %arg7[%c0_23, %c0_24, %c0_25], %51 {strides = array<i32>} : memref<1x128x256xf32, #tpu.memory_space<vmem>>, vector<1x128x256xf32>,
    return
  }
  func.func @transform_0(%arg0: i32, %arg1: i32) -> (i32, i32, i32) {
    %c0_i32 = arith.constant 0 : i32
    %c0_i32_0 = arith.constant 0 : i32
    %c0_i32_1 = arith.constant 0 : i32
    return %arg0, %c0_i32, %c0_i32_0 : i32, i32, i32
  }
  func.func @transform_1(%arg0: i32, %arg1: i32) -> (i32, i32) {
    %c0_i32 = arith.constant 0 : i32
    %c0_i32_0 = arith.constant 0 : i32
    %c0_i32_1 = arith.constant 0 : i32
    return %c0_i32, %c0_i32_0 : i32, i32
  }
  func.func @transform_2(%arg0: i32, %arg1: i32) -> (i32, i32) {
    %c0_i32 = arith.constant 0 : i32
    %c0_i32_0 = arith.constant 0 : i32
    %c0_i32_1 = arith.constant 0 : i32
    return %c0_i32, %c0_i32_0 : i32, i32
  }
  func.func @transform_3(%arg0: i32, %arg1: i32) -> (i32, i32) {
    %c0_i32 = arith.constant 0 : i32
    %c0_i32_0 = arith.constant 0 : i32
    %c0_i32_1 = arith.constant 0 : i32
    return %c0_i32, %c0_i32_0 : i32, i32
  }
  func.func @transform_4(%arg0: i32, %arg1: i32) -> (i32, i32) {
    %c0_i32 = arith.constant 0 : i32
    %c0_i32_0 = arith.constant 0 : i32
    %c0_i32_1 = arith.constant 0 : i32
    return %c0_i32, %c0_i32_0 : i32, i32
  }
  func.func @transform_5(%arg0: i32, %arg1: i32) -> (i32, i32, i32) {
    %c0_i32 = arith.constant 0 : i32
    %c0_i32_0 = arith.constant 0 : i32
    return %arg0, %arg1, %c0_i32 : i32, i32, i32
  }
}

</mosaic_0001>

<llo_original>
// kernel: tpu_custom_call.1
$region0: #{tpu_custom_call.1}
  #allocation0 [shape = 'u32[]', space=smem, size = 0x4, offset = 0x4, fixed_abs, tag = 'smem constant byte address 0x4 - core index']
  #allocation1 [shape = 'u32[144,128]{1,0:T(1,128)}', space=vmem, size = 0x12000, scoped, tag = 'internal scratch']
  #allocation2 [shape = 'bf16[256,768]{1,0:T(8,128)(2,1)}', space=vmem, size = 0x60000, scoped, tag = 'scratch operand']
  #allocation3 [shape = 'bf16[128,256]{1,0:T(8,128)(2,1)}', space=vmem, size = 0x10000, scoped, tag = 'scratch operand']
  %s0 = inlined_call_operand.hbm [shape: bf16[2,256,256], index: 0, kind: input, shape index: {}]
  %s1 = inlined_call_operand.hbm [shape: bf16[256,768], index: 1, kind: input, shape index: {}]
  %s2 = inlined_call_operand.hbm [shape: f32[1,768], index: 2, kind: input, shape index: {}]
  %s3 = inlined_call_operand.hbm [shape: bf16[256,256], index: 3, kind: input, shape index: {}]
  %s4 = inlined_call_operand.vmem [shape: f32[1,256], index: 4, kind: input, shape index: {}]
  %s5 = inlined_call_operand.hbm [shape: f32[2,256,256], index: 5, kind: output, shape index: {}]
  %s6 = sld [smem:[#allocation0]]
  $region80: #{tpu_custom_call.1} parent=0
    _
  %s8 = ssub.s32 1, %s6
  %s9 = scalar_select 0, %s8, %s6
  $region1: #{tpu_custom_call.1} parent=0
    #allocation4 [shape = 'u8[262144]{0}', space=vmem, size = 0x40000, scoped, tag = 'input window, operand 0']
    #allocation5 [shape = 's32[2]{0}', space=sflag, size = 0x8, scoped, tag = 'scoped memory for tpu_custom_call.1']
    #allocation6 [shape = 's32[2]{0}', space=sflag, size = 0x8, scoped, tag = 'scoped memory for tpu_custom_call.1']
    #allocation7 [shape = 'u8[393216]{0}', space=vmem, size = 0x60000, scoped, tag = 'input window, operand 1, single buffered']
    #allocation8 [shape = 's32[1]{0}', space=sflag, size = 0x4, scoped, tag = 'scoped memory for tpu_custom_call.1']
    #allocation9 [shape = 'u8[3072]{0}', space=vmem, size = 0xc00, scoped, tag = 'input window, operand 2, single buffered']
    #allocation10 [shape = 'u8[131072]{0}', space=vmem, size = 0x20000, scoped, tag = 'input window, operand 3, single buffered']
    #allocation11 [shape = 's32[1]{0}', space=sflag, size = 0x4, scoped, tag = 'scoped memory for tpu_custom_call.1']
    #allocation12 [shape = 'u8[262144]{0}', space=vmem, size = 0x40000, scoped, tag = 'output window, operand 0']
    %10 = vsyncpa [#allocation5], 0
    %s11 = scalar_lea.sflag [#allocation5], 1
    %12 = vsyncpa %s11, 0
    %13 = vsyncpa [#allocation8], 0
    %14 = vsyncpa [#allocation11], 0
    %15 = vsyncpa [#allocation6], 0
    %s16 = scalar_lea.sflag [#allocation6], 1
    %17 = vsyncpa %s16, 0
    loop: start=0, step=1, limit=6
    $region2: #{tpu_custom_call.1} parent=1 // loop_pre_header
      _
    $region3: #{tpu_custom_call.1} parent=1 // loop_header
      %s19 = sphi 0, %s23
      %p20 = scmp.ge.s32.totalorder %s19, 6
      %s26 = sphi 0, %s38
      %s27 = sphi 0, %s34
      %s28 = sphi 0, %s26
      %s29 = sphi 0, %s27
      %s30 = sphi 0, %s28
      %s31 = sphi 0, %s29
      %s41 = sphi 0, %s43
      %s44 = sphi 0, %s41
      %s45 = sphi 0, %s44
      %s61 = sphi 0, %s45
      %s65 = sphi 0, %s65
      %s67 = sphi 0, %s65
      %s68 = sphi 0, %s67
      %s82 = sphi 0, %s68
      %s86 = sphi 0, %s86
      %s88 = sphi 0, %s86
      %s89 = sphi 0, %s88
      %s103 = sphi 0, %s89
      %s107 = sphi 0, %s107
      %s109 = sphi 0, %s107
      %s110 = sphi 0, %s109
      %s124 = sphi 0, %s110
      %s128 = sphi 0, %s128
      %s130 = sphi 0, %s128
      %s131 = sphi 0, %s130
      %s145 = sphi 0, %s131
      %s153 = sphi 0, %s155
      %s156 = sphi 0, %s153
      %s157 = sphi 0, %s156
      %s173 = sphi 0, %s157
    $region4: #{tpu_custom_call.1} parent=1 // loop_header_branch
      %22 = sbr.rel (%p20) target = $region8
    $region5: #{tpu_custom_call.1} parent=1 // loop_body
      %s24 = ssub.s32 %s19, 1
      %s25 = ssub.s32 %s19, 2
      %s32 = sadd.s32 1, %s27
      %p33 = scmp.ge.s32.totalorder %s32, 2
      %s34 = scalar_select %p33, 0, %s32
      %s35 = sadd.s32 1, %s26
      %s36 = scalar_select %p33, %s35, %s26
      %p37 = scmp.ge.s32.totalorder %s36, 2
      %s38 = scalar_select %p37, 0, %s36
      %s39 = ssub.s32 %s26, %s38
      %p40 = scmp.eq.s32.totalorder %s39, 0
      %s42 = sadd.s32 %s41, 1
      %s43 = scalar_select %p40, %s41, %s42
      %p46 = pneg %p40
      %p47 = scmp.eq.s32.totalorder %s19, 3
      %p48 = por %p46, %p47
      %p49 = scmp.ne.s32.totalorder %s41, %s44
      %p50 = scmp.eq.s32.totalorder %s19, 0
      %p51 = por %p49, %p50
      %p52 = scmp.ne.s32.totalorder %s41, %s44
      %p53 = scmp.eq.s32.totalorder %s24, 3
      %p54 = por %p52, %p53
      %p55 = scmp.ne.s32.totalorder %s44, %s45
      %p56 = scmp.eq.s32.totalorder %s24, 0
      %p57 = por %p55, %p56
      %p58 = scmp.ne.s32.totalorder %s44, %s45
      %p59 = scmp.eq.s32.totalorder %s25, 3
      %p60 = por %p58, %p59
      %p62 = scmp.ne.s32.totalorder %s45, %s61
      %p63 = scmp.eq.s32.totalorder %s25, 0
      %p64 = por %p62, %p63
      %s66 = sadd.s32 %s65, 1
      %p69 = scmp.eq.s32.totalorder %s19, 3
      %p70 = scmp.ne.s32.totalorder %s65, %s67
      %p71 = scmp.eq.s32.totalorder %s19, 0
      %p72 = por %p70, %p71
      %p73 = scmp.ne.s32.totalorder %s65, %s67
      %p74 = scmp.eq.s32.totalorder %s24, 3
      %p75 = por %p73, %p74
      %p76 = scmp.ne.s32.totalorder %s67, %s68
      %p77 = scmp.eq.s32.totalorder %s24, 0
      %p78 = por %p76, %p77
      %p79 = scmp.ne.s32.totalorder %s67, %s68
      %p80 = scmp.eq.s32.totalorder %s25, 3
      %p81 = por %p79, %p80
      %p83 = scmp.ne.s32.totalorder %s68, %s82
      %p84 = scmp.eq.s32.totalorder %s25, 0
      %p85 = por %p83, %p84
      %s87 = sadd.s32 %s86, 1
      %p90 = scmp.eq.s32.totalorder %s19, 3
      %p91 = scmp.ne.s32.totalorder %s86, %s88
      %p92 = scmp.eq.s32.totalorder %s19, 0
      %p93 = por %p91, %p92
      %p94 = scmp.ne.s32.totalorder %s86, %s88
      %p95 = scmp.eq.s32.totalorder %s24, 3
      %p96 = por %p94, %p95
      %p97 = scmp.ne.s32.totalorder %s88, %s89
      %p98 = scmp.eq.s32.totalorder %s24, 0
      %p99 = por %p97, %p98
      %p100 = scmp.ne.s32.totalorder %s88, %s89
      %p101 = scmp.eq.s32.totalorder %s25, 3
      %p102 = por %p100, %p101
      %p104 = scmp.ne.s32.totalorder %s89, %s103
      %p105 = scmp.eq.s32.totalorder %s25, 0
      %p106 = por %p104, %p105
      %s108 = sadd.s32 %s107, 1
      %p111 = scmp.eq.s32.totalorder %s19, 3
      %p112 = scmp.ne.s32.totalorder %s107, %s109
      %p113 = scmp.eq.s32.totalorder %s19, 0
      %p114 = por %p112, %p113
      %p115 = scmp.ne.s32.totalorder %s107, %s109
      %p116 = scmp.eq.s32.totalorder %s24, 3
      %p117 = por %p115, %p116
      %p118 = scmp.ne.s32.totalorder %s109, %s110
      %p119 = scmp.eq.s32.totalorder %s24, 0
      %p120 = por %p118, %p119
      %p121 = scmp.ne.s32.totalorder %s109, %s110
      %p122 = scmp.eq.s32.totalorder %s25, 3
      %p123 = por %p121, %p122
      %p125 = scmp.ne.s32.totalorder %s110, %s124
      %p126 = scmp.eq.s32.totalorder %s25, 0
      %p127 = por %p125, %p126
      %s129 = sadd.s32 %s128, 1
      %p132 = scmp.eq.s32.totalorder %s19, 3
      %p133 = scmp.ne.s32.totalorder %s128, %s130
      %p134 = scmp.eq.s32.totalorder %s19, 0
      %p135 = por %p133, %p134
      %p136 = scmp.ne.s32.totalorder %s128, %s130
      %p137 = scmp.eq.s32.totalorder %s24, 3
      %p138 = por %p136, %p137
      %p139 = scmp.ne.s32.totalorder %s130, %s131
      %p140 = scmp.eq.s32.totalorder %s24, 0
      %p141 = por %p139, %p140
      %p142 = scmp.ne.s32.totalorder %s130, %s131
      %p143 = scmp.eq.s32.totalorder %s25, 3
      %p144 = por %p142, %p143
      %p146 = scmp.ne.s32.totalorder %s131, %s145
      %p147 = scmp.eq.s32.totalorder %s25, 0
      %p148 = por %p146, %p147
      %s149 = ssub.s32 %s26, %s38
      %s150 = ssub.s32 %s27, %s34
      %s151 = sor.u32 %s149, %s150
      %p152 = scmp.eq.s32.totalorder %s151, 0
      %s154 = sadd.s32 %s153, 1
      %s155 = scalar_select %p152, %s153, %s154
      %p158 = pneg %p152
      %p159 = scmp.eq.s32.totalorder %s19, 3
      %p160 = por %p158, %p159
      %p161 = scmp.ne.s32.totalorder %s153, %s156
      %p162 = scmp.eq.s32.totalorder %s19, 0
      %p163 = por %p161, %p162
      %p164 = scmp.ne.s32.totalorder %s153, %s156
      %p165 = scmp.eq.s32.totalorder %s24, 3
      %p166 = por %p164, %p165
      %p167 = scmp.ne.s32.totalorder %s156, %s157
      %p168 = scmp.eq.s32.totalorder %s24, 0
      %p169 = por %p167, %p168
      %p170 = scmp.ne.s32.totalorder %s156, %s157
      %p171 = scmp.eq.s32.totalorder %s25, 3
      %p172 = por %p170, %p171
      %p174 = scmp.ne.s32.totalorder %s157, %s173
      %p175 = scmp.eq.s32.totalorder %s25, 0
      %p176 = por %p174, %p175
      %p177 = scmp.le.s32.totalorder 1, %s19
      %p178 = scmp.lt.s32.totalorder %s19, 5
      %p179 = pnand %p177, %p178
      %p180 = pneg %p179
      // Predicated region
      $region9: #{tpu_custom_call.1} parent=5 // pred_check
        _
      $region10: #{tpu_custom_call.1} parent=5 // pred_check_branch
        %182 = sbr.rel (%p179) target = $region12
      $region11: #{tpu_custom_call.1} parent=5 // pred_region
        %s183 = ssub.s32 %s19, 1
        // Predicated region
        $region13: #{tpu_custom_call.1} parent=11 // pred_check
          %p184 = pneg %p78
        $region14: #{tpu_custom_call.1} parent=11 // pred_check_branch
          %186 = sbr.rel (%p184) target = $region16
        $region15: #{tpu_custom_call.1} parent=11 // pred_region
          %s188 = ssub.s32 12288, 12288
          %189 = vsyncadd [#allocation8], %s188
          %s190 = sshll.u32 [#allocation7], 4
          %s191 = int_to_ptr.vmem [resolvable:$true] %s190
          %196 = dma.hbm_to_vmem [thread:$0]  %s1, 12288, %s191, [#allocation8], 384, 384, 24
        $region16: #{tpu_custom_call.1} parent=11 // pred_fallthru
          _
        // Predicated region
        $region17: #{tpu_custom_call.1} parent=11 // pred_check
          %p197 = pneg %p99
        $region18: #{tpu_custom_call.1} parent=11 // pred_check_branch
          %199 = sbr.rel (%p197) target = $region20
        $region19: #{tpu_custom_call.1} parent=11 // pred_region
          %s201 = ssub.s32 96, 96
          %202 = vsyncadd [#allocation8], %s201
          %s204 = sshll.u32 [#allocation9], 4
          %s205 = int_to_ptr.vmem [resolvable:$true] %s204
          %207 = dma.hbm_to_vmem [thread:$0]  %s2, 96, %s205, [#allocation8]
        $region20: #{tpu_custom_call.1} parent=11 // pred_fallthru
          _
        // Predicated region
        $region21: #{tpu_custom_call.1} parent=11 // pred_check
          %p208 = pneg %p120
        $region22: #{tpu_custom_call.1} parent=11 // pred_check_branch
          %210 = sbr.rel (%p208) target = $region24
        $region23: #{tpu_custom_call.1} parent=11 // pred_region
          %s212 = ssub.s32 4096, 4096
          %213 = vsyncadd [#allocation11], %s212
          %s214 = sshll.u32 [#allocation10], 4
          %s215 = int_to_ptr.vmem [resolvable:$true] %s214
          %220 = dma.hbm_to_vmem [thread:$0]  %s3, 4096, %s215, [#allocation11], 128, 128, 8
        $region24: #{tpu_custom_call.1} parent=11 // pred_fallthru
          _
        // Predicated region
        $region25: #{tpu_custom_call.1} parent=11 // pred_check
          %p221 = pneg %p141
        $region26: #{tpu_custom_call.1} parent=11 // pred_check_branch
          %223 = sbr.rel (%p221) target = $region28
        $region27: #{tpu_custom_call.1} parent=11 // pred_region
          _
        $region28: #{tpu_custom_call.1} parent=11 // pred_fallthru
          _
      $region12: #{tpu_custom_call.1} parent=5 // pred_fallthru
        _
      %p224 = scmp.lt.s32.totalorder %s19, 4
      // Predicated region
      $region29: #{tpu_custom_call.1} parent=5 // pred_check
        %p225 = pneg %p224
      $region30: #{tpu_custom_call.1} parent=5 // pred_check_branch
        %227 = sbr.rel (%p225) target = $region32
      $region31: #{tpu_custom_call.1} parent=5 // pred_region
        // Predicated region
        $region33: #{tpu_custom_call.1} parent=31 // pred_check
          %p228 = pneg %p51
        $region34: #{tpu_custom_call.1} parent=31 // pred_check_branch
          %230 = sbr.rel (%p228) target = $region36
        $region35: #{tpu_custom_call.1} parent=31 // pred_region
          %s231 = sand.u32 %s41, 1
          %s232 = scalar_lea.sflag [#allocation5], %s231
          %s233 = sand.u32 %s41, 1
          %s234 = smul.addr %s233, 256
          %s235 = scalar_lea.vmem [#allocation4], %s234
          %s237 = ssub.s32 4096, 4096
          %238 = vsyncadd %s232, %s237
          %s239 = smul.addr %s26, 64
          %s240 = smul.addr %s239, 64
          %s241 = scalar_lea.hbm %s0, %s240
          %s242 = sshll.u32 %s235, 4
          %s243 = int_to_ptr.vmem [resolvable:$true] %s242
          %248 = dma.hbm_to_vmem [thread:$0]  %s241, 4096, %s243, %s232, 128, 128, 8
        $region36: #{tpu_custom_call.1} parent=31 // pred_fallthru
          _
      $region32: #{tpu_custom_call.1} parent=5 // pred_fallthru
        _
      %p249 = scmp.le.s32.totalorder 1, %s19
      %p250 = scmp.lt.s32.totalorder %s19, 5
      %p251 = pnand %p249, %p250
      %p252 = pneg %p251
      // Predicated region
      $region37: #{tpu_custom_call.1} parent=5 // pred_check
        _
      $region38: #{tpu_custom_call.1} parent=5 // pred_check_branch
        %254 = sbr.rel (%p251) target = $region40
      $region39: #{tpu_custom_call.1} parent=5 // pred_region
        %s255 = ssub.s32 %s19, 1
        %s256 = sand.u32 %s44, 1
        %s257 = scalar_lea.sflag [#allocation5], %s256
        %s258 = sand.u32 %s44, 1
        %s259 = smul.addr %s258, 256
        %s260 = scalar_lea.vmem [#allocation4], %s259
        // Predicated region
        $region41: #{tpu_custom_call.1} parent=39 // pred_check
          %p261 = pneg %p57
        $region42: #{tpu_custom_call.1} parent=39 // pred_check_branch
          %263 = sbr.rel (%p261) target = $region44
        $region43: #{tpu_custom_call.1} parent=39 // pred_region
          %264 = dma.done %s257, 4096
        $region44: #{tpu_custom_call.1} parent=39 // pred_fallthru
          _
        // Predicated region
        $region45: #{tpu_custom_call.1} parent=39 // pred_check
          %p265 = pneg %p78
        $region46: #{tpu_custom_call.1} parent=39 // pred_check_branch
          %267 = sbr.rel (%p265) target = $region48
        $region47: #{tpu_custom_call.1} parent=39 // pred_region
          %268 = dma.done [#allocation8], 12288
        $region48: #{tpu_custom_call.1} parent=39 // pred_fallthru
          _
        // Predicated region
        $region49: #{tpu_custom_call.1} parent=39 // pred_check
          %p269 = pneg %p99
        $region50: #{tpu_custom_call.1} parent=39 // pred_check_branch
          %271 = sbr.rel (%p269) target = $region52
        $region51: #{tpu_custom_call.1} parent=39 // pred_region
          %272 = dma.done [#allocation8], 96
        $region52: #{tpu_custom_call.1} parent=39 // pred_fallthru
          _
        // Predicated region
        $region53: #{tpu_custom_call.1} parent=39 // pred_check
          %p273 = pneg %p120
        $region54: #{tpu_custom_call.1} parent=39 // pred_check_branch
          %275 = sbr.rel (%p273) target = $region56
        $region55: #{tpu_custom_call.1} parent=39 // pred_region
          %276 = dma.done [#allocation11], 4096
        $region56: #{tpu_custom_call.1} parent=39 // pred_fallthru
          _
        %s277 = sand.u32 %s44, 1
        %s278 = scalar_lea.sflag [#allocation5], %s277
        %s279 = sand.u32 %s44, 1
        %s280 = smul.addr %s279, 256
        %s281 = scalar_lea.vmem [#allocation4], %s280
        %p282 = pneg %p57
        %p283 = pneg %p54
        %p284 = pneg %p78
        %p285 = pneg %p75
        %p286 = pneg %p99
        %p287 = pneg %p96
        %p288 = pneg %p120
        %p289 = pneg %p117
        %p290 = pneg %p141
        %p291 = pneg %p138
        %p292 = pneg %p169
        %p293 = pneg %p166
        %s294 = sand.u32 %s156, 1
        %s295 = scalar_lea.sflag [#allocation6], %s294
        %s296 = sand.u32 %s156, 1
        %s297 = smul.addr %s296, 256
        %s298 = scalar_lea.vmem [#allocation12], %s297
        %s299 = smul.u32 16, %s29
        %p301 = scmp.eq.s32.totalorder %s29, 0
        // Predicated region
        $region57: #{tpu_custom_call.1} parent=39 // pred_check
          %p302 = pneg %p301
        $region58: #{tpu_custom_call.1} parent=39 // pred_check_branch
          %304 = sbr.rel (%p302) target = $region60
        $region59: #{tpu_custom_call.1} parent=39 // pred_region
          loop: start=0, step=1, limit=2
          $region61: #{tpu_custom_call.1} parent=59 // loop_pre_header
            _
          $region62: #{tpu_custom_call.1} parent=59 // loop_header
            %s306 = sphi 0, %s310
            %p307 = scmp.ge.s32.totalorder %s306, 2
          $region63: #{tpu_custom_call.1} parent=59 // loop_header_branch
            %309 = sbr.rel (%p307) target = $region67
          $region64: #{tpu_custom_call.1} parent=59 // loop_body
            %s311 = smul.u32 %s306, 128
            %s312 = sshra.s32 %s311, 3
            %s313 = sand.u32 %s311, 7
            %s314 = smul.u32 %s312, 2
            %s315 = smul.addr %s314, 4
            %s316 = scalar_lea.vmem %s260, %s315 [#allocation4]
            %v317 = vld [vmem:[%s316] sm:$0xff]
            %v318 = vld [vmem:[%s316 + $0x8] sm:$0xff]
            %v319 = vld [vmem:[%s316 + $0x10] sm:$0xff]
            %v320 = vld [vmem:[%s316 + $0x18] sm:$0xff]
            %v321 = vld [vmem:[%s316 + $0x20] sm:$0xff]
            %v322 = vld [vmem:[%s316 + $0x28] sm:$0xff]
            %v323 = vld [vmem:[%s316 + $0x30] sm:$0xff]
            %v324 = vld [vmem:[%s316 + $0x38] sm:$0xff]
            %v325 = vld [vmem:[%s316 + $0x40] sm:$0xff]
            %v326 = vld [vmem:[%s316 + $0x48] sm:$0xff]
            %v327 = vld [vmem:[%s316 + $0x50] sm:$0xff]
            %v328 = vld [vmem:[%s316 + $0x58] sm:$0xff]
            %v329 = vld [vmem:[%s316 + $0x60] sm:$0xff]
            %v330 = vld [vmem:[%s316 + $0x68] sm:$0xff]
            %v331 = vld [vmem:[%s316 + $0x70] sm:$0xff]
            %v332 = vld [vmem:[%s316 + $0x78] sm:$0xff]
            %v333 = vld [vmem:[#allocation7] sm:$0xff]
            %v334 = vld [vmem:[#allocation7 + $0x8] sm:$0xff]
            %v335 = vld [vmem:[#allocation7 + $0x10] sm:$0xff]
            %v336 = vld [vmem:[#allocation7 + $0x18] sm:$0xff]
            %v337 = vld [vmem:[#allocation7 + $0x20] sm:$0xff]
            %v338 = vld [vmem:[#allocation7 + $0x28] sm:$0xff]
            %v339 = vld [vmem:[#allocation7 + $0x30] sm:$0xff]
            %v340 = vld [vmem:[#allocation7 + $0x38] sm:$0xff]
            %v341 = vld [vmem:[#allocation7 + $0x40] sm:$0xff]
            %v342 = vld [vmem:[#allocation7 + $0x48] sm:$0xff]
            %v343 = vld [vmem:[#allocation7 + $0x50] sm:$0xff]
            %v344 = vld [vmem:[#allocation7 + $0x58] sm:$0xff]
            %v345 = vld [vmem:[#allocation7 + $0x60] sm:$0xff]
            %v346 = vld [vmem:[#allocation7 + $0x68] sm:$0xff]
            %v347 = vld [vmem:[#allocation7 + $0x70] sm:$0xff]
            %v348 = vld [vmem:[#allocation7 + $0x78] sm:$0xff]
            %v349 = vld [vmem:[#allocation7 + $0x80] sm:$0xff]
            %v350 = vld [vmem:[#allocation7 + $0x88] sm:$0xff]
            %v351 = vld [vmem:[#allocation7 + $0x90] sm:$0xff]
            %v352 = vld [vmem:[#allocation7 + $0x98] sm:$0xff]
            %v353 = vld [vmem:[#allocation7 + $0xa0] sm:$0xff]
            %v354 = vld [vmem:[#allocation7 + $0xa8] sm:$0xff]
            %v355 = vld [vmem:[#allocation7 + $0xb0] sm:$0xff]
            %v356 = vld [vmem:[#allocation7 + $0xb8] sm:$0xff]
            %v357 = vld [vmem:[#allocation7 + $0xc0] sm:$0xff]
            %v358 = vld [vmem:[#allocation7 + $0xc8] sm:$0xff]
            %v359 = vld [vmem:[#allocation7 + $0xd0] sm:$0xff]
            %v360 = vld [vmem:[#allocation7 + $0xd8] sm:$0xff]
            %v361 = vld [vmem:[#allocation7 + $0xe0] sm:$0xff]
            %v362 = vld [vmem:[#allocation7 + $0xe8] sm:$0xff]
            %v363 = vld [vmem:[#allocation7 + $0xf0] sm:$0xff]
            %v364 = vld [vmem:[#allocation7 + $0xf8] sm:$0xff]
            %v365 = vld [vmem:[#allocation7 + $0x100] sm:$0xff]
            %v366 = vld [vmem:[#allocation7 + $0x108] sm:$0xff]
            %v367 = vld [vmem:[#allocation7 + $0x110] sm:$0xff]
            %v368 = vld [vmem:[#allocation7 + $0x118] sm:$0xff]
            %v369 = vld [vmem:[#allocation7 + $0x120] sm:$0xff]
            %v370 = vld [vmem:[#allocation7 + $0x128] sm:$0xff]
            %v371 = vld [vmem:[#allocation7 + $0x130] sm:$0xff]
            %v372 = vld [vmem:[#allocation7 + $0x138] sm:$0xff]
            %v373 = vld [vmem:[#allocation7 + $0x140] sm:$0xff]
            %v374 = vld [vmem:[#allocation7 + $0x148] sm:$0xff]
            %v375 = vld [vmem:[#allocation7 + $0x150] sm:$0xff]
            %v376 = vld [vmem:[#allocation7 + $0x158] sm:$0xff]
            %v377 = vld [vmem:[#allocation7 + $0x160] sm:$0xff]
            %v378 = vld [vmem:[#allocation7 + $0x168] sm:$0xff]
            %v379 = vld [vmem:[#allocation7 + $0x170] sm:$0xff]
            %v380 = vld [vmem:[#allocation7 + $0x178] sm:$0xff]
            %v381 = vld [vmem:[#allocation7 + $0x180] sm:$0xff]
            %v382 = vld [vmem:[#allocation7 + $0x188] sm:$0xff]
            %v383 = vld [vmem:[#allocation7 + $0x190] sm:$0xff]
            %v384 = vld [vmem:[#allocation7 + $0x198] sm:$0xff]
            %v385 = vld [vmem:[#allocation7 + $0x1a0] sm:$0xff]
            %v386 = vld [vmem:[#allocation7 + $0x1a8] sm:$0xff]
            %v387 = vld [vmem:[#allocation7 + $0x1b0] sm:$0xff]
            %v388 = vld [vmem:[#allocation7 + $0x1b8] sm:$0xff]
            %v389 = vld [vmem:[#allocation7 + $0x1c0] sm:$0xff]
            %v390 = vld [vmem:[#allocation7 + $0x1c8] sm:$0xff]
            %v391 = vld [vmem:[#allocation7 + $0x1d0] sm:$0xff]
            %v392 = vld [vmem:[#allocation7 + $0x1d8] sm:$0xff]
            %v393 = vld [vmem:[#allocation7 + $0x1e0] sm:$0xff]
            %v394 = vld [vmem:[#allocation7 + $0x1e8] sm:$0xff]
            %v395 = vld [vmem:[#allocation7 + $0x1f0] sm:$0xff]
            %v396 = vld [vmem:[#allocation7 + $0x1f8] sm:$0xff]
            %v397 = vld [vmem:[#allocation7 + $0x200] sm:$0xff]
            %v398 = vld [vmem:[#allocation7 + $0x208] sm:$0xff]
            %v399 = vld [vmem:[#allocation7 + $0x210] sm:$0xff]
            %v400 = vld [vmem:[#allocation7 + $0x218] sm:$0xff]
            %v401 = vld [vmem:[#allocation7 + $0x220] sm:$0xff]
            %v402 = vld [vmem:[#allocation7 + $0x228] sm:$0xff]
            %v403 = vld [vmem:[#allocation7 + $0x230] sm:$0xff]
            %v404 = vld [vmem:[#allocation7 + $0x238] sm:$0xff]
            %v405 = vld [vmem:[#allocation7 + $0x240] sm:$0xff]
            %v406 = vld [vmem:[#allocation7 + $0x248] sm:$0xff]
            %v407 = vld [vmem:[#allocation7 + $0x250] sm:$0xff]
            %v408 = vld [vmem:[#allocation7 + $0x258] sm:$0xff]
            %v409 = vld [vmem:[#allocation7 + $0x260] sm:$0xff]
            %v410 = vld [vmem:[#allocation7 + $0x268] sm:$0xff]
            %v411 = vld [vmem:[#allocation7 + $0x270] sm:$0xff]
            %v412 = vld [vmem:[#allocation7 + $0x278] sm:$0xff]
            %v413 = vld [vmem:[#allocation7 + $0x280] sm:$0xff]
            %v414 = vld [vmem:[#allocation7 + $0x288] sm:$0xff]
            %v415 = vld [vmem:[#allocation7 + $0x290] sm:$0xff]
            %v416 = vld [vmem:[#allocation7 + $0x298] sm:$0xff]
            %v417 = vld [vmem:[#allocation7 + $0x2a0] sm:$0xff]
            %v418 = vld [vmem:[#allocation7 + $0x2a8] sm:$0xff]
            %v419 = vld [vmem:[#allocation7 + $0x2b0] sm:$0xff]
            %v420 = vld [vmem:[#allocation7 + $0x2b8] sm:$0xff]
            %v421 = vld [vmem:[#allocation7 + $0x2c0] sm:$0xff]
            %v422 = vld [vmem:[#allocation7 + $0x2c8] sm:$0xff]
            %v423 = vld [vmem:[#allocation7 + $0x2d0] sm:$0xff]
            %v424 = vld [vmem:[#allocation7 + $0x2d8] sm:$0xff]
            %v425 = vld [vmem:[#allocation7 + $0x2e0] sm:$0xff]
            %v426 = vld [vmem:[#allocation7 + $0x2e8] sm:$0xff]
            %v427 = vld [vmem:[#allocation7 + $0x2f0] sm:$0xff]
            %v428 = vld [vmem:[#allocation7 + $0x2f8] sm:$0xff]
            %v429 = vld [vmem:[#allocation9] sm:$0x3f]
            %v431 = vlaneseq
            %v432 = vshrl.u32 %v431, 7
            %v433 = vsub.s32 0, %v432
            %v434 = vrot.slane %v429, %v433
            %v435 = vlaneseq
            %v436 = vshrl.u32 %v435, 7
            %v437 = vsub.s32 1, %v436
            %v438 = vrot.slane %v429, %v437
            %v439 = vlaneseq
            %v440 = vshrl.u32 %v439, 7
            %v441 = vsub.s32 2, %v440
            %v442 = vrot.slane %v429, %v441
            %v443 = vlaneseq
            %v444 = vshrl.u32 %v443, 7
            %v445 = vsub.s32 3, %v444
            %v446 = vrot.slane %v429, %v445
            %v447 = vlaneseq
            %v448 = vshrl.u32 %v447, 7
            %v449 = vsub.s32 4, %v448
            %v450 = vrot.slane %v429, %v449
            %v451 = vlaneseq
            %v452 = vshrl.u32 %v451, 7
            %v453 = vsub.s32 5, %v452
            %v454 = vrot.slane %v429, %v453
            %v477 = vunpack.c.l.b16 %v317
            %v478 = vunpack.c.h.b16 %v317
            %v479 = vunpack.c.l.b16 %v318
            %v480 = vunpack.c.h.b16 %v318
            %v481 = vunpack.c.l.b16 %v319
            %v482 = vunpack.c.h.b16 %v319
            %v483 = vunpack.c.l.b16 %v320
            %v484 = vunpack.c.h.b16 %v320
            %v485 = vunpack.c.l.b16 %v321
            %v486 = vunpack.c.h.b16 %v321
            %v487 = vunpack.c.l.b16 %v322
            %v488 = vunpack.c.h.b16 %v322
            %v489 = vunpack.c.l.b16 %v323
            %v490 = vunpack.c.h.b16 %v323
            %v491 = vunpack.c.l.b16 %v324
            %v492 = vunpack.c.h.b16 %v324
            %v493 = vunpack.c.l.b16 %v325
            %v494 = vunpack.c.h.b16 %v325
            %v495 = vunpack.c.l.b16 %v326
            %v496 = vunpack.c.h.b16 %v326
            %v497 = vunpack.c.l.b16 %v327
            %v498 = vunpack.c.h.b16 %v327
            %v499 = vunpack.c.l.b16 %v328
            %v500 = vunpack.c.h.b16 %v328
            %v501 = vunpack.c.l.b16 %v329
            %v502 = vunpack.c.h.b16 %v329
            %v503 = vunpack.c.l.b16 %v330
            %v504 = vunpack.c.h.b16 %v330
            %v505 = vunpack.c.l.b16 %v331
            %v506 = vunpack.c.h.b16 %v331
            %v507 = vunpack.c.l.b16 %v332
            %v508 = vunpack.c.h.b16 %v332
            %v509 = vpack.c.b16 %v479, %v477
            %v510 = vpack.c.b16 %v480, %v478
            %v511 = vpack.c.b16 %v483, %v481
            %v512 = vpack.c.b16 %v484, %v482
            %v513 = vpack.c.b16 %v487, %v485
            %v514 = vpack.c.b16 %v488, %v486
            %v515 = vpack.c.b16 %v491, %v489
            %v516 = vpack.c.b16 %v492, %v490
            %v517 = vpack.c.b16 %v495, %v493
            %v518 = vpack.c.b16 %v496, %v494
            %v519 = vpack.c.b16 %v499, %v497
            %v520 = vpack.c.b16 %v500, %v498
            %v521 = vpack.c.b16 %v503, %v501
            %v522 = vpack.c.b16 %v504, %v502
            %v523 = vpack.c.b16 %v507, %v505
            %v524 = vpack.c.b16 %v508, %v506
            %v637 = vunpack.c.l.b16 %v333
            %v638 = vunpack.c.h.b16 %v333
            %v639 = vunpack.c.l.b16 %v334
            %v640 = vunpack.c.h.b16 %v334
            %v641 = vunpack.c.l.b16 %v335
            %v642 = vunpack.c.h.b16 %v335
            %v643 = vunpack.c.l.b16 %v336
            %v644 = vunpack.c.h.b16 %v336
            %v645 = vunpack.c.l.b16 %v337
            %v646 = vunpack.c.h.b16 %v337
            %v647 = vunpack.c.l.b16 %v338
            %v648 = vunpack.c.h.b16 %v338
            %v649 = vunpack.c.l.b16 %v339
            %v650 = vunpack.c.h.b16 %v339
            %v651 = vunpack.c.l.b16 %v340
            %v652 = vunpack.c.h.b16 %v340
            %v653 = vunpack.c.l.b16 %v341
            %v654 = vunpack.c.h.b16 %v341
            %v655 = vunpack.c.l.b16 %v342
            %v656 = vunpack.c.h.b16 %v342
            %v657 = vunpack.c.l.b16 %v343
            %v658 = vunpack.c.h.b16 %v343
            %v659 = vunpack.c.l.b16 %v344
            %v660 = vunpack.c.h.b16 %v344
            %v661 = vunpack.c.l.b16 %v345
            %v662 = vunpack.c.h.b16 %v345
            %v663 = vunpack.c.l.b16 %v346
            %v664 = vunpack.c.h.b16 %v346
            %v665 = vunpack.c.l.b16 %v347
            %v666 = vunpack.c.h.b16 %v347
            %v667 = vunpack.c.l.b16 %v348
            %v668 = vunpack.c.h.b16 %v348
            %v669 = vunpack.c.l.b16 %v349
            %v670 = vunpack.c.h.b16 %v349
            %v671 = vunpack.c.l.b16 %v350
            %v672 = vunpack.c.h.b16 %v350
            %v673 = vunpack.c.l.b16 %v351
            %v674 = vunpack.c.h.b16 %v351
            %v675 = vunpack.c.l.b16 %v352
            %v676 = vunpack.c.h.b16 %v352
            %v677 = vunpack.c.l.b16 %v353
            %v678 = vunpack.c.h.b16 %v353
            %v679 = vunpack.c.l.b16 %v354
            %v680 = vunpack.c.h.b16 %v354
            %v681 = vunpack.c.l.b16 %v355
            %v682 = vunpack.c.h.b16 %v355
            %v683 = vunpack.c.l.b16 %v356
            %v684 = vunpack.c.h.b16 %v356
            %v685 = vunpack.c.l.b16 %v357
            %v686 = vunpack.c.h.b16 %v357
            %v687 = vunpack.c.l.b16 %v358
            %v688 = vunpack.c.h.b16 %v358
            %v689 = vunpack.c.l.b16 %v359
            %v690 = vunpack.c.h.b16 %v359
            %v691 = vunpack.c.l.b16 %v360
            %v692 = vunpack.c.h.b16 %v360
            %v693 = vunpack.c.l.b16 %v361
            %v694 = vunpack.c.h.b16 %v361
            %v695 = vunpack.c.l.b16 %v362
            %v696 = vunpack.c.h.b16 %v362
            %v697 = vunpack.c.l.b16 %v363
            %v698 = vunpack.c.h.b16 %v363
            %v699 = vunpack.c.l.b16 %v364
            %v700 = vunpack.c.h.b16 %v364
            %v701 = vunpack.c.l.b16 %v365
            %v702 = vunpack.c.h.b16 %v365
            %v703 = vunpack.c.l.b16 %v366
            %v704 = vunpack.c.h.b16 %v366
            %v705 = vunpack.c.l.b16 %v367
            %v706 = vunpack.c.h.b16 %v367
            %v707 = vunpack.c.l.b16 %v368
            %v708 = vunpack.c.h.b16 %v368
            %v709 = vunpack.c.l.b16 %v369
            %v710 = vunpack.c.h.b16 %v369
            %v711 = vunpack.c.l.b16 %v370
            %v712 = vunpack.c.h.b16 %v370
            %v713 = vunpack.c.l.b16 %v371
            %v714 = vunpack.c.h.b16 %v371
            %v715 = vunpack.c.l.b16 %v372
            %v716 = vunpack.c.h.b16 %v372
            %v717 = vunpack.c.l.b16 %v373
            %v718 = vunpack.c.h.b16 %v373
            %v719 = vunpack.c.l.b16 %v374
            %v720 = vunpack.c.h.b16 %v374
            %v721 = vunpack.c.l.b16 %v375
            %v722 = vunpack.c.h.b16 %v375
            %v723 = vunpack.c.l.b16 %v376
            %v724 = vunpack.c.h.b16 %v376
            %v725 = vunpack.c.l.b16 %v377
            %v726 = vunpack.c.h.b16 %v377
            %v727 = vunpack.c.l.b16 %v378
            %v728 = vunpack.c.h.b16 %v378
            %v729 = vunpack.c.l.b16 %v379
            %v730 = vunpack.c.h.b16 %v379
            %v731 = vunpack.c.l.b16 %v380
            %v732 = vunpack.c.h.b16 %v380
            %v733 = vunpack.c.l.b16 %v381
            %v734 = vunpack.c.h.b16 %v381
            %v735 = vunpack.c.l.b16 %v382
            %v736 = vunpack.c.h.b16 %v382
            %v737 = vunpack.c.l.b16 %v383
            %v738 = vunpack.c.h.b16 %v383
            %v739 = vunpack.c.l.b16 %v384
            %v740 = vunpack.c.h.b16 %v384
            %v741 = vunpack.c.l.b16 %v385
            %v742 = vunpack.c.h.b16 %v385
            %v743 = vunpack.c.l.b16 %v386
            %v744 = vunpack.c.h.b16 %v386
            %v745 = vunpack.c.l.b16 %v387
            %v746 = vunpack.c.h.b16 %v387
            %v747 = vunpack.c.l.b16 %v388
            %v748 = vunpack.c.h.b16 %v388
            %v749 = vunpack.c.l.b16 %v389
            %v750 = vunpack.c.h.b16 %v389
            %v751 = vunpack.c.l.b16 %v390
            %v752 = vunpack.c.h.b16 %v390
            %v753 = vunpack.c.l.b16 %v391
            %v754 = vunpack.c.h.b16 %v391
            %v755 = vunpack.c.l.b16 %v392
            %v756 = vunpack.c.h.b16 %v392
            %v757 = vunpack.c.l.b16 %v393
            %v758 = vunpack.c.h.b16 %v393
            %v759 = vunpack.c.l.b16 %v394
            %v760 = vunpack.c.h.b16 %v394
            %v761 = vunpack.c.l.b16 %v395
            %v762 = vunpack.c.h.b16 %v395
            %v763 = vunpack.c.l.b16 %v396
            %v764 = vunpack.c.h.b16 %v396
            %v765 = vunpack.c.l.b16 %v397
            %v766 = vunpack.c.h.b16 %v397
            %v767 = vunpack.c.l.b16 %v398
            %v768 = vunpack.c.h.b16 %v398
            %v769 = vunpack.c.l.b16 %v399
            %v770 = vunpack.c.h.b16 %v399
            %v771 = vunpack.c.l.b16 %v400
            %v772 = vunpack.c.h.b16 %v400
            %v773 = vunpack.c.l.b16 %v401
            %v774 = vunpack.c.h.b16 %v401
            %v775 = vunpack.c.l.b16 %v402
            %v776 = vunpack.c.h.b16 %v402
            %v777 = vunpack.c.l.b16 %v403
            %v778 = vunpack.c.h.b16 %v403
            %v779 = vunpack.c.l.b16 %v404
            %v780 = vunpack.c.h.b16 %v404
            %v781 = vunpack.c.l.b16 %v405
            %v782 = vunpack.c.h.b16 %v405
            %v783 = vunpack.c.l.b16 %v406
            %v784 = vunpack.c.h.b16 %v406
            %v785 = vunpack.c.l.b16 %v407
            %v786 = vunpack.c.h.b16 %v407
            %v787 = vunpack.c.l.b16 %v408
            %v788 = vunpack.c.h.b16 %v408
            %v789 = vunpack.c.l.b16 %v409
            %v790 = vunpack.c.h.b16 %v409
            %v791 = vunpack.c.l.b16 %v410
            %v792 = vunpack.c.h.b16 %v410
            %v793 = vunpack.c.l.b16 %v411
            %v794 = vunpack.c.h.b16 %v411
            %v795 = vunpack.c.l.b16 %v412
            %v796 = vunpack.c.h.b16 %v412
            %v797 = vunpack.c.l.b16 %v413
            %v798 = vunpack.c.h.b16 %v413
            %v799 = vunpack.c.l.b16 %v414
            %v800 = vunpack.c.h.b16 %v414
            %v801 = vunpack.c.l.b16 %v415
            %v802 = vunpack.c.h.b16 %v415
            %v803 = vunpack.c.l.b16 %v416
            %v804 = vunpack.c.h.b16 %v416
            %v805 = vunpack.c.l.b16 %v417
            %v806 = vunpack.c.h.b16 %v417
            %v807 = vunpack.c.l.b16 %v418
            %v808 = vunpack.c.h.b16 %v418
            %v809 = vunpack.c.l.b16 %v419
            %v810 = vunpack.c.h.b16 %v419
            %v811 = vunpack.c.l.b16 %v420
            %v812 = vunpack.c.h.b16 %v420
            %v813 = vunpack.c.l.b16 %v421
            %v814 = vunpack.c.h.b16 %v421
            %v815 = vunpack.c.l.b16 %v422
            %v816 = vunpack.c.h.b16 %v422
            %v817 = vunpack.c.l.b16 %v423
            %v818 = vunpack.c.h.b16 %v423
            %v819 = vunpack.c.l.b16 %v424
            %v820 = vunpack.c.h.b16 %v424
            %v821 = vunpack.c.l.b16 %v425
            %v822 = vunpack.c.h.b16 %v425
            %v823 = vunpack.c.l.b16 %v426
            %v824 = vunpack.c.h.b16 %v426
            %v825 = vunpack.c.l.b16 %v427
            %v826 = vunpack.c.h.b16 %v427
            %v827 = vunpack.c.l.b16 %v428
            %v828 = vunpack.c.h.b16 %v428
            %v829 = vpack.c.b16 %v643, %v637
            %v830 = vpack.c.b16 %v644, %v638
            %v831 = vpack.c.b16 %v645, %v639
            %v832 = vpack.c.b16 %v646, %v640
            %v833 = vpack.c.b16 %v647, %v641
            %v834 = vpack.c.b16 %v648, %v642
            %v835 = vpack.c.b16 %v655, %v649
            %v836 = vpack.c.b16 %v656, %v650
            %v837 = vpack.c.b16 %v657, %v651
            %v838 = vpack.c.b16 %v658, %v652
            %v839 = vpack.c.b16 %v659, %v653
            %v840 = vpack.c.b16 %v660, %v654
            %v841 = vpack.c.b16 %v667, %v661
            %v842 = vpack.c.b16 %v668, %v662
            %v843 = vpack.c.b16 %v669, %v663
            %v844 = vpack.c.b16 %v670, %v664
            %v845 = vpack.c.b16 %v671, %v665
            %v846 = vpack.c.b16 %v672, %v666
            %v847 = vpack.c.b16 %v679, %v673
            %v848 = vpack.c.b16 %v680, %v674
            %v849 = vpack.c.b16 %v681, %v675
            %v850 = vpack.c.b16 %v682, %v676
            %v851 = vpack.c.b16 %v683, %v677
            %v852 = vpack.c.b16 %v684, %v678
            %v853 = vpack.c.b16 %v691, %v685
            %v854 = vpack.c.b16 %v692, %v686
            %v855 = vpack.c.b16 %v693, %v687
            %v856 = vpack.c.b16 %v694, %v688
            %v857 = vpack.c.b16 %v695, %v689
            %v858 = vpack.c.b16 %v696, %v690
            %v859 = vpack.c.b16 %v703, %v697
            %v860 = vpack.c.b16 %v704, %v698
            %v861 = vpack.c.b16 %v705, %v699
            %v862 = vpack.c.b16 %v706, %v700
            %v863 = vpack.c.b16 %v707, %v701
            %v864 = vpack.c.b16 %v708, %v702
            %v865 = vpack.c.b16 %v715, %v709
            %v866 = vpack.c.b16 %v716, %v710
            %v867 = vpack.c.b16 %v717, %v711
            %v868 = vpack.c.b16 %v718, %v712
            %v869 = vpack.c.b16 %v719, %v713
            %v870 = vpack.c.b16 %v720, %v714
            %v871 = vpack.c.b16 %v727, %v721
            %v872 = vpack.c.b16 %v728, %v722
            %v873 = vpack.c.b16 %v729, %v723
            %v874 = vpack.c.b16 %v730, %v724
            %v875 = vpack.c.b16 %v731, %v725
            %v876 = vpack.c.b16 %v732, %v726
            %v877 = vpack.c.b16 %v739, %v733
            %v878 = vpack.c.b16 %v740, %v734
            %v879 = vpack.c.b16 %v741, %v735
            %v880 = vpack.c.b16 %v742, %v736
            %v881 = vpack.c.b16 %v743, %v737
            %v882 = vpack.c.b16 %v744, %v738
            %v883 = vpack.c.b16 %v751, %v745
            %v884 = vpack.c.b16 %v752, %v746
            %v885 = vpack.c.b16 %v753, %v747
            %v886 = vpack.c.b16 %v754, %v748
            %v887 = vpack.c.b16 %v755, %v749
            %v888 = vpack.c.b16 %v756, %v750
            %v889 = vpack.c.b16 %v763, %v757
            %v890 = vpack.c.b16 %v764, %v758
            %v891 = vpack.c.b16 %v765, %v759
            %v892 = vpack.c.b16 %v766, %v760
            %v893 = vpack.c.b16 %v767, %v761
            %v894 = vpack.c.b16 %v768, %v762
            %v895 = vpack.c.b16 %v775, %v769
            %v896 = vpack.c.b16 %v776, %v770
            %v897 = vpack.c.b16 %v777, %v771
            %v898 = vpack.c.b16 %v778, %v772
            %v899 = vpack.c.b16 %v779, %v773
            %v900 = vpack.c.b16 %v780, %v774
            %v901 = vpack.c.b16 %v787, %v781
            %v902 = vpack.c.b16 %v788, %v782
            %v903 = vpack.c.b16 %v789, %v783
            %v904 = vpack.c.b16 %v790, %v784
            %v905 = vpack.c.b16 %v791, %v785
            %v906 = vpack.c.b16 %v792, %v786
            %v907 = vpack.c.b16 %v799, %v793
            %v908 = vpack.c.b16 %v800, %v794
            %v909 = vpack.c.b16 %v801, %v795
            %v910 = vpack.c.b16 %v802, %v796
            %v911 = vpack.c.b16 %v803, %v797
            %v912 = vpack.c.b16 %v804, %v798
            %v913 = vpack.c.b16 %v811, %v805
            %v914 = vpack.c.b16 %v812, %v806
            %v915 = vpack.c.b16 %v813, %v807
            %v916 = vpack.c.b16 %v814, %v808
            %v917 = vpack.c.b16 %v815, %v809
            %v918 = vpack.c.b16 %v816, %v810
            %v919 = vpack.c.b16 %v823, %v817
            %v920 = vpack.c.b16 %v824, %v818
            %v921 = vpack.c.b16 %v825, %v819
            %v922 = vpack.c.b16 %v826, %v820
            %v923 = vpack.c.b16 %v827, %v821
            %v924 = vpack.c.b16 %v828, %v822
            %1021 = vmatprep.subr.bf16.mxu0 %v872
            %1022 = vmatpush1.bf16.msra.mxu0 %v871
            %1023 = vmatprep.subr.bf16.mxu0 %v866
            %1024 = vmatpush1.bf16.msra.mxu0 %v865
            %1025 = vmatprep.subr.bf16.mxu0 %v860
            %1026 = vmatpush1.bf16.msra.mxu0 %v859
            %1027 = vmatprep.subr.bf16.mxu0 %v854
            %1028 = vmatpush1.bf16.msra.mxu0 %v853
            %1029 = vmatprep.subr.bf16.mxu0 %v848
            %1030 = vmatpush1.bf16.msra.mxu0 %v847
            %1031 = vmatprep.subr.bf16.mxu0 %v842
            %1032 = vmatpush1.bf16.msra.mxu0 %v841
            %1033 = vmatprep.subr.bf16.mxu0 %v836
            %1034 = vmatpush1.bf16.msra.mxu0 %v835
            %1035 = vmatprep.subr.bf16.mxu0 %v830
            %1036 = vmatpush1.bf16.msra.mxu0 %v829
            %1037 = vmatprep.subr.bf16.mxu0 %v920
            %1038 = vmatpush2.bf16.msra.mxu0 %v919
            %1039 = vmatprep.subr.bf16.mxu0 %v914
            %1040 = vmatpush2.bf16.msra.mxu0 %v913
            %1041 = vmatprep.subr.bf16.mxu0 %v908
            %1042 = vmatpush2.bf16.msra.mxu0 %v907
            %1043 = vmatprep.subr.bf16.mxu0 %v902
            %1044 = vmatpush2.bf16.msra.mxu0 %v901
            %1045 = vmatprep.subr.bf16.mxu0 %v896
            %1046 = vmatpush2.bf16.msra.mxu0 %v895
            %1047 = vmatprep.subr.bf16.mxu0 %v890
            %1048 = vmatpush2.bf16.msra.mxu0 %v889
            %1049 = vmatprep.subr.bf16.mxu0 %v884
            %1050 = vmatpush2.bf16.msra.mxu0 %v883
            %1051 = vmatprep.subr.bf16.mxu0 %v878
            %1052 = vmatpush2.bf16.msra.mxu0 %v877
            %1053 = vmatprep.mubr.bf16.mxu0 %v510
            %1054 = vmatmul.mubr.bf16.gmra.mxu0 %v509
            %v1055 = vpop.f32.mrf.mxu0
            %v1056 = vadd.f32 %v434, %v1055
            %v1057 = vpop.f32.mrf.mxu0
            %v1058 = vadd.f32 %v438, %v1057
            %v1059 = vpop.f32.mrf.mxu0
            %v1060 = vadd.f32 %v434, %v1059
            %v1061 = vpop.f32.mrf.mxu0
            %v1062 = vadd.f32 %v438, %v1061
            %1063 = vmatprep.mubr.bf16.mxu0 %v512
            %1064 = vmatmul.mubr.bf16.gmra.mxu0 %v511
            %v1065 = vpop.f32.mrf.mxu0
            %v1066 = vadd.f32 %v434, %v1065
            %v1067 = vpop.f32.mrf.mxu0
            %v1068 = vadd.f32 %v438, %v1067
            %v1069 = vpop.f32.mrf.mxu0
            %v1070 = vadd.f32 %v434, %v1069
            %v1071 = vpop.f32.mrf.mxu0
            %v1072 = vadd.f32 %v438, %v1071
            %1073 = vmatprep.mubr.bf16.mxu0 %v514
            %1074 = vmatmul.mubr.bf16.gmra.mxu0 %v513
            %v1075 = vpop.f32.mrf.mxu0
            %v1076 = vadd.f32 %v434, %v1075
            %v1077 = vpop.f32.mrf.mxu0
            %v1078 = vadd.f32 %v438, %v1077
            %v1079 = vpop.f32.mrf.mxu0
            %v1080 = vadd.f32 %v434, %v1079
            %v1081 = vpop.f32.mrf.mxu0
            %v1082 = vadd.f32 %v438, %v1081
            %1083 = vmatprep.mubr.bf16.mxu0 %v516
            %1084 = vmatmul.mubr.bf16.gmra.mxu0 %v515
            %v1085 = vpop.f32.mrf.mxu0
            %v1086 = vadd.f32 %v434, %v1085
            %v1087 = vpop.f32.mrf.mxu0
            %v1088 = vadd.f32 %v438, %v1087
            %v1089 = vpop.f32.mrf.mxu0
            %v1090 = vadd.f32 %v434, %v1089
            %v1091 = vpop.f32.mrf.mxu0
            %v1092 = vadd.f32 %v438, %v1091
            %1093 = vmatprep.mubr.bf16.mxu0 %v518
            %1094 = vmatmul.mubr.bf16.gmra.mxu0 %v517
            %v1095 = vpop.f32.mrf.mxu0
            %v1096 = vadd.f32 %v434, %v1095
            %v1097 = vpop.f32.mrf.mxu0
            %v1098 = vadd.f32 %v438, %v1097
            %v1099 = vpop.f32.mrf.mxu0
            %v1100 = vadd.f32 %v434, %v1099
            %v1101 = vpop.f32.mrf.mxu0
            %v1102 = vadd.f32 %v438, %v1101
            %1103 = vmatprep.mubr.bf16.mxu0 %v520
            %1104 = vmatmul.mubr.bf16.gmra.mxu0 %v519
            %v1105 = vpop.f32.mrf.mxu0
            %v1106 = vadd.f32 %v434, %v1105
            %v1107 = vpop.f32.mrf.mxu0
            %v1108 = vadd.f32 %v438, %v1107
            %v1109 = vpop.f32.mrf.mxu0
            %v1110 = vadd.f32 %v434, %v1109
            %v1111 = vpop.f32.mrf.mxu0
            %v1112 = vadd.f32 %v438, %v1111
            %1113 = vmatprep.mubr.bf16.mxu0 %v522
            %1114 = vmatmul.mubr.bf16.gmra.mxu0 %v521
            %v1115 = vpop.f32.mrf.mxu0
            %v1116 = vadd.f32 %v434, %v1115
            %v1117 = vpop.f32.mrf.mxu0
            %v1118 = vadd.f32 %v438, %v1117
            %v1119 = vpop.f32.mrf.mxu0
            %v1120 = vadd.f32 %v434, %v1119
            %v1121 = vpop.f32.mrf.mxu0
            %v1122 = vadd.f32 %v438, %v1121
            %1123 = vmatprep.mubr.bf16.mxu0 %v524
            %1124 = vmatmul.mubr.bf16.gmra.mxu0 %v523
            %v1125 = vpop.f32.mrf.mxu0
            %v1126 = vadd.f32 %v434, %v1125
            %v1127 = vpop.f32.mrf.mxu0
            %v1128 = vadd.f32 %v438, %v1127
            %v1129 = vpop.f32.mrf.mxu0
            %v1130 = vadd.f32 %v434, %v1129
            %v1131 = vpop.f32.mrf.mxu0
            %v1132 = vadd.f32 %v438, %v1131
            %1133 = vdwg.mxu0
            %1134 = vmatprep.subr.bf16.mxu0 %v874
            %1135 = vmatpush1.bf16.msra.mxu0 %v873
            %1136 = vmatprep.subr.bf16.mxu0 %v868
            %1137 = vmatpush1.bf16.msra.mxu0 %v867
            %1138 = vmatprep.subr.bf16.mxu0 %v862
            %1139 = vmatpush1.bf16.msra.mxu0 %v861
            %1140 = vmatprep.subr.bf16.mxu0 %v856
            %1141 = vmatpush1.bf16.msra.mxu0 %v855
            %1142 = vmatprep.subr.bf16.mxu0 %v850
            %1143 = vmatpush1.bf16.msra.mxu0 %v849
            %1144 = vmatprep.subr.bf16.mxu0 %v844
            %1145 = vmatpush1.bf16.msra.mxu0 %v843
            %1146 = vmatprep.subr.bf16.mxu0 %v838
            %1147 = vmatpush1.bf16.msra.mxu0 %v837
            %1148 = vmatprep.subr.bf16.mxu0 %v832
            %1149 = vmatpush1.bf16.msra.mxu0 %v831
            %1150 = vmatprep.subr.bf16.mxu0 %v922
            %1151 = vmatpush2.bf16.msra.mxu0 %v921
            %1152 = vmatprep.subr.bf16.mxu0 %v916
            %1153 = vmatpush2.bf16.msra.mxu0 %v915
            %1154 = vmatprep.subr.bf16.mxu0 %v910
            %1155 = vmatpush2.bf16.msra.mxu0 %v909
            %1156 = vmatprep.subr.bf16.mxu0 %v904
            %1157 = vmatpush2.bf16.msra.mxu0 %v903
            %1158 = vmatprep.subr.bf16.mxu0 %v898
            %1159 = vmatpush2.bf16.msra.mxu0 %v897
            %1160 = vmatprep.subr.bf16.mxu0 %v892
            %1161 = vmatpush2.bf16.msra.mxu0 %v891
            %1162 = vmatprep.subr.bf16.mxu0 %v886
            %1163 = vmatpush2.bf16.msra.mxu0 %v885
            %1164 = vmatprep.subr.bf16.mxu0 %v880
            %1165 = vmatpush2.bf16.msra.mxu0 %v879
            %1166 = vmatprep.mubr.bf16.mxu0 %v510
            %1167 = vmatmul.mubr.bf16.gmra.mxu0 %v509
            %v1168 = vpop.f32.mrf.mxu0
            %v1169 = vadd.f32 %v442, %v1168
            %v1170 = vpop.f32.mrf.mxu0
            %v1171 = vadd.f32 %v446, %v1170
            %v1172 = vpop.f32.mrf.mxu0
            %v1173 = vadd.f32 %v442, %v1172
            %v1174 = vpop.f32.mrf.mxu0
            %v1175 = vadd.f32 %v446, %v1174
            %1176 = vmatprep.mubr.bf16.mxu0 %v512
            %1177 = vmatmul.mubr.bf16.gmra.mxu0 %v511
            %v1178 = vpop.f32.mrf.mxu0
            %v1179 = vadd.f32 %v442, %v1178
            %v1180 = vpop.f32.mrf.mxu0
            %v1181 = vadd.f32 %v446, %v1180
            %v1182 = vpop.f32.mrf.mxu0
            %v1183 = vadd.f32 %v442, %v1182
            %v1184 = vpop.f32.mrf.mxu0
            %v1185 = vadd.f32 %v446, %v1184
            %1186 = vmatprep.mubr.bf16.mxu0 %v514
            %1187 = vmatmul.mubr.bf16.gmra.mxu0 %v513
            %v1188 = vpop.f32.mrf.mxu0
            %v1189 = vadd.f32 %v442, %v1188
            %v1190 = vpop.f32.mrf.mxu0
            %v1191 = vadd.f32 %v446, %v1190
            %v1192 = vpop.f32.mrf.mxu0
            %v1193 = vadd.f32 %v442, %v1192
            %v1194 = vpop.f32.mrf.mxu0
            %v1195 = vadd.f32 %v446, %v1194
            %1196 = vmatprep.mubr.bf16.mxu0 %v516
            %1197 = vmatmul.mubr.bf16.gmra.mxu0 %v515
            %v1198 = vpop.f32.mrf.mxu0
            %v1199 = vadd.f32 %v442, %v1198
            %v1200 = vpop.f32.mrf.mxu0
            %v1201 = vadd.f32 %v446, %v1200
            %v1202 = vpop.f32.mrf.mxu0
            %v1203 = vadd.f32 %v442, %v1202
            %v1204 = vpop.f32.mrf.mxu0
            %v1205 = vadd.f32 %v446, %v1204
            %1206 = vmatprep.mubr.bf16.mxu0 %v518
            %1207 = vmatmul.mubr.bf16.gmra.mxu0 %v517
            %v1208 = vpop.f32.mrf.mxu0
            %v1209 = vadd.f32 %v442, %v1208
            %v1210 = vpop.f32.mrf.mxu0
            %v1211 = vadd.f32 %v446, %v1210
            %v1212 = vpop.f32.mrf.mxu0
            %v1213 = vadd.f32 %v442, %v1212
            %v1214 = vpop.f32.mrf.mxu0
            %v1215 = vadd.f32 %v446, %v1214
            %1216 = vmatprep.mubr.bf16.mxu0 %v520
            %1217 = vmatmul.mubr.bf16.gmra.mxu0 %v519
            %v1218 = vpop.f32.mrf.mxu0
            %v1219 = vadd.f32 %v442, %v1218
            %v1220 = vpop.f32.mrf.mxu0
            %v1221 = vadd.f32 %v446, %v1220
            %v1222 = vpop.f32.mrf.mxu0
            %v1223 = vadd.f32 %v442, %v1222
            %v1224 = vpop.f32.mrf.mxu0
            %v1225 = vadd.f32 %v446, %v1224
            %1226 = vmatprep.mubr.bf16.mxu0 %v522
            %1227 = vmatmul.mubr.bf16.gmra.mxu0 %v521
            %v1228 = vpop.f32.mrf.mxu0
            %v1229 = vadd.f32 %v442, %v1228
            %v1230 = vpop.f32.mrf.mxu0
            %v1231 = vadd.f32 %v446, %v1230
            %v1232 = vpop.f32.mrf.mxu0
            %v1233 = vadd.f32 %v442, %v1232
            %v1234 = vpop.f32.mrf.mxu0
            %v1235 = vadd.f32 %v446, %v1234
            %1236 = vmatprep.mubr.bf16.mxu0 %v524
            %1237 = vmatmul.mubr.bf16.gmra.mxu0 %v523
            %v1238 = vpop.f32.mrf.mxu0
            %v1239 = vadd.f32 %v442, %v1238
            %v1240 = vpop.f32.mrf.mxu0
            %v1241 = vadd.f32 %v446, %v1240
            %v1242 = vpop.f32.mrf.mxu0
            %v1243 = vadd.f32 %v442, %v1242
            %v1244 = vpop.f32.mrf.mxu0
            %v1245 = vadd.f32 %v446, %v1244
            %1246 = vdwg.mxu0
            %1247 = vmatprep.subr.bf16.mxu0 %v876
            %1248 = vmatpush1.bf16.msra.mxu0 %v875
            %1249 = vmatprep.subr.bf16.mxu0 %v870
            %1250 = vmatpush1.bf16.msra.mxu0 %v869
            %1251 = vmatprep.subr.bf16.mxu0 %v864
            %1252 = vmatpush1.bf16.msra.mxu0 %v863
            %1253 = vmatprep.subr.bf16.mxu0 %v858
            %1254 = vmatpush1.bf16.msra.mxu0 %v857
            %1255 = vmatprep.subr.bf16.mxu0 %v852
            %1256 = vmatpush1.bf16.msra.mxu0 %v851
            %1257 = vmatprep.subr.bf16.mxu0 %v846
            %1258 = vmatpush1.bf16.msra.mxu0 %v845
            %1259 = vmatprep.subr.bf16.mxu0 %v840
            %1260 = vmatpush1.bf16.msra.mxu0 %v839
            %1261 = vmatprep.subr.bf16.mxu0 %v834
            %1262 = vmatpush1.bf16.msra.mxu0 %v833
            %1263 = vmatprep.subr.bf16.mxu0 %v924
            %1264 = vmatpush2.bf16.msra.mxu0 %v923
            %1265 = vmatprep.subr.bf16.mxu0 %v918
            %1266 = vmatpush2.bf16.msra.mxu0 %v917
            %1267 = vmatprep.subr.bf16.mxu0 %v912
            %1268 = vmatpush2.bf16.msra.mxu0 %v911
            %1269 = vmatprep.subr.bf16.mxu0 %v906
            %1270 = vmatpush2.bf16.msra.mxu0 %v905
            %1271 = vmatprep.subr.bf16.mxu0 %v900
            %1272 = vmatpush2.bf16.msra.mxu0 %v899
            %1273 = vmatprep.subr.bf16.mxu0 %v894
            %1274 = vmatpush2.bf16.msra.mxu0 %v893
            %1275 = vmatprep.subr.bf16.mxu0 %v888
            %1276 = vmatpush2.bf16.msra.mxu0 %v887
            %1277 = vmatprep.subr.bf16.mxu0 %v882
            %1278 = vmatpush2.bf16.msra.mxu0 %v881
            %1279 = vmatprep.mubr.bf16.mxu0 %v510
            %1280 = vmatmul.mubr.bf16.gmra.mxu0 %v509
            %v1281 = vpop.f32.mrf.mxu0
            %v1282 = vadd.f32 %v450, %v1281
            %v1283 = vpop.f32.mrf.mxu0
            %v1284 = vadd.f32 %v454, %v1283
            %v1285 = vpop.f32.mrf.mxu0
            %v1286 = vadd.f32 %v450, %v1285
            %v1287 = vpop.f32.mrf.mxu0
            %v1288 = vadd.f32 %v454, %v1287
            %1289 = vmatprep.mubr.bf16.mxu0 %v512
            %1290 = vmatmul.mubr.bf16.gmra.mxu0 %v511
            %v1291 = vpop.f32.mrf.mxu0
            %v1292 = vadd.f32 %v450, %v1291
            %v1293 = vpop.f32.mrf.mxu0
            %v1294 = vadd.f32 %v454, %v1293
            %v1295 = vpop.f32.mrf.mxu0
            %v1296 = vadd.f32 %v450, %v1295
            %v1297 = vpop.f32.mrf.mxu0
            %v1298 = vadd.f32 %v454, %v1297
            %1299 = vmatprep.mubr.bf16.mxu0 %v514
            %1300 = vmatmul.mubr.bf16.gmra.mxu0 %v513
            %v1301 = vpop.f32.mrf.mxu0
            %v1302 = vadd.f32 %v450, %v1301
            %v1303 = vpop.f32.mrf.mxu0
            %v1304 = vadd.f32 %v454, %v1303
            %v1305 = vpop.f32.mrf.mxu0
            %v1306 = vadd.f32 %v450, %v1305
            %v1307 = vpop.f32.mrf.mxu0
            %v1308 = vadd.f32 %v454, %v1307
            %1309 = vmatprep.mubr.bf16.mxu0 %v516
            %1310 = vmatmul.mubr.bf16.gmra.mxu0 %v515
            %v1311 = vpop.f32.mrf.mxu0
            %v1312 = vadd.f32 %v450, %v1311
            %v1313 = vpop.f32.mrf.mxu0
            %v1314 = vadd.f32 %v454, %v1313
            %v1315 = vpop.f32.mrf.mxu0
            %v1316 = vadd.f32 %v450, %v1315
            %v1317 = vpop.f32.mrf.mxu0
            %v1318 = vadd.f32 %v454, %v1317
            %1319 = vmatprep.mubr.bf16.mxu0 %v518
            %1320 = vmatmul.mubr.bf16.gmra.mxu0 %v517
            %v1321 = vpop.f32.mrf.mxu0
            %v1322 = vadd.f32 %v450, %v1321
            %v1323 = vpop.f32.mrf.mxu0
            %v1324 = vadd.f32 %v454, %v1323
            %v1325 = vpop.f32.mrf.mxu0
            %v1326 = vadd.f32 %v450, %v1325
            %v1327 = vpop.f32.mrf.mxu0
            %v1328 = vadd.f32 %v454, %v1327
            %1329 = vmatprep.mubr.bf16.mxu0 %v520
            %1330 = vmatmul.mubr.bf16.gmra.mxu0 %v519
            %v1331 = vpop.f32.mrf.mxu0
            %v1332 = vadd.f32 %v450, %v1331
            %v1333 = vpop.f32.mrf.mxu0
            %v1334 = vadd.f32 %v454, %v1333
            %v1335 = vpop.f32.mrf.mxu0
            %v1336 = vadd.f32 %v450, %v1335
            %v1337 = vpop.f32.mrf.mxu0
            %v1338 = vadd.f32 %v454, %v1337
            %1339 = vmatprep.mubr.bf16.mxu0 %v522
            %1340 = vmatmul.mubr.bf16.gmra.mxu0 %v521
            %v1341 = vpop.f32.mrf.mxu0
            %v1342 = vadd.f32 %v450, %v1341
            %v1343 = vpop.f32.mrf.mxu0
            %v1344 = vadd.f32 %v454, %v1343
            %v1345 = vpop.f32.mrf.mxu0
            %v1346 = vadd.f32 %v450, %v1345
            %v1347 = vpop.f32.mrf.mxu0
            %v1348 = vadd.f32 %v454, %v1347
            %1349 = vmatprep.mubr.bf16.mxu0 %v524
            %1350 = vmatmul.mubr.bf16.gmra.mxu0 %v523
            %v1351 = vpop.f32.mrf.mxu0
            %v1352 = vadd.f32 %v450, %v1351
            %v1353 = vpop.f32.mrf.mxu0
            %v1354 = vadd.f32 %v454, %v1353
            %v1355 = vpop.f32.mrf.mxu0
            %v1356 = vadd.f32 %v450, %v1355
            %v1357 = vpop.f32.mrf.mxu0
            %v1358 = vadd.f32 %v454, %v1357
            %1359 = vdwg.mxu0
            %v1360 = vpack.c.bf16 %v1060, %v1056
            %v1361 = vpack.c.bf16 %v1062, %v1058
            %v1362 = vpack.c.bf16 %v1173, %v1169
            %v1363 = vpack.c.bf16 %v1175, %v1171
            %v1364 = vpack.c.bf16 %v1286, %v1282
            %v1365 = vpack.c.bf16 %v1288, %v1284
            %v1366 = vpack.c.bf16 %v1070, %v1066
            %v1367 = vpack.c.bf16 %v1072, %v1068
            %v1368 = vpack.c.bf16 %v1183, %v1179
            %v1369 = vpack.c.bf16 %v1185, %v1181
            %v1370 = vpack.c.bf16 %v1296, %v1292
            %v1371 = vpack.c.bf16 %v1298, %v1294
            %v1372 = vpack.c.bf16 %v1080, %v1076
            %v1373 = vpack.c.bf16 %v1082, %v1078
            %v1374 = vpack.c.bf16 %v1193, %v1189
            %v1375 = vpack.c.bf16 %v1195, %v1191
            %v1376 = vpack.c.bf16 %v1306, %v1302
            %v1377 = vpack.c.bf16 %v1308, %v1304
            %v1378 = vpack.c.bf16 %v1090, %v1086
            %v1379 = vpack.c.bf16 %v1092, %v1088
            %v1380 = vpack.c.bf16 %v1203, %v1199
            %v1381 = vpack.c.bf16 %v1205, %v1201
            %v1382 = vpack.c.bf16 %v1316, %v1312
            %v1383 = vpack.c.bf16 %v1318, %v1314
            %v1384 = vpack.c.bf16 %v1100, %v1096
            %v1385 = vpack.c.bf16 %v1102, %v1098
            %v1386 = vpack.c.bf16 %v1213, %v1209
            %v1387 = vpack.c.bf16 %v1215, %v1211
            %v1388 = vpack.c.bf16 %v1326, %v1322
            %v1389 = vpack.c.bf16 %v1328, %v1324
            %v1390 = vpack.c.bf16 %v1110, %v1106
            %v1391 = vpack.c.bf16 %v1112, %v1108
            %v1392 = vpack.c.bf16 %v1223, %v1219
            %v1393 = vpack.c.bf16 %v1225, %v1221
            %v1394 = vpack.c.bf16 %v1336, %v1332
            %v1395 = vpack.c.bf16 %v1338, %v1334
            %v1396 = vpack.c.bf16 %v1120, %v1116
            %v1397 = vpack.c.bf16 %v1122, %v1118
            %v1398 = vpack.c.bf16 %v1233, %v1229
            %v1399 = vpack.c.bf16 %v1235, %v1231
            %v1400 = vpack.c.bf16 %v1346, %v1342
            %v1401 = vpack.c.bf16 %v1348, %v1344
            %v1402 = vpack.c.bf16 %v1130, %v1126
            %v1403 = vpack.c.bf16 %v1132, %v1128
            %v1404 = vpack.c.bf16 %v1243, %v1239
            %v1405 = vpack.c.bf16 %v1245, %v1241
            %v1406 = vpack.c.bf16 %v1356, %v1352
            %v1407 = vpack.c.bf16 %v1358, %v1354
            %v1456 = vunpack.c.l.b16 %v1360
            %v1457 = vunpack.c.l.b16 %v1361
            %v1458 = vunpack.c.l.b16 %v1362
            %v1459 = vunpack.c.l.b16 %v1363
            %v1460 = vunpack.c.l.b16 %v1364
            %v1461 = vunpack.c.l.b16 %v1365
            %v1462 = vunpack.c.h.b16 %v1360
            %v1463 = vunpack.c.h.b16 %v1361
            %v1464 = vunpack.c.h.b16 %v1362
            %v1465 = vunpack.c.h.b16 %v1363
            %v1466 = vunpack.c.h.b16 %v1364
            %v1467 = vunpack.c.h.b16 %v1365
            %v1468 = vunpack.c.l.b16 %v1366
            %v1469 = vunpack.c.l.b16 %v1367
            %v1470 = vunpack.c.l.b16 %v1368
            %v1471 = vunpack.c.l.b16 %v1369
            %v1472 = vunpack.c.l.b16 %v1370
            %v1473 = vunpack.c.l.b16 %v1371
            %v1474 = vunpack.c.h.b16 %v1366
            %v1475 = vunpack.c.h.b16 %v1367
            %v1476 = vunpack.c.h.b16 %v1368
            %v1477 = vunpack.c.h.b16 %v1369
            %v1478 = vunpack.c.h.b16 %v1370
            %v1479 = vunpack.c.h.b16 %v1371
            %v1480 = vunpack.c.l.b16 %v1372
            %v1481 = vunpack.c.l.b16 %v1373
            %v1482 = vunpack.c.l.b16 %v1374
            %v1483 = vunpack.c.l.b16 %v1375
            %v1484 = vunpack.c.l.b16 %v1376
            %v1485 = vunpack.c.l.b16 %v1377
            %v1486 = vunpack.c.h.b16 %v1372
            %v1487 = vunpack.c.h.b16 %v1373
            %v1488 = vunpack.c.h.b16 %v1374
            %v1489 = vunpack.c.h.b16 %v1375
            %v1490 = vunpack.c.h.b16 %v1376
            %v1491 = vunpack.c.h.b16 %v1377
            %v1492 = vunpack.c.l.b16 %v1378
            %v1493 = vunpack.c.l.b16 %v1379
            %v1494 = vunpack.c.l.b16 %v1380
            %v1495 = vunpack.c.l.b16 %v1381
            %v1496 = vunpack.c.l.b16 %v1382
            %v1497 = vunpack.c.l.b16 %v1383
            %v1498 = vunpack.c.h.b16 %v1378
            %v1499 = vunpack.c.h.b16 %v1379
            %v1500 = vunpack.c.h.b16 %v1380
            %v1501 = vunpack.c.h.b16 %v1381
            %v1502 = vunpack.c.h.b16 %v1382
            %v1503 = vunpack.c.h.b16 %v1383
            %v1504 = vunpack.c.l.b16 %v1384
            %v1505 = vunpack.c.l.b16 %v1385
            %v1506 = vunpack.c.l.b16 %v1386
            %v1507 = vunpack.c.l.b16 %v1387
            %v1508 = vunpack.c.l.b16 %v1388
            %v1509 = vunpack.c.l.b16 %v1389
            %v1510 = vunpack.c.h.b16 %v1384
            %v1511 = vunpack.c.h.b16 %v1385
            %v1512 = vunpack.c.h.b16 %v1386
            %v1513 = vunpack.c.h.b16 %v1387
            %v1514 = vunpack.c.h.b16 %v1388
            %v1515 = vunpack.c.h.b16 %v1389
            %v1516 = vunpack.c.l.b16 %v1390
            %v1517 = vunpack.c.l.b16 %v1391
            %v1518 = vunpack.c.l.b16 %v1392
            %v1519 = vunpack.c.l.b16 %v1393
            %v1520 = vunpack.c.l.b16 %v1394
            %v1521 = vunpack.c.l.b16 %v1395
            %v1522 = vunpack.c.h.b16 %v1390
            %v1523 = vunpack.c.h.b16 %v1391
            %v1524 = vunpack.c.h.b16 %v1392
            %v1525 = vunpack.c.h.b16 %v1393
            %v1526 = vunpack.c.h.b16 %v1394
            %v1527 = vunpack.c.h.b16 %v1395
            %v1528 = vunpack.c.l.b16 %v1396
            %v1529 = vunpack.c.l.b16 %v1397
            %v1530 = vunpack.c.l.b16 %v1398
            %v1531 = vunpack.c.l.b16 %v1399
            %v1532 = vunpack.c.l.b16 %v1400
            %v1533 = vunpack.c.l.b16 %v1401
            %v1534 = vunpack.c.h.b16 %v1396
            %v1535 = vunpack.c.h.b16 %v1397
            %v1536 = vunpack.c.h.b16 %v1398
            %v1537 = vunpack.c.h.b16 %v1399
            %v1538 = vunpack.c.h.b16 %v1400
            %v1539 = vunpack.c.h.b16 %v1401
            %v1540 = vunpack.c.l.b16 %v1402
            %v1541 = vunpack.c.l.b16 %v1403
            %v1542 = vunpack.c.l.b16 %v1404
            %v1543 = vunpack.c.l.b16 %v1405
            %v1544 = vunpack.c.l.b16 %v1406
            %v1545 = vunpack.c.l.b16 %v1407
            %v1546 = vunpack.c.h.b16 %v1402
            %v1547 = vunpack.c.h.b16 %v1403
            %v1548 = vunpack.c.h.b16 %v1404
            %v1549 = vunpack.c.h.b16 %v1405
            %v1550 = vunpack.c.h.b16 %v1406
            %v1551 = vunpack.c.h.b16 %v1407
            %v1552 = vpack.c.b16 %v1457, %v1456
            %v1553 = vpack.c.b16 %v1459, %v1458
            %v1554 = vpack.c.b16 %v1461, %v1460
            %v1555 = vpack.c.b16 %v1463, %v1462
            %v1556 = vpack.c.b16 %v1465, %v1464
            %v1557 = vpack.c.b16 %v1467, %v1466
            %v1558 = vpack.c.b16 %v1469, %v1468
            %v1559 = vpack.c.b16 %v1471, %v1470
            %v1560 = vpack.c.b16 %v1473, %v1472
            %v1561 = vpack.c.b16 %v1475, %v1474
            %v1562 = vpack.c.b16 %v1477, %v1476
            %v1563 = vpack.c.b16 %v1479, %v1478
            %v1564 = vpack.c.b16 %v1481, %v1480
            %v1565 = vpack.c.b16 %v1483, %v1482
            %v1566 = vpack.c.b16 %v1485, %v1484
            %v1567 = vpack.c.b16 %v1487, %v1486
            %v1568 = vpack.c.b16 %v1489, %v1488
            %v1569 = vpack.c.b16 %v1491, %v1490
            %v1570 = vpack.c.b16 %v1493, %v1492
            %v1571 = vpack.c.b16 %v1495, %v1494
            %v1572 = vpack.c.b16 %v1497, %v1496
            %v1573 = vpack.c.b16 %v1499, %v1498
            %v1574 = vpack.c.b16 %v1501, %v1500
            %v1575 = vpack.c.b16 %v1503, %v1502
            %v1576 = vpack.c.b16 %v1505, %v1504
            %v1577 = vpack.c.b16 %v1507, %v1506
            %v1578 = vpack.c.b16 %v1509, %v1508
            %v1579 = vpack.c.b16 %v1511, %v1510
            %v1580 = vpack.c.b16 %v1513, %v1512
            %v1581 = vpack.c.b16 %v1515, %v1514
            %v1582 = vpack.c.b16 %v1517, %v1516
            %v1583 = vpack.c.b16 %v1519, %v1518
            %v1584 = vpack.c.b16 %v1521, %v1520
            %v1585 = vpack.c.b16 %v1523, %v1522
            %v1586 = vpack.c.b16 %v1525, %v1524
            %v1587 = vpack.c.b16 %v1527, %v1526
            %v1588 = vpack.c.b16 %v1529, %v1528
            %v1589 = vpack.c.b16 %v1531, %v1530
            %v1590 = vpack.c.b16 %v1533, %v1532
            %v1591 = vpack.c.b16 %v1535, %v1534
            %v1592 = vpack.c.b16 %v1537, %v1536
            %v1593 = vpack.c.b16 %v1539, %v1538
            %v1594 = vpack.c.b16 %v1541, %v1540
            %v1595 = vpack.c.b16 %v1543, %v1542
            %v1596 = vpack.c.b16 %v1545, %v1544
            %v1597 = vpack.c.b16 %v1547, %v1546
            %v1598 = vpack.c.b16 %v1549, %v1548
            %v1599 = vpack.c.b16 %v1551, %v1550
            %s1648 = smul.u32 %s312, 6
            %s1649 = smul.addr %s1648, 4
            %s1650 = scalar_lea.vmem [#allocation2], %s1649
            %1651 = vst [vmem:[%s1650] sm:$0xff] %v1552
            %1652 = vst [vmem:[%s1650 + $0x8] sm:$0xff] %v1553
            %1653 = vst [vmem:[%s1650 + $0x10] sm:$0xff] %v1554
            %1654 = vst [vmem:[%s1650 + $0x18] sm:$0xff] %v1555
            %1655 = vst [vmem:[%s1650 + $0x20] sm:$0xff] %v1556
            %1656 = vst [vmem:[%s1650 + $0x28] sm:$0xff] %v1557
            %1657 = vst [vmem:[%s1650 + $0x30] sm:$0xff] %v1558
            %1658 = vst [vmem:[%s1650 + $0x38] sm:$0xff] %v1559
            %1659 = vst [vmem:[%s1650 + $0x40] sm:$0xff] %v1560
            %1660 = vst [vmem:[%s1650 + $0x48] sm:$0xff] %v1561
            %1661 = vst [vmem:[%s1650 + $0x50] sm:$0xff] %v1562
            %1662 = vst [vmem:[%s1650 + $0x58] sm:$0xff] %v1563
            %1663 = vst [vmem:[%s1650 + $0x60] sm:$0xff] %v1564
            %1664 = vst [vmem:[%s1650 + $0x68] sm:$0xff] %v1565
            %1665 = vst [vmem:[%s1650 + $0x70] sm:$0xff] %v1566
            %1666 = vst [vmem:[%s1650 + $0x78] sm:$0xff] %v1567
            %1667 = vst [vmem:[%s1650 + $0x80] sm:$0xff] %v1568
            %1668 = vst [vmem:[%s1650 + $0x88] sm:$0xff] %v1569
            %1669 = vst [vmem:[%s1650 + $0x90] sm:$0xff] %v1570
            %1670 = vst [vmem:[%s1650 + $0x98] sm:$0xff] %v1571
            %1671 = vst [vmem:[%s1650 + $0xa0] sm:$0xff] %v1572
            %1672 = vst [vmem:[%s1650 + $0xa8] sm:$0xff] %v1573
            %1673 = vst [vmem:[%s1650 + $0xb0] sm:$0xff] %v1574
            %1674 = vst [vmem:[%s1650 + $0xb8] sm:$0xff] %v1575
            %1675 = vst [vmem:[%s1650 + $0xc0] sm:$0xff] %v1576
            %1676 = vst [vmem:[%s1650 + $0xc8] sm:$0xff] %v1577
            %1677 = vst [vmem:[%s1650 + $0xd0] sm:$0xff] %v1578
            %1678 = vst [vmem:[%s1650 + $0xd8] sm:$0xff] %v1579
            %1679 = vst [vmem:[%s1650 + $0xe0] sm:$0xff] %v1580
            %1680 = vst [vmem:[%s1650 + $0xe8] sm:$0xff] %v1581
            %1681 = vst [vmem:[%s1650 + $0xf0] sm:$0xff] %v1582
            %1682 = vst [vmem:[%s1650 + $0xf8] sm:$0xff] %v1583
            %1683 = vst [vmem:[%s1650 + $0x100] sm:$0xff] %v1584
            %1684 = vst [vmem:[%s1650 + $0x108] sm:$0xff] %v1585
            %1685 = vst [vmem:[%s1650 + $0x110] sm:$0xff] %v1586
            %1686 = vst [vmem:[%s1650 + $0x118] sm:$0xff] %v1587
            %1687 = vst [vmem:[%s1650 + $0x120] sm:$0xff] %v1588
            %1688 = vst [vmem:[%s1650 + $0x128] sm:$0xff] %v1589
            %1689 = vst [vmem:[%s1650 + $0x130] sm:$0xff] %v1590
            %1690 = vst [vmem:[%s1650 + $0x138] sm:$0xff] %v1591
            %1691 = vst [vmem:[%s1650 + $0x140] sm:$0xff] %v1592
            %1692 = vst [vmem:[%s1650 + $0x148] sm:$0xff] %v1593
            %1693 = vst [vmem:[%s1650 + $0x150] sm:$0xff] %v1594
            %1694 = vst [vmem:[%s1650 + $0x158] sm:$0xff] %v1595
            %1695 = vst [vmem:[%s1650 + $0x160] sm:$0xff] %v1596
            %1696 = vst [vmem:[%s1650 + $0x168] sm:$0xff] %v1597
            %1697 = vst [vmem:[%s1650 + $0x170] sm:$0xff] %v1598
            %1698 = vst [vmem:[%s1650 + $0x178] sm:$0xff] %v1599
          $region65: #{tpu_custom_call.1} parent=59 // loop_footer
            %s310 = sadd.s32 1, %s306
          $region66: #{tpu_custom_call.1} parent=59 // loop_footer_branch
            %305 = sbr.rel target = $region62
          $region67: #{tpu_custom_call.1} parent=59 // loop_exit
            _
        $region60: #{tpu_custom_call.1} parent=39 // pred_fallthru
          _
        %s1699 = smul.u32 %s29, 128
        %s1700 = sshra.s32 %s1699, 3
        %s1701 = sand.u32 %s1699, 7
        %s1702 = smul.u32 %s1700, 6
        %s1703 = smul.addr %s1702, 4
        %s1704 = scalar_lea.vmem [#allocation2], %s1703
        %v1705 = vld [vmem:[%s1704] sm:$0xf]
        %v1706 = vld [vmem:[%s1704 + $0x18] sm:$0xf]
        %v1707 = vld [vmem:[%s1704 + $0x30] sm:$0xf]
        %v1708 = vld [vmem:[%s1704 + $0x48] sm:$0xf]
        %v1709 = vld [vmem:[%s1704 + $0x60] sm:$0xf]
        %v1710 = vld [vmem:[%s1704 + $0x78] sm:$0xf]
        %v1711 = vld [vmem:[%s1704 + $0x90] sm:$0xf]
        %v1712 = vld [vmem:[%s1704 + $0xa8] sm:$0xf]
        %v1713 = vld [vmem:[%s1704 + $0xc0] sm:$0xf]
        %v1714 = vld [vmem:[%s1704 + $0xd8] sm:$0xf]
        %v1715 = vld [vmem:[%s1704 + $0xf0] sm:$0xf]
        %v1716 = vld [vmem:[%s1704 + $0x108] sm:$0xf]
        %v1717 = vld [vmem:[%s1704 + $0x120] sm:$0xf]
        %v1718 = vld [vmem:[%s1704 + $0x138] sm:$0xf]
        %v1719 = vld [vmem:[%s1704 + $0x150] sm:$0xf]
        %v1720 = vld [vmem:[%s1704 + $0x168] sm:$0xf]
        %v1721 = vld [vmem:[#allocation2 + $0x8] sm:$0xf]
        %v1722 = vld [vmem:[#allocation2 + $0x20] sm:$0xf]
        %v1723 = vld [vmem:[#allocation2 + $0x38] sm:$0xf]
        %v1724 = vld [vmem:[#allocation2 + $0x50] sm:$0xf]
        %v1725 = vld [vmem:[#allocation2 + $0x68] sm:$0xf]
        %v1726 = vld [vmem:[#allocation2 + $0x80] sm:$0xf]
        %v1727 = vld [vmem:[#allocation2 + $0x98] sm:$0xf]
        %v1728 = vld [vmem:[#allocation2 + $0xb0] sm:$0xf]
        %v1729 = vld [vmem:[#allocation2 + $0xc8] sm:$0xf]
        %v1730 = vld [vmem:[#allocation2 + $0xe0] sm:$0xf]
        %v1731 = vld [vmem:[#allocation2 + $0xf8] sm:$0xf]
        %v1732 = vld [vmem:[#allocation2 + $0x110] sm:$0xf]
        %v1733 = vld [vmem:[#allocation2 + $0x128] sm:$0xf]
        %v1734 = vld [vmem:[#allocation2 + $0x140] sm:$0xf]
        %v1735 = vld [vmem:[#allocation2 + $0x158] sm:$0xf]
        %v1736 = vld [vmem:[#allocation2 + $0x170] sm:$0xf]
        %v1737 = vld [vmem:[#allocation2 + $0x188] sm:$0xf]
        %v1738 = vld [vmem:[#allocation2 + $0x1a0] sm:$0xf]
        %v1739 = vld [vmem:[#allocation2 + $0x1b8] sm:$0xf]
        %v1740 = vld [vmem:[#allocation2 + $0x1d0] sm:$0xf]
        %v1741 = vld [vmem:[#allocation2 + $0x1e8] sm:$0xf]
        %v1742 = vld [vmem:[#allocation2 + $0x200] sm:$0xf]
        %v1743 = vld [vmem:[#allocation2 + $0x218] sm:$0xf]
        %v1744 = vld [vmem:[#allocation2 + $0x230] sm:$0xf]
        %v1745 = vld [vmem:[#allocation2 + $0x248] sm:$0xf]
        %v1746 = vld [vmem:[#allocation2 + $0x260] sm:$0xf]
        %v1747 = vld [vmem:[#allocation2 + $0x278] sm:$0xf]
        %v1748 = vld [vmem:[#allocation2 + $0x290] sm:$0xf]
        %v1749 = vld [vmem:[#allocation2 + $0x2a8] sm:$0xf]
        %v1750 = vld [vmem:[#allocation2 + $0x2c0] sm:$0xf]
        %v1751 = vld [vmem:[#allocation2 + $0x2d8] sm:$0xf]
        %v1752 = vld [vmem:[#allocation2 + $0x2f0] sm:$0xf]
        %v1753 = vld [vmem:[#allocation2 + $0x10] sm:$0xf]
        %v1754 = vld [vmem:[#allocation2 + $0x28] sm:$0xf]
        %v1755 = vld [vmem:[#allocation2 + $0x40] sm:$0xf]
        %v1756 = vld [vmem:[#allocation2 + $0x58] sm:$0xf]
        %v1757 = vld [vmem:[#allocation2 + $0x70] sm:$0xf]
        %v1758 = vld [vmem:[#allocation2 + $0x88] sm:$0xf]
        %v1759 = vld [vmem:[#allocation2 + $0xa0] sm:$0xf]
        %v1760 = vld [vmem:[#allocation2 + $0xb8] sm:$0xf]
        %v1761 = vld [vmem:[#allocation2 + $0xd0] sm:$0xf]
        %v1762 = vld [vmem:[#allocation2 + $0xe8] sm:$0xf]
        %v1763 = vld [vmem:[#allocation2 + $0x100] sm:$0xf]
        %v1764 = vld [vmem:[#allocation2 + $0x118] sm:$0xf]
        %v1765 = vld [vmem:[#allocation2 + $0x130] sm:$0xf]
        %v1766 = vld [vmem:[#allocation2 + $0x148] sm:$0xf]
        %v1767 = vld [vmem:[#allocation2 + $0x160] sm:$0xf]
        %v1768 = vld [vmem:[#allocation2 + $0x178] sm:$0xf]
        %v1769 = vld [vmem:[#allocation2 + $0x190] sm:$0xf]
        %v1770 = vld [vmem:[#allocation2 + $0x1a8] sm:$0xf]
        %v1771 = vld [vmem:[#allocation2 + $0x1c0] sm:$0xf]
        %v1772 = vld [vmem:[#allocation2 + $0x1d8] sm:$0xf]
        %v1773 = vld [vmem:[#allocation2 + $0x1f0] sm:$0xf]
        %v1774 = vld [vmem:[#allocation2 + $0x208] sm:$0xf]
        %v1775 = vld [vmem:[#allocation2 + $0x220] sm:$0xf]
        %v1776 = vld [vmem:[#allocation2 + $0x238] sm:$0xf]
        %v1777 = vld [vmem:[#allocation2 + $0x250] sm:$0xf]
        %v1778 = vld [vmem:[#allocation2 + $0x268] sm:$0xf]
        %v1779 = vld [vmem:[#allocation2 + $0x280] sm:$0xf]
        %v1780 = vld [vmem:[#allocation2 + $0x298] sm:$0xf]
        %v1781 = vld [vmem:[#allocation2 + $0x2b0] sm:$0xf]
        %v1782 = vld [vmem:[#allocation2 + $0x2c8] sm:$0xf]
        %v1783 = vld [vmem:[#allocation2 + $0x2e0] sm:$0xf]
        %v1784 = vld [vmem:[#allocation2 + $0x2f8] sm:$0xf]
        %v1801 = vunpack.c.l.b16 %v1705
        %v1802 = vunpack.c.l.b16 %v1706
        %v1803 = vunpack.c.l.b16 %v1707
        %v1804 = vunpack.c.l.b16 %v1708
        %v1805 = vunpack.c.l.b16 %v1709
        %v1806 = vunpack.c.l.b16 %v1710
        %v1807 = vunpack.c.l.b16 %v1711
        %v1808 = vunpack.c.l.b16 %v1712
        %v1809 = vunpack.c.l.b16 %v1713
        %v1810 = vunpack.c.l.b16 %v1714
        %v1811 = vunpack.c.l.b16 %v1715
        %v1812 = vunpack.c.l.b16 %v1716
        %v1813 = vunpack.c.l.b16 %v1717
        %v1814 = vunpack.c.l.b16 %v1718
        %v1815 = vunpack.c.l.b16 %v1719
        %v1816 = vunpack.c.l.b16 %v1720
        %v1817 = vpack.c.b16 %v1802, %v1801
        %v1818 = vpack.c.b16 %v1804, %v1803
        %v1819 = vpack.c.b16 %v1806, %v1805
        %v1820 = vpack.c.b16 %v1808, %v1807
        %v1821 = vpack.c.b16 %v1810, %v1809
        %v1822 = vpack.c.b16 %v1812, %v1811
        %v1823 = vpack.c.b16 %v1814, %v1813
        %v1824 = vpack.c.b16 %v1816, %v1815
        %v1865 = vunpack.c.l.b16 %v1721
        %v1866 = vunpack.c.l.b16 %v1722
        %v1867 = vunpack.c.l.b16 %v1723
        %v1868 = vunpack.c.l.b16 %v1724
        %v1869 = vunpack.c.l.b16 %v1725
        %v1870 = vunpack.c.l.b16 %v1726
        %v1871 = vunpack.c.l.b16 %v1727
        %v1872 = vunpack.c.l.b16 %v1728
        %v1873 = vunpack.c.l.b16 %v1729
        %v1874 = vunpack.c.l.b16 %v1730
        %v1875 = vunpack.c.l.b16 %v1731
        %v1876 = vunpack.c.l.b16 %v1732
        %v1877 = vunpack.c.l.b16 %v1733
        %v1878 = vunpack.c.l.b16 %v1734
        %v1879 = vunpack.c.l.b16 %v1735
        %v1880 = vunpack.c.l.b16 %v1736
        %v1881 = vunpack.c.l.b16 %v1737
        %v1882 = vunpack.c.l.b16 %v1738
        %v1883 = vunpack.c.l.b16 %v1739
        %v1884 = vunpack.c.l.b16 %v1740
        %v1885 = vunpack.c.l.b16 %v1741
        %v1886 = vunpack.c.l.b16 %v1742
        %v1887 = vunpack.c.l.b16 %v1743
        %v1888 = vunpack.c.l.b16 %v1744
        %v1889 = vunpack.c.l.b16 %v1745
        %v1890 = vunpack.c.l.b16 %v1746
        %v1891 = vunpack.c.l.b16 %v1747
        %v1892 = vunpack.c.l.b16 %v1748
        %v1893 = vunpack.c.l.b16 %v1749
        %v1894 = vunpack.c.l.b16 %v1750
        %v1895 = vunpack.c.l.b16 %v1751
        %v1896 = vunpack.c.l.b16 %v1752
        %v1897 = vpack.c.b16 %v1866, %v1865
        %v1898 = vpack.c.b16 %v1868, %v1867
        %v1899 = vpack.c.b16 %v1870, %v1869
        %v1900 = vpack.c.b16 %v1872, %v1871
        %v1901 = vpack.c.b16 %v1874, %v1873
        %v1902 = vpack.c.b16 %v1876, %v1875
        %v1903 = vpack.c.b16 %v1878, %v1877
        %v1904 = vpack.c.b16 %v1880, %v1879
        %v1905 = vpack.c.b16 %v1882, %v1881
        %v1906 = vpack.c.b16 %v1884, %v1883
        %v1907 = vpack.c.b16 %v1886, %v1885
        %v1908 = vpack.c.b16 %v1888, %v1887
        %v1909 = vpack.c.b16 %v1890, %v1889
        %v1910 = vpack.c.b16 %v1892, %v1891
        %v1911 = vpack.c.b16 %v1894, %v1893
        %v1912 = vpack.c.b16 %v1896, %v1895
        %1929 = vmatprep.subr.bf16.mxu0 0
        %1930 = vmatpush1.bf16.xpose.msra.mxu0 %v1904
        %1931 = vmatprep.subr.bf16.mxu0 0
        %1932 = vmatpush1.bf16.xpose.msra.mxu0 %v1903
        %1933 = vmatprep.subr.bf16.mxu0 0
        %1934 = vmatpush1.bf16.xpose.msra.mxu0 %v1902
        %1935 = vmatprep.subr.bf16.mxu0 0
        %1936 = vmatpush1.bf16.xpose.msra.mxu0 %v1901
        %1937 = vmatprep.subr.bf16.mxu0 0
        %1938 = vmatpush1.bf16.xpose.msra.mxu0 %v1900
        %1939 = vmatprep.subr.bf16.mxu0 0
        %1940 = vmatpush1.bf16.xpose.msra.mxu0 %v1899
        %1941 = vmatprep.subr.bf16.mxu0 0
        %1942 = vmatpush1.bf16.xpose.msra.mxu0 %v1898
        %1943 = vmatprep.subr.bf16.mxu0 0
        %1944 = vmatpush1.bf16.xpose.msra.mxu0 %v1897
        %1945 = vmatprep.subr.bf16.mxu0 0
        %1946 = vmatpush2.bf16.xpose.msra.mxu0 %v1912
        %1947 = vmatprep.subr.bf16.mxu0 0
        %1948 = vmatpush2.bf16.xpose.msra.mxu0 %v1911
        %1949 = vmatprep.subr.bf16.mxu0 0
        %1950 = vmatpush2.bf16.xpose.msra.mxu0 %v1910
        %1951 = vmatprep.subr.bf16.mxu0 0
        %1952 = vmatpush2.bf16.xpose.msra.mxu0 %v1909
        %1953 = vmatprep.subr.bf16.mxu0 0
        %1954 = vmatpush2.bf16.xpose.msra.mxu0 %v1908
        %1955 = vmatprep.subr.bf16.mxu0 0
        %1956 = vmatpush2.bf16.xpose.msra.mxu0 %v1907
        %1957 = vmatprep.subr.bf16.mxu0 0
        %1958 = vmatpush2.bf16.xpose.msra.mxu0 %v1906
        %1959 = vmatprep.subr.bf16.mxu0 0
        %1960 = vmatpush2.bf16.xpose.msra.mxu0 %v1905
        %1961 = vmatprep.mubr.bf16.mxu0 0
        %1962 = vmatmul.mubr.bf16.gmra.mxu0 %v1817
        %v1963 = vpop.f32.mrf.mxu0
        %v1964 = vadd.f32 0.0, %v1963
        %v1965 = vpop.f32.mrf.mxu0
        %v1966 = vadd.f32 0.0, %v1965
        %v1967 = vpop.f32.mrf.mxu0
        %v1968 = vadd.f32 0.0, %v1967
        %v1969 = vpop.f32.mrf.mxu0
        %v1970 = vadd.f32 0.0, %v1969
        %1971 = vmatprep.mubr.bf16.mxu0 0
        %1972 = vmatmul.mubr.bf16.gmra.mxu0 %v1818
        %v1973 = vpop.f32.mrf.mxu0
        %v1974 = vadd.f32 0.0, %v1973
        %v1975 = vpop.f32.mrf.mxu0
        %v1976 = vadd.f32 0.0, %v1975
        %v1977 = vpop.f32.mrf.mxu0
        %v1978 = vadd.f32 0.0, %v1977
        %v1979 = vpop.f32.mrf.mxu0
        %v1980 = vadd.f32 0.0, %v1979
        %1981 = vmatprep.mubr.bf16.mxu0 0
        %1982 = vmatmul.mubr.bf16.gmra.mxu0 %v1819
        %v1983 = vpop.f32.mrf.mxu0
        %v1984 = vadd.f32 0.0, %v1983
        %v1985 = vpop.f32.mrf.mxu0
        %v1986 = vadd.f32 0.0, %v1985
        %v1987 = vpop.f32.mrf.mxu0
        %v1988 = vadd.f32 0.0, %v1987
        %v1989 = vpop.f32.mrf.mxu0
        %v1990 = vadd.f32 0.0, %v1989
        %1991 = vmatprep.mubr.bf16.mxu0 0
        %1992 = vmatmul.mubr.bf16.gmra.mxu0 %v1820
        %v1993 = vpop.f32.mrf.mxu0
        %v1994 = vadd.f32 0.0, %v1993
        %v1995 = vpop.f32.mrf.mxu0
        %v1996 = vadd.f32 0.0, %v1995
        %v1997 = vpop.f32.mrf.mxu0
        %v1998 = vadd.f32 0.0, %v1997
        %v1999 = vpop.f32.mrf.mxu0
        %v2000 = vadd.f32 0.0, %v1999
        %2001 = vmatprep.mubr.bf16.mxu0 0
        %2002 = vmatmul.mubr.bf16.gmra.mxu0 %v1821
        %v2003 = vpop.f32.mrf.mxu0
        %v2004 = vadd.f32 0.0, %v2003
        %v2005 = vpop.f32.mrf.mxu0
        %v2006 = vadd.f32 0.0, %v2005
        %v2007 = vpop.f32.mrf.mxu0
        %v2008 = vadd.f32 0.0, %v2007
        %v2009 = vpop.f32.mrf.mxu0
        %v2010 = vadd.f32 0.0, %v2009
        %2011 = vmatprep.mubr.bf16.mxu0 0
        %2012 = vmatmul.mubr.bf16.gmra.mxu0 %v1822
        %v2013 = vpop.f32.mrf.mxu0
        %v2014 = vadd.f32 0.0, %v2013
        %v2015 = vpop.f32.mrf.mxu0
        %v2016 = vadd.f32 0.0, %v2015
        %v2017 = vpop.f32.mrf.mxu0
        %v2018 = vadd.f32 0.0, %v2017
        %v2019 = vpop.f32.mrf.mxu0
        %v2020 = vadd.f32 0.0, %v2019
        %2021 = vmatprep.mubr.bf16.mxu0 0
        %2022 = vmatmul.mubr.bf16.gmra.mxu0 %v1823
        %v2023 = vpop.f32.mrf.mxu0
        %v2024 = vadd.f32 0.0, %v2023
        %v2025 = vpop.f32.mrf.mxu0
        %v2026 = vadd.f32 0.0, %v2025
        %v2027 = vpop.f32.mrf.mxu0
        %v2028 = vadd.f32 0.0, %v2027
        %v2029 = vpop.f32.mrf.mxu0
        %v2030 = vadd.f32 0.0, %v2029
        %2031 = vmatprep.mubr.bf16.mxu0 0
        %2032 = vmatmul.mubr.bf16.gmra.mxu0 %v1824
        %v2033 = vpop.f32.mrf.mxu0
        %v2034 = vadd.f32 0.0, %v2033
        %v2035 = vpop.f32.mrf.mxu0
        %v2036 = vadd.f32 0.0, %v2035
        %v2037 = vpop.f32.mrf.mxu0
        %v2038 = vadd.f32 0.0, %v2037
        %v2039 = vpop.f32.mrf.mxu0
        %v2040 = vadd.f32 0.0, %v2039
        %2041 = vdwg.mxu0
        %v2042 = vmax.f32 %v1964, %v1966
        %2043 = vmax.xlane.f32.xlu0 %v2042
        %v2044 = vpop.xlane.xlu0 %2043
        %v2045 = vmax.f32 %v1968, %v1970
        %2046 = vmax.xlane.f32.xlu0 %v2045
        %v2047 = vpop.xlane.xlu0 %2046
        %v2048 = vmax.f32 %v1974, %v1976
        %2049 = vmax.xlane.f32.xlu0 %v2048
        %v2050 = vpop.xlane.xlu0 %2049
        %v2051 = vmax.f32 %v1978, %v1980
        %2052 = vmax.xlane.f32.xlu0 %v2051
        %v2053 = vpop.xlane.xlu0 %2052
        %v2054 = vmax.f32 %v1984, %v1986
        %2055 = vmax.xlane.f32.xlu0 %v2054
        %v2056 = vpop.xlane.xlu0 %2055
        %v2057 = vmax.f32 %v1988, %v1990
        %2058 = vmax.xlane.f32.xlu0 %v2057
        %v2059 = vpop.xlane.xlu0 %2058
        %v2060 = vmax.f32 %v1994, %v1996
        %2061 = vmax.xlane.f32.xlu0 %v2060
        %v2062 = vpop.xlane.xlu0 %2061
        %v2063 = vmax.f32 %v1998, %v2000
        %2064 = vmax.xlane.f32.xlu0 %v2063
        %v2065 = vpop.xlane.xlu0 %2064
        %v2066 = vmax.f32 %v2004, %v2006
        %2067 = vmax.xlane.f32.xlu0 %v2066
        %v2068 = vpop.xlane.xlu0 %2067
        %v2069 = vmax.f32 %v2008, %v2010
        %2070 = vmax.xlane.f32.xlu0 %v2069
        %v2071 = vpop.xlane.xlu0 %2070
        %v2072 = vmax.f32 %v2014, %v2016
        %2073 = vmax.xlane.f32.xlu0 %v2072
        %v2074 = vpop.xlane.xlu0 %2073
        %v2075 = vmax.f32 %v2018, %v2020
        %2076 = vmax.xlane.f32.xlu0 %v2075
        %v2077 = vpop.xlane.xlu0 %2076
        %v2078 = vmax.f32 %v2024, %v2026
        %2079 = vmax.xlane.f32.xlu0 %v2078
        %v2080 = vpop.xlane.xlu0 %2079
        %v2081 = vmax.f32 %v2028, %v2030
        %2082 = vmax.xlane.f32.xlu0 %v2081
        %v2083 = vpop.xlane.xlu0 %2082
        %v2084 = vmax.f32 %v2034, %v2036
        %2085 = vmax.xlane.f32.xlu0 %v2084
        %v2086 = vpop.xlane.xlu0 %2085
        %v2087 = vmax.f32 %v2038, %v2040
        %2088 = vmax.xlane.f32.xlu0 %v2087
        %v2089 = vpop.xlane.xlu0 %2088
        %v2090 = vsub.f32 %v1964, %v2044
        %v2091 = vsub.f32 %v1966, %v2044
        %v2092 = vsub.f32 %v1968, %v2047
        %v2093 = vsub.f32 %v1970, %v2047
        %v2094 = vsub.f32 %v1974, %v2050
        %v2095 = vsub.f32 %v1976, %v2050
        %v2096 = vsub.f32 %v1978, %v2053
        %v2097 = vsub.f32 %v1980, %v2053
        %v2098 = vsub.f32 %v1984, %v2056
        %v2099 = vsub.f32 %v1986, %v2056
        %v2100 = vsub.f32 %v1988, %v2059
        %v2101 = vsub.f32 %v1990, %v2059
        %v2102 = vsub.f32 %v1994, %v2062
        %v2103 = vsub.f32 %v1996, %v2062
        %v2104 = vsub.f32 %v1998, %v2065
        %v2105 = vsub.f32 %v2000, %v2065
        %v2106 = vsub.f32 %v2004, %v2068
        %v2107 = vsub.f32 %v2006, %v2068
        %v2108 = vsub.f32 %v2008, %v2071
        %v2109 = vsub.f32 %v2010, %v2071
        %v2110 = vsub.f32 %v2014, %v2074
        %v2111 = vsub.f32 %v2016, %v2074
        %v2112 = vsub.f32 %v2018, %v2077
        %v2113 = vsub.f32 %v2020, %v2077
        %v2114 = vsub.f32 %v2024, %v2080
        %v2115 = vsub.f32 %v2026, %v2080
        %v2116 = vsub.f32 %v2028, %v2083
        %v2117 = vsub.f32 %v2030, %v2083
        %v2118 = vsub.f32 %v2034, %v2086
        %v2119 = vsub.f32 %v2036, %v2086
        %v2120 = vsub.f32 %v2038, %v2089
        %v2121 = vsub.f32 %v2040, %v2089
        %v2122 = vmul.f32 %v2090, 1.442695
        %v2123 = vpow.pop %v2122
        %v2124 = vmul.f32 %v2091, 1.442695
        %v2125 = vpow.pop %v2124
        %v2126 = vmul.f32 %v2092, 1.442695
        %v2127 = vpow.pop %v2126
        %v2128 = vmul.f32 %v2093, 1.442695
        %v2129 = vpow.pop %v2128
        %v2130 = vmul.f32 %v2094, 1.442695
        %v2131 = vpow.pop %v2130
        %v2132 = vmul.f32 %v2095, 1.442695
        %v2133 = vpow.pop %v2132
        %v2134 = vmul.f32 %v2096, 1.442695
        %v2135 = vpow.pop %v2134
        %v2136 = vmul.f32 %v2097, 1.442695
        %v2137 = vpow.pop %v2136
        %v2138 = vmul.f32 %v2098, 1.442695
        %v2139 = vpow.pop %v2138
        %v2140 = vmul.f32 %v2099, 1.442695
        %v2141 = vpow.pop %v2140
        %v2142 = vmul.f32 %v2100, 1.442695
        %v2143 = vpow.pop %v2142
        %v2144 = vmul.f32 %v2101, 1.442695
        %v2145 = vpow.pop %v2144
        %v2146 = vmul.f32 %v2102, 1.442695
        %v2147 = vpow.pop %v2146
        %v2148 = vmul.f32 %v2103, 1.442695
        %v2149 = vpow.pop %v2148
        %v2150 = vmul.f32 %v2104, 1.442695
        %v2151 = vpow.pop %v2150
        %v2152 = vmul.f32 %v2105, 1.442695
        %v2153 = vpow.pop %v2152
        %v2154 = vmul.f32 %v2106, 1.442695
        %v2155 = vpow.pop %v2154
        %v2156 = vmul.f32 %v2107, 1.442695
        %v2157 = vpow.pop %v2156
        %v2158 = vmul.f32 %v2108, 1.442695
        %v2159 = vpow.pop %v2158
        %v2160 = vmul.f32 %v2109, 1.442695
        %v2161 = vpow.pop %v2160
        %v2162 = vmul.f32 %v2110, 1.442695
        %v2163 = vpow.pop %v2162
        %v2164 = vmul.f32 %v2111, 1.442695
        %v2165 = vpow.pop %v2164
        %v2166 = vmul.f32 %v2112, 1.442695
        %v2167 = vpow.pop %v2166
        %v2168 = vmul.f32 %v2113, 1.442695
        %v2169 = vpow.pop %v2168
        %v2170 = vmul.f32 %v2114, 1.442695
        %v2171 = vpow.pop %v2170
        %v2172 = vmul.f32 %v2115, 1.442695
        %v2173 = vpow.pop %v2172
        %v2174 = vmul.f32 %v2116, 1.442695
        %v2175 = vpow.pop %v2174
        %v2176 = vmul.f32 %v2117, 1.442695
        %v2177 = vpow.pop %v2176
        %v2178 = vmul.f32 %v2118, 1.442695
        %v2179 = vpow.pop %v2178
        %v2180 = vmul.f32 %v2119, 1.442695
        %v2181 = vpow.pop %v2180
        %v2182 = vmul.f32 %v2120, 1.442695
        %v2183 = vpow.pop %v2182
        %v2184 = vmul.f32 %v2121, 1.442695
        %v2185 = vpow.pop %v2184
        %v2186 = vadd.f32 %v2123, %v2125
        %2187 = vadd.xlane.f32.xlu0 %v2186
        %v2188 = vpop.xlane.xlu0 %2187
        %v2189 = vadd.f32 %v2127, %v2129
        %2190 = vadd.xlane.f32.xlu0 %v2189
        %v2191 = vpop.xlane.xlu0 %2190
        %v2192 = vadd.f32 %v2131, %v2133
        %2193 = vadd.xlane.f32.xlu0 %v2192
        %v2194 = vpop.xlane.xlu0 %2193
        %v2195 = vadd.f32 %v2135, %v2137
        %2196 = vadd.xlane.f32.xlu0 %v2195
        %v2197 = vpop.xlane.xlu0 %2196
        %v2198 = vadd.f32 %v2139, %v2141
        %2199 = vadd.xlane.f32.xlu0 %v2198
        %v2200 = vpop.xlane.xlu0 %2199
        %v2201 = vadd.f32 %v2143, %v2145
        %2202 = vadd.xlane.f32.xlu0 %v2201
        %v2203 = vpop.xlane.xlu0 %2202
        %v2204 = vadd.f32 %v2147, %v2149
        %2205 = vadd.xlane.f32.xlu0 %v2204
        %v2206 = vpop.xlane.xlu0 %2205
        %v2207 = vadd.f32 %v2151, %v2153
        %2208 = vadd.xlane.f32.xlu0 %v2207
        %v2209 = vpop.xlane.xlu0 %2208
        %v2210 = vadd.f32 %v2155, %v2157
        %2211 = vadd.xlane.f32.xlu0 %v2210
        %v2212 = vpop.xlane.xlu0 %2211
        %v2213 = vadd.f32 %v2159, %v2161
        %2214 = vadd.xlane.f32.xlu0 %v2213
        %v2215 = vpop.xlane.xlu0 %2214
        %v2216 = vadd.f32 %v2163, %v2165
        %2217 = vadd.xlane.f32.xlu0 %v2216
        %v2218 = vpop.xlane.xlu0 %2217
        %v2219 = vadd.f32 %v2167, %v2169
        %2220 = vadd.xlane.f32.xlu0 %v2219
        %v2221 = vpop.xlane.xlu0 %2220
        %v2222 = vadd.f32 %v2171, %v2173
        %2223 = vadd.xlane.f32.xlu0 %v2222
        %v2224 = vpop.xlane.xlu0 %2223
        %v2225 = vadd.f32 %v2175, %v2177
        %2226 = vadd.xlane.f32.xlu0 %v2225
        %v2227 = vpop.xlane.xlu0 %2226
        %v2228 = vadd.f32 %v2179, %v2181
        %2229 = vadd.xlane.f32.xlu0 %v2228
        %v2230 = vpop.xlane.xlu0 %2229
        %v2231 = vadd.f32 %v2183, %v2185
        %2232 = vadd.xlane.f32.xlu0 %v2231
        %v2233 = vpop.xlane.xlu0 %2232
        %v2234 = vpack.c.bf16 %v2127, %v2123
        %v2235 = vpack.c.bf16 %v2129, %v2125
        %v2236 = vpack.c.bf16 %v2135, %v2131
        %v2237 = vpack.c.bf16 %v2137, %v2133
        %v2238 = vpack.c.bf16 %v2143, %v2139
        %v2239 = vpack.c.bf16 %v2145, %v2141
        %v2240 = vpack.c.bf16 %v2151, %v2147
        %v2241 = vpack.c.bf16 %v2153, %v2149
        %v2242 = vpack.c.bf16 %v2159, %v2155
        %v2243 = vpack.c.bf16 %v2161, %v2157
        %v2244 = vpack.c.bf16 %v2167, %v2163
        %v2245 = vpack.c.bf16 %v2169, %v2165
        %v2246 = vpack.c.bf16 %v2175, %v2171
        %v2247 = vpack.c.bf16 %v2177, %v2173
        %v2248 = vpack.c.bf16 %v2183, %v2179
        %v2249 = vpack.c.bf16 %v2185, %v2181
        %v2282 = vunpack.c.l.b16 %v1753
        %v2283 = vunpack.c.l.b16 %v1754
        %v2284 = vunpack.c.l.b16 %v1755
        %v2285 = vunpack.c.l.b16 %v1756
        %v2286 = vunpack.c.l.b16 %v1757
        %v2287 = vunpack.c.l.b16 %v1758
        %v2288 = vunpack.c.l.b16 %v1759
        %v2289 = vunpack.c.l.b16 %v1760
        %v2290 = vunpack.c.l.b16 %v1761
        %v2291 = vunpack.c.l.b16 %v1762
        %v2292 = vunpack.c.l.b16 %v1763
        %v2293 = vunpack.c.l.b16 %v1764
        %v2294 = vunpack.c.l.b16 %v1765
        %v2295 = vunpack.c.l.b16 %v1766
        %v2296 = vunpack.c.l.b16 %v1767
        %v2297 = vunpack.c.l.b16 %v1768
        %v2298 = vunpack.c.l.b16 %v1769
        %v2299 = vunpack.c.l.b16 %v1770
        %v2300 = vunpack.c.l.b16 %v1771
        %v2301 = vunpack.c.l.b16 %v1772
        %v2302 = vunpack.c.l.b16 %v1773
        %v2303 = vunpack.c.l.b16 %v1774
        %v2304 = vunpack.c.l.b16 %v1775
        %v2305 = vunpack.c.l.b16 %v1776
        %v2306 = vunpack.c.l.b16 %v1777
        %v2307 = vunpack.c.l.b16 %v1778
        %v2308 = vunpack.c.l.b16 %v1779
        %v2309 = vunpack.c.l.b16 %v1780
        %v2310 = vunpack.c.l.b16 %v1781
        %v2311 = vunpack.c.l.b16 %v1782
        %v2312 = vunpack.c.l.b16 %v1783
        %v2313 = vunpack.c.l.b16 %v1784
        %v2314 = vpack.c.b16 %v2283, %v2282
        %v2315 = vpack.c.b16 %v2285, %v2284
        %v2316 = vpack.c.b16 %v2287, %v2286
        %v2317 = vpack.c.b16 %v2289, %v2288
        %v2318 = vpack.c.b16 %v2291, %v2290
        %v2319 = vpack.c.b16 %v2293, %v2292
        %v2320 = vpack.c.b16 %v2295, %v2294
        %v2321 = vpack.c.b16 %v2297, %v2296
        %v2322 = vpack.c.b16 %v2299, %v2298
        %v2323 = vpack.c.b16 %v2301, %v2300
        %v2324 = vpack.c.b16 %v2303, %v2302
        %v2325 = vpack.c.b16 %v2305, %v2304
        %v2326 = vpack.c.b16 %v2307, %v2306
        %v2327 = vpack.c.b16 %v2309, %v2308
        %v2328 = vpack.c.b16 %v2311, %v2310
        %v2329 = vpack.c.b16 %v2313, %v2312
        %2346 = vmatprep.subr.bf16.mxu0 0
        %2347 = vmatpush1.bf16.msra.mxu0 %v2321
        %2348 = vmatprep.subr.bf16.mxu0 0
        %2349 = vmatpush1.bf16.msra.mxu0 %v2320
        %2350 = vmatprep.subr.bf16.mxu0 0
        %2351 = vmatpush1.bf16.msra.mxu0 %v2319
        %2352 = vmatprep.subr.bf16.mxu0 0
        %2353 = vmatpush1.bf16.msra.mxu0 %v2318
        %2354 = vmatprep.subr.bf16.mxu0 0
        %2355 = vmatpush1.bf16.msra.mxu0 %v2317
        %2356 = vmatprep.subr.bf16.mxu0 0
        %2357 = vmatpush1.bf16.msra.mxu0 %v2316
        %2358 = vmatprep.subr.bf16.mxu0 0
        %2359 = vmatpush1.bf16.msra.mxu0 %v2315
        %2360 = vmatprep.subr.bf16.mxu0 0
        %2361 = vmatpush1.bf16.msra.mxu0 %v2314
        %2362 = vmatprep.subr.bf16.mxu0 0
        %2363 = vmatpush2.bf16.msra.mxu0 %v2329
        %2364 = vmatprep.subr.bf16.mxu0 0
        %2365 = vmatpush2.bf16.msra.mxu0 %v2328
        %2366 = vmatprep.subr.bf16.mxu0 0
        %2367 = vmatpush2.bf16.msra.mxu0 %v2327
        %2368 = vmatprep.subr.bf16.mxu0 0
        %2369 = vmatpush2.bf16.msra.mxu0 %v2326
        %2370 = vmatprep.subr.bf16.mxu0 0
        %2371 = vmatpush2.bf16.msra.mxu0 %v2325
        %2372 = vmatprep.subr.bf16.mxu0 0
        %2373 = vmatpush2.bf16.msra.mxu0 %v2324
        %2374 = vmatprep.subr.bf16.mxu0 0
        %2375 = vmatpush2.bf16.msra.mxu0 %v2323
        %2376 = vmatprep.subr.bf16.mxu0 0
        %2377 = vmatpush2.bf16.msra.mxu0 %v2322
        %2378 = vmatprep.mubr.bf16.mxu0 %v2235
        %2379 = vmatmul.mubr.bf16.gmra.mxu0 %v2234
        %v2380 = vpop.f32.mrf.mxu0
        %v2381 = vadd.f32 0.0, %v2380
        %v2382 = vpop.f32.mrf.mxu0
        %v2383 = vpop.f32.mrf.mxu0
        %v2384 = vadd.f32 0.0, %v2383
        %v2385 = vpop.f32.mrf.mxu0
        %2386 = vmatprep.mubr.bf16.mxu0 %v2237
        %2387 = vmatmul.mubr.bf16.gmra.mxu0 %v2236
        %v2388 = vpop.f32.mrf.mxu0
        %v2389 = vadd.f32 0.0, %v2388
        %v2390 = vpop.f32.mrf.mxu0
        %v2391 = vpop.f32.mrf.mxu0
        %v2392 = vadd.f32 0.0, %v2391
        %v2393 = vpop.f32.mrf.mxu0
        %2394 = vmatprep.mubr.bf16.mxu0 %v2239
        %2395 = vmatmul.mubr.bf16.gmra.mxu0 %v2238
        %v2396 = vpop.f32.mrf.mxu0
        %v2397 = vadd.f32 0.0, %v2396
        %v2398 = vpop.f32.mrf.mxu0
        %v2399 = vpop.f32.mrf.mxu0
        %v2400 = vadd.f32 0.0, %v2399
        %v2401 = vpop.f32.mrf.mxu0
        %2402 = vmatprep.mubr.bf16.mxu0 %v2241
        %2403 = vmatmul.mubr.bf16.gmra.mxu0 %v2240
        %v2404 = vpop.f32.mrf.mxu0
        %v2405 = vadd.f32 0.0, %v2404
        %v2406 = vpop.f32.mrf.mxu0
        %v2407 = vpop.f32.mrf.mxu0
        %v2408 = vadd.f32 0.0, %v2407
        %v2409 = vpop.f32.mrf.mxu0
        %2410 = vmatprep.mubr.bf16.mxu0 %v2243
        %2411 = vmatmul.mubr.bf16.gmra.mxu0 %v2242
        %v2412 = vpop.f32.mrf.mxu0
        %v2413 = vadd.f32 0.0, %v2412
        %v2414 = vpop.f32.mrf.mxu0
        %v2415 = vpop.f32.mrf.mxu0
        %v2416 = vadd.f32 0.0, %v2415
        %v2417 = vpop.f32.mrf.mxu0
        %2418 = vmatprep.mubr.bf16.mxu0 %v2245
        %2419 = vmatmul.mubr.bf16.gmra.mxu0 %v2244
        %v2420 = vpop.f32.mrf.mxu0
        %v2421 = vadd.f32 0.0, %v2420
        %v2422 = vpop.f32.mrf.mxu0
        %v2423 = vpop.f32.mrf.mxu0
        %v2424 = vadd.f32 0.0, %v2423
        %v2425 = vpop.f32.mrf.mxu0
        %2426 = vmatprep.mubr.bf16.mxu0 %v2247
        %2427 = vmatmul.mubr.bf16.gmra.mxu0 %v2246
        %v2428 = vpop.f32.mrf.mxu0
        %v2429 = vadd.f32 0.0, %v2428
        %v2430 = vpop.f32.mrf.mxu0
        %v2431 = vpop.f32.mrf.mxu0
        %v2432 = vadd.f32 0.0, %v2431
        %v2433 = vpop.f32.mrf.mxu0
        %2434 = vmatprep.mubr.bf16.mxu0 %v2249
        %2435 = vmatmul.mubr.bf16.gmra.mxu0 %v2248
        %v2436 = vpop.f32.mrf.mxu0
        %v2437 = vadd.f32 0.0, %v2436
        %v2438 = vpop.f32.mrf.mxu0
        %v2439 = vpop.f32.mrf.mxu0
        %v2440 = vadd.f32 0.0, %v2439
        %v2441 = vpop.f32.mrf.mxu0
        %2442 = vdwg.mxu0
        %v2443 = vrcp.pop %v2188
        %v2444 = vrcp.pop %v2191
        %v2445 = vrcp.pop %v2194
        %v2446 = vrcp.pop %v2197
        %v2447 = vrcp.pop %v2200
        %v2448 = vrcp.pop %v2203
        %v2449 = vrcp.pop %v2206
        %v2450 = vrcp.pop %v2209
        %v2451 = vrcp.pop %v2212
        %v2452 = vrcp.pop %v2215
        %v2453 = vrcp.pop %v2218
        %v2454 = vrcp.pop %v2221
        %v2455 = vrcp.pop %v2224
        %v2456 = vrcp.pop %v2227
        %v2457 = vrcp.pop %v2230
        %v2458 = vrcp.pop %v2233
        %v2459 = vmul.f32 %v2381, %v2443
        %v2460 = vmul.f32 %v2384, %v2444
        %v2461 = vmul.f32 %v2389, %v2445
        %v2462 = vmul.f32 %v2392, %v2446
        %v2463 = vmul.f32 %v2397, %v2447
        %v2464 = vmul.f32 %v2400, %v2448
        %v2465 = vmul.f32 %v2405, %v2449
        %v2466 = vmul.f32 %v2408, %v2450
        %v2467 = vmul.f32 %v2413, %v2451
        %v2468 = vmul.f32 %v2416, %v2452
        %v2469 = vmul.f32 %v2421, %v2453
        %v2470 = vmul.f32 %v2424, %v2454
        %v2471 = vmul.f32 %v2429, %v2455
        %v2472 = vmul.f32 %v2432, %v2456
        %v2473 = vmul.f32 %v2437, %v2457
        %v2474 = vmul.f32 %v2440, %v2458
        %v2475 = vpack.c.bf16 %v2460, %v2459
        %v2476 = vpack.c.bf16 %v2462, %v2461
        %v2477 = vpack.c.bf16 %v2464, %v2463
        %v2478 = vpack.c.bf16 %v2466, %v2465
        %v2479 = vpack.c.bf16 %v2468, %v2467
        %v2480 = vpack.c.bf16 %v2470, %v2469
        %v2481 = vpack.c.bf16 %v2472, %v2471
        %v2482 = vpack.c.bf16 %v2474, %v2473
        %v2491 = vunpack.c.l.b16 %v2475
        %v2492 = vunpack.c.h.b16 %v2475
        %v2493 = vunpack.c.l.b16 %v2476
        %v2494 = vunpack.c.h.b16 %v2476
        %v2495 = vunpack.c.l.b16 %v2477
        %v2496 = vunpack.c.h.b16 %v2477
        %v2497 = vunpack.c.l.b16 %v2478
        %v2498 = vunpack.c.h.b16 %v2478
        %v2499 = vunpack.c.l.b16 %v2479
        %v2500 = vunpack.c.h.b16 %v2479
        %v2501 = vunpack.c.l.b16 %v2480
        %v2502 = vunpack.c.h.b16 %v2480
        %v2503 = vunpack.c.l.b16 %v2481
        %v2504 = vunpack.c.h.b16 %v2481
        %v2505 = vunpack.c.l.b16 %v2482
        %v2506 = vunpack.c.h.b16 %v2482
        %v2507 = vpack.c.b16 %v2491, %v2491
        %v2508 = vpack.c.b16 %v2492, %v2492
        %v2509 = vpack.c.b16 %v2493, %v2493
        %v2510 = vpack.c.b16 %v2494, %v2494
        %v2511 = vpack.c.b16 %v2495, %v2495
        %v2512 = vpack.c.b16 %v2496, %v2496
        %v2513 = vpack.c.b16 %v2497, %v2497
        %v2514 = vpack.c.b16 %v2498, %v2498
        %v2515 = vpack.c.b16 %v2499, %v2499
        %v2516 = vpack.c.b16 %v2500, %v2500
        %v2517 = vpack.c.b16 %v2501, %v2501
        %v2518 = vpack.c.b16 %v2502, %v2502
        %v2519 = vpack.c.b16 %v2503, %v2503
        %v2520 = vpack.c.b16 %v2504, %v2504
        %v2521 = vpack.c.b16 %v2505, %v2505
        %v2522 = vpack.c.b16 %v2506, %v2506
        %2539 = vst [vmem:[#allocation3] sm:$0xf] %v2507
        %2540 = vst [vmem:[#allocation3 + $0x8] sm:$0xf] %v2508
        %2541 = vst [vmem:[#allocation3 + $0x10] sm:$0xf] %v2509
        %2542 = vst [vmem:[#allocation3 + $0x18] sm:$0xf] %v2510
        %2543 = vst [vmem:[#allocation3 + $0x20] sm:$0xf] %v2511
        %2544 = vst [vmem:[#allocation3 + $0x28] sm:$0xf] %v2512
        %2545 = vst [vmem:[#allocation3 + $0x30] sm:$0xf] %v2513
        %2546 = vst [vmem:[#allocation3 + $0x38] sm:$0xf] %v2514
        %2547 = vst [vmem:[#allocation3 + $0x40] sm:$0xf] %v2515
        %2548 = vst [vmem:[#allocation3 + $0x48] sm:$0xf] %v2516
        %2549 = vst [vmem:[#allocation3 + $0x50] sm:$0xf] %v2517
        %2550 = vst [vmem:[#allocation3 + $0x58] sm:$0xf] %v2518
        %2551 = vst [vmem:[#allocation3 + $0x60] sm:$0xf] %v2519
        %2552 = vst [vmem:[#allocation3 + $0x68] sm:$0xf] %v2520
        %2553 = vst [vmem:[#allocation3 + $0x70] sm:$0xf] %v2521
        %2554 = vst [vmem:[#allocation3 + $0x78] sm:$0xf] %v2522
        %v2555 = vld [vmem:[%s1704 + $0x4] sm:$0xf]
        %v2556 = vld [vmem:[%s1704 + $0x1c] sm:$0xf]
        %v2557 = vld [vmem:[%s1704 + $0x34] sm:$0xf]
        %v2558 = vld [vmem:[%s1704 + $0x4c] sm:$0xf]
        %v2559 = vld [vmem:[%s1704 + $0x64] sm:$0xf]
        %v2560 = vld [vmem:[%s1704 + $0x7c] sm:$0xf]
        %v2561 = vld [vmem:[%s1704 + $0x94] sm:$0xf]
        %v2562 = vld [vmem:[%s1704 + $0xac] sm:$0xf]
        %v2563 = vld [vmem:[%s1704 + $0xc4] sm:$0xf]
        %v2564 = vld [vmem:[%s1704 + $0xdc] sm:$0xf]
        %v2565 = vld [vmem:[%s1704 + $0xf4] sm:$0xf]
        %v2566 = vld [vmem:[%s1704 + $0x10c] sm:$0xf]
        %v2567 = vld [vmem:[%s1704 + $0x124] sm:$0xf]
        %v2568 = vld [vmem:[%s1704 + $0x13c] sm:$0xf]
        %v2569 = vld [vmem:[%s1704 + $0x154] sm:$0xf]
        %v2570 = vld [vmem:[%s1704 + $0x16c] sm:$0xf]
        %v2571 = vld [vmem:[#allocation2 + $0xc] sm:$0xf]
        %v2572 = vld [vmem:[#allocation2 + $0x24] sm:$0xf]
        %v2573 = vld [vmem:[#allocation2 + $0x3c] sm:$0xf]
        %v2574 = vld [vmem:[#allocation2 + $0x54] sm:$0xf]
        %v2575 = vld [vmem:[#allocation2 + $0x6c] sm:$0xf]
        %v2576 = vld [vmem:[#allocation2 + $0x84] sm:$0xf]
        %v2577 = vld [vmem:[#allocation2 + $0x9c] sm:$0xf]
        %v2578 = vld [vmem:[#allocation2 + $0xb4] sm:$0xf]
        %v2579 = vld [vmem:[#allocation2 + $0xcc] sm:$0xf]
        %v2580 = vld [vmem:[#allocation2 + $0xe4] sm:$0xf]
        %v2581 = vld [vmem:[#allocation2 + $0xfc] sm:$0xf]
        %v2582 = vld [vmem:[#allocation2 + $0x114] sm:$0xf]
        %v2583 = vld [vmem:[#allocation2 + $0x12c] sm:$0xf]
        %v2584 = vld [vmem:[#allocation2 + $0x144] sm:$0xf]
        %v2585 = vld [vmem:[#allocation2 + $0x15c] sm:$0xf]
        %v2586 = vld [vmem:[#allocation2 + $0x174] sm:$0xf]
        %v2587 = vld [vmem:[#allocation2 + $0x18c] sm:$0xf]
        %v2588 = vld [vmem:[#allocation2 + $0x1a4] sm:$0xf]
        %v2589 = vld [vmem:[#allocation2 + $0x1bc] sm:$0xf]
        %v2590 = vld [vmem:[#allocation2 + $0x1d4] sm:$0xf]
        %v2591 = vld [vmem:[#allocation2 + $0x1ec] sm:$0xf]
        %v2592 = vld [vmem:[#allocation2 + $0x204] sm:$0xf]
        %v2593 = vld [vmem:[#allocation2 + $0x21c] sm:$0xf]
        %v2594 = vld [vmem:[#allocation2 + $0x234] sm:$0xf]
        %v2595 = vld [vmem:[#allocation2 + $0x24c] sm:$0xf]
        %v2596 = vld [vmem:[#allocation2 + $0x264] sm:$0xf]
        %v2597 = vld [vmem:[#allocation2 + $0x27c] sm:$0xf]
        %v2598 = vld [vmem:[#allocation2 + $0x294] sm:$0xf]
        %v2599 = vld [vmem:[#allocation2 + $0x2ac] sm:$0xf]
        %v2600 = vld [vmem:[#allocation2 + $0x2c4] sm:$0xf]
        %v2601 = vld [vmem:[#allocation2 + $0x2dc] sm:$0xf]
        %v2602 = vld [vmem:[#allocation2 + $0x2f4] sm:$0xf]
        %v2603 = vld [vmem:[#allocation2 + $0x14] sm:$0xf]
        %v2604 = vld [vmem:[#allocation2 + $0x2c] sm:$0xf]
        %v2605 = vld [vmem:[#allocation2 + $0x44] sm:$0xf]
        %v2606 = vld [vmem:[#allocation2 + $0x5c] sm:$0xf]
        %v2607 = vld [vmem:[#allocation2 + $0x74] sm:$0xf]
        %v2608 = vld [vmem:[#allocation2 + $0x8c] sm:$0xf]
        %v2609 = vld [vmem:[#allocation2 + $0xa4] sm:$0xf]
        %v2610 = vld [vmem:[#allocation2 + $0xbc] sm:$0xf]
        %v2611 = vld [vmem:[#allocation2 + $0xd4] sm:$0xf]
        %v2612 = vld [vmem:[#allocation2 + $0xec] sm:$0xf]
        %v2613 = vld [vmem:[#allocation2 + $0x104] sm:$0xf]
        %v2614 = vld [vmem:[#allocation2 + $0x11c] sm:$0xf]
        %v2615 = vld [vmem:[#allocation2 + $0x134] sm:$0xf]
        %v2616 = vld [vmem:[#allocation2 + $0x14c] sm:$0xf]
        %v2617 = vld [vmem:[#allocation2 + $0x164] sm:$0xf]
        %v2618 = vld [vmem:[#allocation2 + $0x17c] sm:$0xf]
        %v2619 = vld [vmem:[#allocation2 + $0x194] sm:$0xf]
        %v2620 = vld [vmem:[#allocation2 + $0x1ac] sm:$0xf]
        %v2621 = vld [vmem:[#allocation2 + $0x1c4] sm:$0xf]
        %v2622 = vld [vmem:[#allocation2 + $0x1dc] sm:$0xf]
        %v2623 = vld [vmem:[#allocation2 + $0x1f4] sm:$0xf]
        %v2624 = vld [vmem:[#allocation2 + $0x20c] sm:$0xf]
        %v2625 = vld [vmem:[#allocation2 + $0x224] sm:$0xf]
        %v2626 = vld [vmem:[#allocation2 + $0x23c] sm:$0xf]
        %v2627 = vld [vmem:[#allocation2 + $0x254] sm:$0xf]
        %v2628 = vld [vmem:[#allocation2 + $0x26c] sm:$0xf]
        %v2629 = vld [vmem:[#allocation2 + $0x284] sm:$0xf]
        %v2630 = vld [vmem:[#allocation2 + $0x29c] sm:$0xf]
        %v2631 = vld [vmem:[#allocation2 + $0x2b4] sm:$0xf]
        %v2632 = vld [vmem:[#allocation2 + $0x2cc] sm:$0xf]
        %v2633 = vld [vmem:[#allocation2 + $0x2e4] sm:$0xf]
        %v2634 = vld [vmem:[#allocation2 + $0x2fc] sm:$0xf]
        %v2651 = vunpack.c.l.b16 %v2555
        %v2652 = vunpack.c.l.b16 %v2556
        %v2653 = vunpack.c.l.b16 %v2557
        %v2654 = vunpack.c.l.b16 %v2558
        %v2655 = vunpack.c.l.b16 %v2559
        %v2656 = vunpack.c.l.b16 %v2560
        %v2657 = vunpack.c.l.b16 %v2561
        %v2658 = vunpack.c.l.b16 %v2562
        %v2659 = vunpack.c.l.b16 %v2563
        %v2660 = vunpack.c.l.b16 %v2564
        %v2661 = vunpack.c.l.b16 %v2565
        %v2662 = vunpack.c.l.b16 %v2566
        %v2663 = vunpack.c.l.b16 %v2567
        %v2664 = vunpack.c.l.b16 %v2568
        %v2665 = vunpack.c.l.b16 %v2569
        %v2666 = vunpack.c.l.b16 %v2570
        %v2667 = vpack.c.b16 %v2652, %v2651
        %v2668 = vpack.c.b16 %v2654, %v2653
        %v2669 = vpack.c.b16 %v2656, %v2655
        %v2670 = vpack.c.b16 %v2658, %v2657
        %v2671 = vpack.c.b16 %v2660, %v2659
        %v2672 = vpack.c.b16 %v2662, %v2661
        %v2673 = vpack.c.b16 %v2664, %v2663
        %v2674 = vpack.c.b16 %v2666, %v2665
        %v2715 = vunpack.c.l.b16 %v2571
        %v2716 = vunpack.c.l.b16 %v2572
        %v2717 = vunpack.c.l.b16 %v2573
        %v2718 = vunpack.c.l.b16 %v2574
        %v2719 = vunpack.c.l.b16 %v2575
        %v2720 = vunpack.c.l.b16 %v2576
        %v2721 = vunpack.c.l.b16 %v2577
        %v2722 = vunpack.c.l.b16 %v2578
        %v2723 = vunpack.c.l.b16 %v2579
        %v2724 = vunpack.c.l.b16 %v2580
        %v2725 = vunpack.c.l.b16 %v2581
        %v2726 = vunpack.c.l.b16 %v2582
        %v2727 = vunpack.c.l.b16 %v2583
        %v2728 = vunpack.c.l.b16 %v2584
        %v2729 = vunpack.c.l.b16 %v2585
        %v2730 = vunpack.c.l.b16 %v2586
        %v2731 = vunpack.c.l.b16 %v2587
        %v2732 = vunpack.c.l.b16 %v2588
        %v2733 = vunpack.c.l.b16 %v2589
        %v2734 = vunpack.c.l.b16 %v2590
        %v2735 = vunpack.c.l.b16 %v2591
        %v2736 = vunpack.c.l.b16 %v2592
        %v2737 = vunpack.c.l.b16 %v2593
        %v2738 = vunpack.c.l.b16 %v2594
        %v2739 = vunpack.c.l.b16 %v2595
        %v2740 = vunpack.c.l.b16 %v2596
        %v2741 = vunpack.c.l.b16 %v2597
        %v2742 = vunpack.c.l.b16 %v2598
        %v2743 = vunpack.c.l.b16 %v2599
        %v2744 = vunpack.c.l.b16 %v2600
        %v2745 = vunpack.c.l.b16 %v2601
        %v2746 = vunpack.c.l.b16 %v2602
        %v2747 = vpack.c.b16 %v2716, %v2715
        %v2748 = vpack.c.b16 %v2718, %v2717
        %v2749 = vpack.c.b16 %v2720, %v2719
        %v2750 = vpack.c.b16 %v2722, %v2721
        %v2751 = vpack.c.b16 %v2724, %v2723
        %v2752 = vpack.c.b16 %v2726, %v2725
        %v2753 = vpack.c.b16 %v2728, %v2727
        %v2754 = vpack.c.b16 %v2730, %v2729
        %v2755 = vpack.c.b16 %v2732, %v2731
        %v2756 = vpack.c.b16 %v2734, %v2733
        %v2757 = vpack.c.b16 %v2736, %v2735
        %v2758 = vpack.c.b16 %v2738, %v2737
        %v2759 = vpack.c.b16 %v2740, %v2739
        %v2760 = vpack.c.b16 %v2742, %v2741
        %v2761 = vpack.c.b16 %v2744, %v2743
        %v2762 = vpack.c.b16 %v2746, %v2745
        %2779 = vmatprep.subr.bf16.mxu0 0
        %2780 = vmatpush1.bf16.xpose.msra.mxu0 %v2754
        %2781 = vmatprep.subr.bf16.mxu0 0
        %2782 = vmatpush1.bf16.xpose.msra.mxu0 %v2753
        %2783 = vmatprep.subr.bf16.mxu0 0
        %2784 = vmatpush1.bf16.xpose.msra.mxu0 %v2752
        %2785 = vmatprep.subr.bf16.mxu0 0
        %2786 = vmatpush1.bf16.xpose.msra.mxu0 %v2751
        %2787 = vmatprep.subr.bf16.mxu0 0
        %2788 = vmatpush1.bf16.xpose.msra.mxu0 %v2750
        %2789 = vmatprep.subr.bf16.mxu0 0
        %2790 = vmatpush1.bf16.xpose.msra.mxu0 %v2749
        %2791 = vmatprep.subr.bf16.mxu0 0
        %2792 = vmatpush1.bf16.xpose.msra.mxu0 %v2748
        %2793 = vmatprep.subr.bf16.mxu0 0
        %2794 = vmatpush1.bf16.xpose.msra.mxu0 %v2747
        %2795 = vmatprep.subr.bf16.mxu0 0
        %2796 = vmatpush2.bf16.xpose.msra.mxu0 %v2762
        %2797 = vmatprep.subr.bf16.mxu0 0
        %2798 = vmatpush2.bf16.xpose.msra.mxu0 %v2761
        %2799 = vmatprep.subr.bf16.mxu0 0
        %2800 = vmatpush2.bf16.xpose.msra.mxu0 %v2760
        %2801 = vmatprep.subr.bf16.mxu0 0
        %2802 = vmatpush2.bf16.xpose.msra.mxu0 %v2759
        %2803 = vmatprep.subr.bf16.mxu0 0
        %2804 = vmatpush2.bf16.xpose.msra.mxu0 %v2758
        %2805 = vmatprep.subr.bf16.mxu0 0
        %2806 = vmatpush2.bf16.xpose.msra.mxu0 %v2757
        %2807 = vmatprep.subr.bf16.mxu0 0
        %2808 = vmatpush2.bf16.xpose.msra.mxu0 %v2756
        %2809 = vmatprep.subr.bf16.mxu0 0
        %2810 = vmatpush2.bf16.xpose.msra.mxu0 %v2755
        %2811 = vmatprep.mubr.bf16.mxu0 0
        %2812 = vmatmul.mubr.bf16.gmra.mxu0 %v2667
        %v2813 = vpop.f32.mrf.mxu0
        %v2814 = vadd.f32 0.0, %v2813
        %v2815 = vpop.f32.mrf.mxu0
        %v2816 = vadd.f32 0.0, %v2815
        %v2817 = vpop.f32.mrf.mxu0
        %v2818 = vadd.f32 0.0, %v2817
        %v2819 = vpop.f32.mrf.mxu0
        %v2820 = vadd.f32 0.0, %v2819
        %2821 = vmatprep.mubr.bf16.mxu0 0
        %2822 = vmatmul.mubr.bf16.gmra.mxu0 %v2668
        %v2823 = vpop.f32.mrf.mxu0
        %v2824 = vadd.f32 0.0, %v2823
        %v2825 = vpop.f32.mrf.mxu0
        %v2826 = vadd.f32 0.0, %v2825
        %v2827 = vpop.f32.mrf.mxu0
        %v2828 = vadd.f32 0.0, %v2827
        %v2829 = vpop.f32.mrf.mxu0
        %v2830 = vadd.f32 0.0, %v2829
        %2831 = vmatprep.mubr.bf16.mxu0 0
        %2832 = vmatmul.mubr.bf16.gmra.mxu0 %v2669
        %v2833 = vpop.f32.mrf.mxu0
        %v2834 = vadd.f32 0.0, %v2833
        %v2835 = vpop.f32.mrf.mxu0
        %v2836 = vadd.f32 0.0, %v2835
        %v2837 = vpop.f32.mrf.mxu0
        %v2838 = vadd.f32 0.0, %v2837
        %v2839 = vpop.f32.mrf.mxu0
        %v2840 = vadd.f32 0.0, %v2839
        %2841 = vmatprep.mubr.bf16.mxu0 0
        %2842 = vmatmul.mubr.bf16.gmra.mxu0 %v2670
        %v2843 = vpop.f32.mrf.mxu0
        %v2844 = vadd.f32 0.0, %v2843
        %v2845 = vpop.f32.mrf.mxu0
        %v2846 = vadd.f32 0.0, %v2845
        %v2847 = vpop.f32.mrf.mxu0
        %v2848 = vadd.f32 0.0, %v2847
        %v2849 = vpop.f32.mrf.mxu0
        %v2850 = vadd.f32 0.0, %v2849
        %2851 = vmatprep.mubr.bf16.mxu0 0
        %2852 = vmatmul.mubr.bf16.gmra.mxu0 %v2671
        %v2853 = vpop.f32.mrf.mxu0
        %v2854 = vadd.f32 0.0, %v2853
        %v2855 = vpop.f32.mrf.mxu0
        %v2856 = vadd.f32 0.0, %v2855
        %v2857 = vpop.f32.mrf.mxu0
        %v2858 = vadd.f32 0.0, %v2857
        %v2859 = vpop.f32.mrf.mxu0
        %v2860 = vadd.f32 0.0, %v2859
        %2861 = vmatprep.mubr.bf16.mxu0 0
        %2862 = vmatmul.mubr.bf16.gmra.mxu0 %v2672
        %v2863 = vpop.f32.mrf.mxu0
        %v2864 = vadd.f32 0.0, %v2863
        %v2865 = vpop.f32.mrf.mxu0
        %v2866 = vadd.f32 0.0, %v2865
        %v2867 = vpop.f32.mrf.mxu0
        %v2868 = vadd.f32 0.0, %v2867
        %v2869 = vpop.f32.mrf.mxu0
        %v2870 = vadd.f32 0.0, %v2869
        %2871 = vmatprep.mubr.bf16.mxu0 0
        %2872 = vmatmul.mubr.bf16.gmra.mxu0 %v2673
        %v2873 = vpop.f32.mrf.mxu0
        %v2874 = vadd.f32 0.0, %v2873
        %v2875 = vpop.f32.mrf.mxu0
        %v2876 = vadd.f32 0.0, %v2875
        %v2877 = vpop.f32.mrf.mxu0
        %v2878 = vadd.f32 0.0, %v2877
        %v2879 = vpop.f32.mrf.mxu0
        %v2880 = vadd.f32 0.0, %v2879
        %2881 = vmatprep.mubr.bf16.mxu0 0
        %2882 = vmatmul.mubr.bf16.gmra.mxu0 %v2674
        %v2883 = vpop.f32.mrf.mxu0
        %v2884 = vadd.f32 0.0, %v2883
        %v2885 = vpop.f32.mrf.mxu0
        %v2886 = vadd.f32 0.0, %v2885
        %v2887 = vpop.f32.mrf.mxu0
        %v2888 = vadd.f32 0.0, %v2887
        %v2889 = vpop.f32.mrf.mxu0
        %v2890 = vadd.f32 0.0, %v2889
        %2891 = vdwg.mxu0
        %v2892 = vmax.f32 %v2814, %v2816
        %2893 = vmax.xlane.f32.xlu0 %v2892
        %v2894 = vpop.xlane.xlu0 %2893
        %v2895 = vmax.f32 %v2818, %v2820
        %2896 = vmax.xlane.f32.xlu0 %v2895
        %v2897 = vpop.xlane.xlu0 %2896
        %v2898 = vmax.f32 %v2824, %v2826
        %2899 = vmax.xlane.f32.xlu0 %v2898
        %v2900 = vpop.xlane.xlu0 %2899
        %v2901 = vmax.f32 %v2828, %v2830
        %2902 = vmax.xlane.f32.xlu0 %v2901
        %v2903 = vpop.xlane.xlu0 %2902
        %v2904 = vmax.f32 %v2834, %v2836
        %2905 = vmax.xlane.f32.xlu0 %v2904
        %v2906 = vpop.xlane.xlu0 %2905
        %v2907 = vmax.f32 %v2838, %v2840
        %2908 = vmax.xlane.f32.xlu0 %v2907
        %v2909 = vpop.xlane.xlu0 %2908
        %v2910 = vmax.f32 %v2844, %v2846
        %2911 = vmax.xlane.f32.xlu0 %v2910
        %v2912 = vpop.xlane.xlu0 %2911
        %v2913 = vmax.f32 %v2848, %v2850
        %2914 = vmax.xlane.f32.xlu0 %v2913
        %v2915 = vpop.xlane.xlu0 %2914
        %v2916 = vmax.f32 %v2854, %v2856
        %2917 = vmax.xlane.f32.xlu0 %v2916
        %v2918 = vpop.xlane.xlu0 %2917
        %v2919 = vmax.f32 %v2858, %v2860
        %2920 = vmax.xlane.f32.xlu0 %v2919
        %v2921 = vpop.xlane.xlu0 %2920
        %v2922 = vmax.f32 %v2864, %v2866
        %2923 = vmax.xlane.f32.xlu0 %v2922
        %v2924 = vpop.xlane.xlu0 %2923
        %v2925 = vmax.f32 %v2868, %v2870
        %2926 = vmax.xlane.f32.xlu0 %v2925
        %v2927 = vpop.xlane.xlu0 %2926
        %v2928 = vmax.f32 %v2874, %v2876
        %2929 = vmax.xlane.f32.xlu0 %v2928
        %v2930 = vpop.xlane.xlu0 %2929
        %v2931 = vmax.f32 %v2878, %v2880
        %2932 = vmax.xlane.f32.xlu0 %v2931
        %v2933 = vpop.xlane.xlu0 %2932
        %v2934 = vmax.f32 %v2884, %v2886
        %2935 = vmax.xlane.f32.xlu0 %v2934
        %v2936 = vpop.xlane.xlu0 %2935
        %v2937 = vmax.f32 %v2888, %v2890
        %2938 = vmax.xlane.f32.xlu0 %v2937
        %v2939 = vpop.xlane.xlu0 %2938
        %v2940 = vsub.f32 %v2814, %v2894
        %v2941 = vsub.f32 %v2816, %v2894
        %v2942 = vsub.f32 %v2818, %v2897
        %v2943 = vsub.f32 %v2820, %v2897
        %v2944 = vsub.f32 %v2824, %v2900
        %v2945 = vsub.f32 %v2826, %v2900
        %v2946 = vsub.f32 %v2828, %v2903
        %v2947 = vsub.f32 %v2830, %v2903
        %v2948 = vsub.f32 %v2834, %v2906
        %v2949 = vsub.f32 %v2836, %v2906
        %v2950 = vsub.f32 %v2838, %v2909
        %v2951 = vsub.f32 %v2840, %v2909
        %v2952 = vsub.f32 %v2844, %v2912
        %v2953 = vsub.f32 %v2846, %v2912
        %v2954 = vsub.f32 %v2848, %v2915
        %v2955 = vsub.f32 %v2850, %v2915
        %v2956 = vsub.f32 %v2854, %v2918
        %v2957 = vsub.f32 %v2856, %v2918
        %v2958 = vsub.f32 %v2858, %v2921
        %v2959 = vsub.f32 %v2860, %v2921
        %v2960 = vsub.f32 %v2864, %v2924
        %v2961 = vsub.f32 %v2866, %v2924
        %v2962 = vsub.f32 %v2868, %v2927
        %v2963 = vsub.f32 %v2870, %v2927
        %v2964 = vsub.f32 %v2874, %v2930
        %v2965 = vsub.f32 %v2876, %v2930
        %v2966 = vsub.f32 %v2878, %v2933
        %v2967 = vsub.f32 %v2880, %v2933
        %v2968 = vsub.f32 %v2884, %v2936
        %v2969 = vsub.f32 %v2886, %v2936
        %v2970 = vsub.f32 %v2888, %v2939
        %v2971 = vsub.f32 %v2890, %v2939
        %v2972 = vmul.f32 %v2940, 1.442695
        %v2973 = vpow.pop %v2972
        %v2974 = vmul.f32 %v2941, 1.442695
        %v2975 = vpow.pop %v2974
        %v2976 = vmul.f32 %v2942, 1.442695
        %v2977 = vpow.pop %v2976
        %v2978 = vmul.f32 %v2943, 1.442695
        %v2979 = vpow.pop %v2978
        %v2980 = vmul.f32 %v2944, 1.442695
        %v2981 = vpow.pop %v2980
        %v2982 = vmul.f32 %v2945, 1.442695
        %v2983 = vpow.pop %v2982
        %v2984 = vmul.f32 %v2946, 1.442695
        %v2985 = vpow.pop %v2984
        %v2986 = vmul.f32 %v2947, 1.442695
        %v2987 = vpow.pop %v2986
        %v2988 = vmul.f32 %v2948, 1.442695
        %v2989 = vpow.pop %v2988
        %v2990 = vmul.f32 %v2949, 1.442695
        %v2991 = vpow.pop %v2990
        %v2992 = vmul.f32 %v2950, 1.442695
        %v2993 = vpow.pop %v2992
        %v2994 = vmul.f32 %v2951, 1.442695
        %v2995 = vpow.pop %v2994
        %v2996 = vmul.f32 %v2952, 1.442695
        %v2997 = vpow.pop %v2996
        %v2998 = vmul.f32 %v2953, 1.442695
        %v2999 = vpow.pop %v2998
        %v3000 = vmul.f32 %v2954, 1.442695
        %v3001 = vpow.pop %v3000
        %v3002 = vmul.f32 %v2955, 1.442695
        %v3003 = vpow.pop %v3002
        %v3004 = vmul.f32 %v2956, 1.442695
        %v3005 = vpow.pop %v3004
        %v3006 = vmul.f32 %v2957, 1.442695
        %v3007 = vpow.pop %v3006
        %v3008 = vmul.f32 %v2958, 1.442695
        %v3009 = vpow.pop %v3008
        %v3010 = vmul.f32 %v2959, 1.442695
        %v3011 = vpow.pop %v3010
        %v3012 = vmul.f32 %v2960, 1.442695
        %v3013 = vpow.pop %v3012
        %v3014 = vmul.f32 %v2961, 1.442695
        %v3015 = vpow.pop %v3014
        %v3016 = vmul.f32 %v2962, 1.442695
        %v3017 = vpow.pop %v3016
        %v3018 = vmul.f32 %v2963, 1.442695
        %v3019 = vpow.pop %v3018
        %v3020 = vmul.f32 %v2964, 1.442695
        %v3021 = vpow.pop %v3020
        %v3022 = vmul.f32 %v2965, 1.442695
        %v3023 = vpow.pop %v3022
        %v3024 = vmul.f32 %v2966, 1.442695
        %v3025 = vpow.pop %v3024
        %v3026 = vmul.f32 %v2967, 1.442695
        %v3027 = vpow.pop %v3026
        %v3028 = vmul.f32 %v2968, 1.442695
        %v3029 = vpow.pop %v3028
        %v3030 = vmul.f32 %v2969, 1.442695
        %v3031 = vpow.pop %v3030
        %v3032 = vmul.f32 %v2970, 1.442695
        %v3033 = vpow.pop %v3032
        %v3034 = vmul.f32 %v2971, 1.442695
        %v3035 = vpow.pop %v3034
        %v3036 = vadd.f32 %v2973, %v2975
        %3037 = vadd.xlane.f32.xlu0 %v3036
        %v3038 = vpop.xlane.xlu0 %3037
        %v3039 = vadd.f32 %v2977, %v2979
        %3040 = vadd.xlane.f32.xlu0 %v3039
        %v3041 = vpop.xlane.xlu0 %3040
        %v3042 = vadd.f32 %v2981, %v2983
        %3043 = vadd.xlane.f32.xlu0 %v3042
        %v3044 = vpop.xlane.xlu0 %3043
        %v3045 = vadd.f32 %v2985, %v2987
        %3046 = vadd.xlane.f32.xlu0 %v3045
        %v3047 = vpop.xlane.xlu0 %3046
        %v3048 = vadd.f32 %v2989, %v2991
        %3049 = vadd.xlane.f32.xlu0 %v3048
        %v3050 = vpop.xlane.xlu0 %3049
        %v3051 = vadd.f32 %v2993, %v2995
        %3052 = vadd.xlane.f32.xlu0 %v3051
        %v3053 = vpop.xlane.xlu0 %3052
        %v3054 = vadd.f32 %v2997, %v2999
        %3055 = vadd.xlane.f32.xlu0 %v3054
        %v3056 = vpop.xlane.xlu0 %3055
        %v3057 = vadd.f32 %v3001, %v3003
        %3058 = vadd.xlane.f32.xlu0 %v3057
        %v3059 = vpop.xlane.xlu0 %3058
        %v3060 = vadd.f32 %v3005, %v3007
        %3061 = vadd.xlane.f32.xlu0 %v3060
        %v3062 = vpop.xlane.xlu0 %3061
        %v3063 = vadd.f32 %v3009, %v3011
        %3064 = vadd.xlane.f32.xlu0 %v3063
        %v3065 = vpop.xlane.xlu0 %3064
        %v3066 = vadd.f32 %v3013, %v3015
        %3067 = vadd.xlane.f32.xlu0 %v3066
        %v3068 = vpop.xlane.xlu0 %3067
        %v3069 = vadd.f32 %v3017, %v3019
        %3070 = vadd.xlane.f32.xlu0 %v3069
        %v3071 = vpop.xlane.xlu0 %3070
        %v3072 = vadd.f32 %v3021, %v3023
        %3073 = vadd.xlane.f32.xlu0 %v3072
        %v3074 = vpop.xlane.xlu0 %3073
        %v3075 = vadd.f32 %v3025, %v3027
        %3076 = vadd.xlane.f32.xlu0 %v3075
        %v3077 = vpop.xlane.xlu0 %3076
        %v3078 = vadd.f32 %v3029, %v3031
        %3079 = vadd.xlane.f32.xlu0 %v3078
        %v3080 = vpop.xlane.xlu0 %3079
        %v3081 = vadd.f32 %v3033, %v3035
        %3082 = vadd.xlane.f32.xlu0 %v3081
        %v3083 = vpop.xlane.xlu0 %3082
        %v3084 = vpack.c.bf16 %v2977, %v2973
        %v3085 = vpack.c.bf16 %v2979, %v2975
        %v3086 = vpack.c.bf16 %v2985, %v2981
        %v3087 = vpack.c.bf16 %v2987, %v2983
        %v3088 = vpack.c.bf16 %v2993, %v2989
        %v3089 = vpack.c.bf16 %v2995, %v2991
        %v3090 = vpack.c.bf16 %v3001, %v2997
        %v3091 = vpack.c.bf16 %v3003, %v2999
        %v3092 = vpack.c.bf16 %v3009, %v3005
        %v3093 = vpack.c.bf16 %v3011, %v3007
        %v3094 = vpack.c.bf16 %v3017, %v3013
        %v3095 = vpack.c.bf16 %v3019, %v3015
        %v3096 = vpack.c.bf16 %v3025, %v3021
        %v3097 = vpack.c.bf16 %v3027, %v3023
        %v3098 = vpack.c.bf16 %v3033, %v3029
        %v3099 = vpack.c.bf16 %v3035, %v3031
        %v3132 = vunpack.c.l.b16 %v2603
        %v3133 = vunpack.c.l.b16 %v2604
        %v3134 = vunpack.c.l.b16 %v2605
        %v3135 = vunpack.c.l.b16 %v2606
        %v3136 = vunpack.c.l.b16 %v2607
        %v3137 = vunpack.c.l.b16 %v2608
        %v3138 = vunpack.c.l.b16 %v2609
        %v3139 = vunpack.c.l.b16 %v2610
        %v3140 = vunpack.c.l.b16 %v2611
        %v3141 = vunpack.c.l.b16 %v2612
        %v3142 = vunpack.c.l.b16 %v2613
        %v3143 = vunpack.c.l.b16 %v2614
        %v3144 = vunpack.c.l.b16 %v2615
        %v3145 = vunpack.c.l.b16 %v2616
        %v3146 = vunpack.c.l.b16 %v2617
        %v3147 = vunpack.c.l.b16 %v2618
        %v3148 = vunpack.c.l.b16 %v2619
        %v3149 = vunpack.c.l.b16 %v2620
        %v3150 = vunpack.c.l.b16 %v2621
        %v3151 = vunpack.c.l.b16 %v2622
        %v3152 = vunpack.c.l.b16 %v2623
        %v3153 = vunpack.c.l.b16 %v2624
        %v3154 = vunpack.c.l.b16 %v2625
        %v3155 = vunpack.c.l.b16 %v2626
        %v3156 = vunpack.c.l.b16 %v2627
        %v3157 = vunpack.c.l.b16 %v2628
        %v3158 = vunpack.c.l.b16 %v2629
        %v3159 = vunpack.c.l.b16 %v2630
        %v3160 = vunpack.c.l.b16 %v2631
        %v3161 = vunpack.c.l.b16 %v2632
        %v3162 = vunpack.c.l.b16 %v2633
        %v3163 = vunpack.c.l.b16 %v2634
        %v3164 = vpack.c.b16 %v3133, %v3132
        %v3165 = vpack.c.b16 %v3135, %v3134
        %v3166 = vpack.c.b16 %v3137, %v3136
        %v3167 = vpack.c.b16 %v3139, %v3138
        %v3168 = vpack.c.b16 %v3141, %v3140
        %v3169 = vpack.c.b16 %v3143, %v3142
        %v3170 = vpack.c.b16 %v3145, %v3144
        %v3171 = vpack.c.b16 %v3147, %v3146
        %v3172 = vpack.c.b16 %v3149, %v3148
        %v3173 = vpack.c.b16 %v3151, %v3150
        %v3174 = vpack.c.b16 %v3153, %v3152
        %v3175 = vpack.c.b16 %v3155, %v3154
        %v3176 = vpack.c.b16 %v3157, %v3156
        %v3177 = vpack.c.b16 %v3159, %v3158
        %v3178 = vpack.c.b16 %v3161, %v3160
        %v3179 = vpack.c.b16 %v3163, %v3162
        %3196 = vmatprep.subr.bf16.mxu0 0
        %3197 = vmatpush1.bf16.msra.mxu0 %v3171
        %3198 = vmatprep.subr.bf16.mxu0 0
        %3199 = vmatpush1.bf16.msra.mxu0 %v3170
        %3200 = vmatprep.subr.bf16.mxu0 0
        %3201 = vmatpush1.bf16.msra.mxu0 %v3169
        %3202 = vmatprep.subr.bf16.mxu0 0
        %3203 = vmatpush1.bf16.msra.mxu0 %v3168
        %3204 = vmatprep.subr.bf16.mxu0 0
        %3205 = vmatpush1.bf16.msra.mxu0 %v3167
        %3206 = vmatprep.subr.bf16.mxu0 0
        %3207 = vmatpush1.bf16.msra.mxu0 %v3166
        %3208 = vmatprep.subr.bf16.mxu0 0
        %3209 = vmatpush1.bf16.msra.mxu0 %v3165
        %3210 = vmatprep.subr.bf16.mxu0 0
        %3211 = vmatpush1.bf16.msra.mxu0 %v3164
        %3212 = vmatprep.subr.bf16.mxu0 0
        %3213 = vmatpush2.bf16.msra.mxu0 %v3179
        %3214 = vmatprep.subr.bf16.mxu0 0
        %3215 = vmatpush2.bf16.msra.mxu0 %v3178
        %3216 = vmatprep.subr.bf16.mxu0 0
        %3217 = vmatpush2.bf16.msra.mxu0 %v3177
        %3218 = vmatprep.subr.bf16.mxu0 0
        %3219 = vmatpush2.bf16.msra.mxu0 %v3176
        %3220 = vmatprep.subr.bf16.mxu0 0
        %3221 = vmatpush2.bf16.msra.mxu0 %v3175
        %3222 = vmatprep.subr.bf16.mxu0 0
        %3223 = vmatpush2.bf16.msra.mxu0 %v3174
        %3224 = vmatprep.subr.bf16.mxu0 0
        %3225 = vmatpush2.bf16.msra.mxu0 %v3173
        %3226 = vmatprep.subr.bf16.mxu0 0
        %3227 = vmatpush2.bf16.msra.mxu0 %v3172
        %3228 = vmatprep.mubr.bf16.mxu0 %v3085
        %3229 = vmatmul.mubr.bf16.gmra.mxu0 %v3084
        %v3230 = vpop.f32.mrf.mxu0
        %v3231 = vadd.f32 0.0, %v3230
        %v3232 = vpop.f32.mrf.mxu0
        %v3233 = vpop.f32.mrf.mxu0
        %v3234 = vadd.f32 0.0, %v3233
        %v3235 = vpop.f32.mrf.mxu0
        %3236 = vmatprep.mubr.bf16.mxu0 %v3087
        %3237 = vmatmul.mubr.bf16.gmra.mxu0 %v3086
        %v3238 = vpop.f32.mrf.mxu0
        %v3239 = vadd.f32 0.0, %v3238
        %v3240 = vpop.f32.mrf.mxu0
        %v3241 = vpop.f32.mrf.mxu0
        %v3242 = vadd.f32 0.0, %v3241
        %v3243 = vpop.f32.mrf.mxu0
        %3244 = vmatprep.mubr.bf16.mxu0 %v3089
        %3245 = vmatmul.mubr.bf16.gmra.mxu0 %v3088
        %v3246 = vpop.f32.mrf.mxu0
        %v3247 = vadd.f32 0.0, %v3246
        %v3248 = vpop.f32.mrf.mxu0
        %v3249 = vpop.f32.mrf.mxu0
        %v3250 = vadd.f32 0.0, %v3249
        %v3251 = vpop.f32.mrf.mxu0
        %3252 = vmatprep.mubr.bf16.mxu0 %v3091
        %3253 = vmatmul.mubr.bf16.gmra.mxu0 %v3090
        %v3254 = vpop.f32.mrf.mxu0
        %v3255 = vadd.f32 0.0, %v3254
        %v3256 = vpop.f32.mrf.mxu0
        %v3257 = vpop.f32.mrf.mxu0
        %v3258 = vadd.f32 0.0, %v3257
        %v3259 = vpop.f32.mrf.mxu0
        %3260 = vmatprep.mubr.bf16.mxu0 %v3093
        %3261 = vmatmul.mubr.bf16.gmra.mxu0 %v3092
        %v3262 = vpop.f32.mrf.mxu0
        %v3263 = vadd.f32 0.0, %v3262
        %v3264 = vpop.f32.mrf.mxu0
        %v3265 = vpop.f32.mrf.mxu0
        %v3266 = vadd.f32 0.0, %v3265
        %v3267 = vpop.f32.mrf.mxu0
        %3268 = vmatprep.mubr.bf16.mxu0 %v3095
        %3269 = vmatmul.mubr.bf16.gmra.mxu0 %v3094
        %v3270 = vpop.f32.mrf.mxu0
        %v3271 = vadd.f32 0.0, %v3270
        %v3272 = vpop.f32.mrf.mxu0
        %v3273 = vpop.f32.mrf.mxu0
        %v3274 = vadd.f32 0.0, %v3273
        %v3275 = vpop.f32.mrf.mxu0
        %3276 = vmatprep.mubr.bf16.mxu0 %v3097
        %3277 = vmatmul.mubr.bf16.gmra.mxu0 %v3096
        %v3278 = vpop.f32.mrf.mxu0
        %v3279 = vadd.f32 0.0, %v3278
        %v3280 = vpop.f32.mrf.mxu0
        %v3281 = vpop.f32.mrf.mxu0
        %v3282 = vadd.f32 0.0, %v3281
        %v3283 = vpop.f32.mrf.mxu0
        %3284 = vmatprep.mubr.bf16.mxu0 %v3099
        %3285 = vmatmul.mubr.bf16.gmra.mxu0 %v3098
        %v3286 = vpop.f32.mrf.mxu0
        %v3287 = vadd.f32 0.0, %v3286
        %v3288 = vpop.f32.mrf.mxu0
        %v3289 = vpop.f32.mrf.mxu0
        %v3290 = vadd.f32 0.0, %v3289
        %v3291 = vpop.f32.mrf.mxu0
        %3292 = vdwg.mxu0
        %v3293 = vrcp.pop %v3038
        %v3294 = vrcp.pop %v3041
        %v3295 = vrcp.pop %v3044
        %v3296 = vrcp.pop %v3047
        %v3297 = vrcp.pop %v3050
        %v3298 = vrcp.pop %v3053
        %v3299 = vrcp.pop %v3056
        %v3300 = vrcp.pop %v3059
        %v3301 = vrcp.pop %v3062
        %v3302 = vrcp.pop %v3065
        %v3303 = vrcp.pop %v3068
        %v3304 = vrcp.pop %v3071
        %v3305 = vrcp.pop %v3074
        %v3306 = vrcp.pop %v3077
        %v3307 = vrcp.pop %v3080
        %v3308 = vrcp.pop %v3083
        %v3309 = vmul.f32 %v3231, %v3293
        %v3310 = vmul.f32 %v3234, %v3294
        %v3311 = vmul.f32 %v3239, %v3295
        %v3312 = vmul.f32 %v3242, %v3296
        %v3313 = vmul.f32 %v3247, %v3297
        %v3314 = vmul.f32 %v3250, %v3298
        %v3315 = vmul.f32 %v3255, %v3299
        %v3316 = vmul.f32 %v3258, %v3300
        %v3317 = vmul.f32 %v3263, %v3301
        %v3318 = vmul.f32 %v3266, %v3302
        %v3319 = vmul.f32 %v3271, %v3303
        %v3320 = vmul.f32 %v3274, %v3304
        %v3321 = vmul.f32 %v3279, %v3305
        %v3322 = vmul.f32 %v3282, %v3306
        %v3323 = vmul.f32 %v3287, %v3307
        %v3324 = vmul.f32 %v3290, %v3308
        %v3325 = vpack.c.bf16 %v3310, %v3309
        %v3326 = vpack.c.bf16 %v3312, %v3311
        %v3327 = vpack.c.bf16 %v3314, %v3313
        %v3328 = vpack.c.bf16 %v3316, %v3315
        %v3329 = vpack.c.bf16 %v3318, %v3317
        %v3330 = vpack.c.bf16 %v3320, %v3319
        %v3331 = vpack.c.bf16 %v3322, %v3321
        %v3332 = vpack.c.bf16 %v3324, %v3323
        %v3341 = vunpack.c.l.b16 %v3325
        %v3342 = vunpack.c.h.b16 %v3325
        %v3343 = vunpack.c.l.b16 %v3326
        %v3344 = vunpack.c.h.b16 %v3326
        %v3345 = vunpack.c.l.b16 %v3327
        %v3346 = vunpack.c.h.b16 %v3327
        %v3347 = vunpack.c.l.b16 %v3328
        %v3348 = vunpack.c.h.b16 %v3328
        %v3349 = vunpack.c.l.b16 %v3329
        %v3350 = vunpack.c.h.b16 %v3329
        %v3351 = vunpack.c.l.b16 %v3330
        %v3352 = vunpack.c.h.b16 %v3330
        %v3353 = vunpack.c.l.b16 %v3331
        %v3354 = vunpack.c.h.b16 %v3331
        %v3355 = vunpack.c.l.b16 %v3332
        %v3356 = vunpack.c.h.b16 %v3332
        %v3357 = vpack.c.b16 %v3341, %v3341
        %v3358 = vpack.c.b16 %v3342, %v3342
        %v3359 = vpack.c.b16 %v3343, %v3343
        %v3360 = vpack.c.b16 %v3344, %v3344
        %v3361 = vpack.c.b16 %v3345, %v3345
        %v3362 = vpack.c.b16 %v3346, %v3346
        %v3363 = vpack.c.b16 %v3347, %v3347
        %v3364 = vpack.c.b16 %v3348, %v3348
        %v3365 = vpack.c.b16 %v3349, %v3349
        %v3366 = vpack.c.b16 %v3350, %v3350
        %v3367 = vpack.c.b16 %v3351, %v3351
        %v3368 = vpack.c.b16 %v3352, %v3352
        %v3369 = vpack.c.b16 %v3353, %v3353
        %v3370 = vpack.c.b16 %v3354, %v3354
        %v3371 = vpack.c.b16 %v3355, %v3355
        %v3372 = vpack.c.b16 %v3356, %v3356
        %3389 = vst [vmem:[#allocation3 + $0x4] sm:$0xf] %v3357
        %3390 = vst [vmem:[#allocation3 + $0xc] sm:$0xf] %v3358
        %3391 = vst [vmem:[#allocation3 + $0x14] sm:$0xf] %v3359
        %3392 = vst [vmem:[#allocation3 + $0x1c] sm:$0xf] %v3360
        %3393 = vst [vmem:[#allocation3 + $0x24] sm:$0xf] %v3361
        %3394 = vst [vmem:[#allocation3 + $0x2c] sm:$0xf] %v3362
        %3395 = vst [vmem:[#allocation3 + $0x34] sm:$0xf] %v3363
        %3396 = vst [vmem:[#allocation3 + $0x3c] sm:$0xf] %v3364
        %3397 = vst [vmem:[#allocation3 + $0x44] sm:$0xf] %v3365
        %3398 = vst [vmem:[#allocation3 + $0x4c] sm:$0xf] %v3366
        %3399 = vst [vmem:[#allocation3 + $0x54] sm:$0xf] %v3367
        %3400 = vst [vmem:[#allocation3 + $0x5c] sm:$0xf] %v3368
        %3401 = vst [vmem:[#allocation3 + $0x64] sm:$0xf] %v3369
        %3402 = vst [vmem:[#allocation3 + $0x6c] sm:$0xf] %v3370
        %3403 = vst [vmem:[#allocation3 + $0x74] sm:$0xf] %v3371
        %3404 = vst [vmem:[#allocation3 + $0x7c] sm:$0xf] %v3372
        %v3405 = vld [vmem:[#allocation3] sm:$0xff]
        %v3406 = vld [vmem:[#allocation3 + $0x8] sm:$0xff]
        %v3407 = vld [vmem:[#allocation3 + $0x10] sm:$0xff]
        %v3408 = vld [vmem:[#allocation3 + $0x18] sm:$0xff]
        %v3409 = vld [vmem:[#allocation3 + $0x20] sm:$0xff]
        %v3410 = vld [vmem:[#allocation3 + $0x28] sm:$0xff]
        %v3411 = vld [vmem:[#allocation3 + $0x30] sm:$0xff]
        %v3412 = vld [vmem:[#allocation3 + $0x38] sm:$0xff]
        %v3413 = vld [vmem:[#allocation3 + $0x40] sm:$0xff]
        %v3414 = vld [vmem:[#allocation3 + $0x48] sm:$0xff]
        %v3415 = vld [vmem:[#allocation3 + $0x50] sm:$0xff]
        %v3416 = vld [vmem:[#allocation3 + $0x58] sm:$0xff]
        %v3417 = vld [vmem:[#allocation3 + $0x60] sm:$0xff]
        %v3418 = vld [vmem:[#allocation3 + $0x68] sm:$0xff]
        %v3419 = vld [vmem:[#allocation3 + $0x70] sm:$0xff]
        %v3420 = vld [vmem:[#allocation3 + $0x78] sm:$0xff]
        %v3421 = vld [vmem:[#allocation10] sm:$0xff]
        %v3422 = vld [vmem:[#allocation10 + $0x8] sm:$0xff]
        %v3423 = vld [vmem:[#allocation10 + $0x10] sm:$0xff]
        %v3424 = vld [vmem:[#allocation10 + $0x18] sm:$0xff]
        %v3425 = vld [vmem:[#allocation10 + $0x20] sm:$0xff]
        %v3426 = vld [vmem:[#allocation10 + $0x28] sm:$0xff]
        %v3427 = vld [vmem:[#allocation10 + $0x30] sm:$0xff]
        %v3428 = vld [vmem:[#allocation10 + $0x38] sm:$0xff]
        %v3429 = vld [vmem:[#allocation10 + $0x40] sm:$0xff]
        %v3430 = vld [vmem:[#allocation10 + $0x48] sm:$0xff]
        %v3431 = vld [vmem:[#allocation10 + $0x50] sm:$0xff]
        %v3432 = vld [vmem:[#allocation10 + $0x58] sm:$0xff]
        %v3433 = vld [vmem:[#allocation10 + $0x60] sm:$0xff]
        %v3434 = vld [vmem:[#allocation10 + $0x68] sm:$0xff]
        %v3435 = vld [vmem:[#allocation10 + $0x70] sm:$0xff]
        %v3436 = vld [vmem:[#allocation10 + $0x78] sm:$0xff]
        %v3437 = vld [vmem:[#allocation10 + $0x80] sm:$0xff]
        %v3438 = vld [vmem:[#allocation10 + $0x88] sm:$0xff]
        %v3439 = vld [vmem:[#allocation10 + $0x90] sm:$0xff]
        %v3440 = vld [vmem:[#allocation10 + $0x98] sm:$0xff]
        %v3441 = vld [vmem:[#allocation10 + $0xa0] sm:$0xff]
        %v3442 = vld [vmem:[#allocation10 + $0xa8] sm:$0xff]
        %v3443 = vld [vmem:[#allocation10 + $0xb0] sm:$0xff]
        %v3444 = vld [vmem:[#allocation10 + $0xb8] sm:$0xff]
        %v3445 = vld [vmem:[#allocation10 + $0xc0] sm:$0xff]
        %v3446 = vld [vmem:[#allocation10 + $0xc8] sm:$0xff]
        %v3447 = vld [vmem:[#allocation10 + $0xd0] sm:$0xff]
        %v3448 = vld [vmem:[#allocation10 + $0xd8] sm:$0xff]
        %v3449 = vld [vmem:[#allocation10 + $0xe0] sm:$0xff]
        %v3450 = vld [vmem:[#allocation10 + $0xe8] sm:$0xff]
        %v3451 = vld [vmem:[#allocation10 + $0xf0] sm:$0xff]
        %v3452 = vld [vmem:[#allocation10 + $0xf8] sm:$0xff]
        %v3453 = vld [vmem:[%s4] sm:$0x3]
        %v3455 = vlaneseq
        %v3456 = vshrl.u32 %v3455, 7
        %v3457 = vsub.s32 0, %v3456
        %v3458 = vrot.slane %v3453, %v3457
        %v3459 = vlaneseq
        %v3460 = vshrl.u32 %v3459, 7
        %v3461 = vsub.s32 1, %v3460
        %v3462 = vrot.slane %v3453, %v3461
        %v3481 = vunpack.c.l.b16 %v3405
        %v3482 = vunpack.c.h.b16 %v3405
        %v3483 = vunpack.c.l.b16 %v3406
        %v3484 = vunpack.c.h.b16 %v3406
        %v3485 = vunpack.c.l.b16 %v3407
        %v3486 = vunpack.c.h.b16 %v3407
        %v3487 = vunpack.c.l.b16 %v3408
        %v3488 = vunpack.c.h.b16 %v3408
        %v3489 = vunpack.c.l.b16 %v3409
        %v3490 = vunpack.c.h.b16 %v3409
        %v3491 = vunpack.c.l.b16 %v3410
        %v3492 = vunpack.c.h.b16 %v3410
        %v3493 = vunpack.c.l.b16 %v3411
        %v3494 = vunpack.c.h.b16 %v3411
        %v3495 = vunpack.c.l.b16 %v3412
        %v3496 = vunpack.c.h.b16 %v3412
        %v3497 = vunpack.c.l.b16 %v3413
        %v3498 = vunpack.c.h.b16 %v3413
        %v3499 = vunpack.c.l.b16 %v3414
        %v3500 = vunpack.c.h.b16 %v3414
        %v3501 = vunpack.c.l.b16 %v3415
        %v3502 = vunpack.c.h.b16 %v3415
        %v3503 = vunpack.c.l.b16 %v3416
        %v3504 = vunpack.c.h.b16 %v3416
        %v3505 = vunpack.c.l.b16 %v3417
        %v3506 = vunpack.c.h.b16 %v3417
        %v3507 = vunpack.c.l.b16 %v3418
        %v3508 = vunpack.c.h.b16 %v3418
        %v3509 = vunpack.c.l.b16 %v3419
        %v3510 = vunpack.c.h.b16 %v3419
        %v3511 = vunpack.c.l.b16 %v3420
        %v3512 = vunpack.c.h.b16 %v3420
        %v3513 = vpack.c.b16 %v3483, %v3481
        %v3514 = vpack.c.b16 %v3484, %v3482
        %v3515 = vpack.c.b16 %v3487, %v3485
        %v3516 = vpack.c.b16 %v3488, %v3486
        %v3517 = vpack.c.b16 %v3491, %v3489
        %v3518 = vpack.c.b16 %v3492, %v3490
        %v3519 = vpack.c.b16 %v3495, %v3493
        %v3520 = vpack.c.b16 %v3496, %v3494
        %v3521 = vpack.c.b16 %v3499, %v3497
        %v3522 = vpack.c.b16 %v3500, %v3498
        %v3523 = vpack.c.b16 %v3503, %v3501
        %v3524 = vpack.c.b16 %v3504, %v3502
        %v3525 = vpack.c.b16 %v3507, %v3505
        %v3526 = vpack.c.b16 %v3508, %v3506
        %v3527 = vpack.c.b16 %v3511, %v3509
        %v3528 = vpack.c.b16 %v3512, %v3510
        %v3577 = vunpack.c.l.b16 %v3421
        %v3578 = vunpack.c.h.b16 %v3421
        %v3579 = vunpack.c.l.b16 %v3422
        %v3580 = vunpack.c.h.b16 %v3422
        %v3581 = vunpack.c.l.b16 %v3423
        %v3582 = vunpack.c.h.b16 %v3423
        %v3583 = vunpack.c.l.b16 %v3424
        %v3584 = vunpack.c.h.b16 %v3424
        %v3585 = vunpack.c.l.b16 %v3425
        %v3586 = vunpack.c.h.b16 %v3425
        %v3587 = vunpack.c.l.b16 %v3426
        %v3588 = vunpack.c.h.b16 %v3426
        %v3589 = vunpack.c.l.b16 %v3427
        %v3590 = vunpack.c.h.b16 %v3427
        %v3591 = vunpack.c.l.b16 %v3428
        %v3592 = vunpack.c.h.b16 %v3428
        %v3593 = vunpack.c.l.b16 %v3429
        %v3594 = vunpack.c.h.b16 %v3429
        %v3595 = vunpack.c.l.b16 %v3430
        %v3596 = vunpack.c.h.b16 %v3430
        %v3597 = vunpack.c.l.b16 %v3431
        %v3598 = vunpack.c.h.b16 %v3431
        %v3599 = vunpack.c.l.b16 %v3432
        %v3600 = vunpack.c.h.b16 %v3432
        %v3601 = vunpack.c.l.b16 %v3433
        %v3602 = vunpack.c.h.b16 %v3433
        %v3603 = vunpack.c.l.b16 %v3434
        %v3604 = vunpack.c.h.b16 %v3434
        %v3605 = vunpack.c.l.b16 %v3435
        %v3606 = vunpack.c.h.b16 %v3435
        %v3607 = vunpack.c.l.b16 %v3436
        %v3608 = vunpack.c.h.b16 %v3436
        %v3609 = vunpack.c.l.b16 %v3437
        %v3610 = vunpack.c.h.b16 %v3437
        %v3611 = vunpack.c.l.b16 %v3438
        %v3612 = vunpack.c.h.b16 %v3438
        %v3613 = vunpack.c.l.b16 %v3439
        %v3614 = vunpack.c.h.b16 %v3439
        %v3615 = vunpack.c.l.b16 %v3440
        %v3616 = vunpack.c.h.b16 %v3440
        %v3617 = vunpack.c.l.b16 %v3441
        %v3618 = vunpack.c.h.b16 %v3441
        %v3619 = vunpack.c.l.b16 %v3442
        %v3620 = vunpack.c.h.b16 %v3442
        %v3621 = vunpack.c.l.b16 %v3443
        %v3622 = vunpack.c.h.b16 %v3443
        %v3623 = vunpack.c.l.b16 %v3444
        %v3624 = vunpack.c.h.b16 %v3444
        %v3625 = vunpack.c.l.b16 %v3445
        %v3626 = vunpack.c.h.b16 %v3445
        %v3627 = vunpack.c.l.b16 %v3446
        %v3628 = vunpack.c.h.b16 %v3446
        %v3629 = vunpack.c.l.b16 %v3447
        %v3630 = vunpack.c.h.b16 %v3447
        %v3631 = vunpack.c.l.b16 %v3448
        %v3632 = vunpack.c.h.b16 %v3448
        %v3633 = vunpack.c.l.b16 %v3449
        %v3634 = vunpack.c.h.b16 %v3449
        %v3635 = vunpack.c.l.b16 %v3450
        %v3636 = vunpack.c.h.b16 %v3450
        %v3637 = vunpack.c.l.b16 %v3451
        %v3638 = vunpack.c.h.b16 %v3451
        %v3639 = vunpack.c.l.b16 %v3452
        %v3640 = vunpack.c.h.b16 %v3452
        %v3641 = vpack.c.b16 %v3579, %v3577
        %v3642 = vpack.c.b16 %v3580, %v3578
        %v3643 = vpack.c.b16 %v3583, %v3581
        %v3644 = vpack.c.b16 %v3584, %v3582
        %v3645 = vpack.c.b16 %v3587, %v3585
        %v3646 = vpack.c.b16 %v3588, %v3586
        %v3647 = vpack.c.b16 %v3591, %v3589
        %v3648 = vpack.c.b16 %v3592, %v3590
        %v3649 = vpack.c.b16 %v3595, %v3593
        %v3650 = vpack.c.b16 %v3596, %v3594
        %v3651 = vpack.c.b16 %v3599, %v3597
        %v3652 = vpack.c.b16 %v3600, %v3598
        %v3653 = vpack.c.b16 %v3603, %v3601
        %v3654 = vpack.c.b16 %v3604, %v3602
        %v3655 = vpack.c.b16 %v3607, %v3605
        %v3656 = vpack.c.b16 %v3608, %v3606
        %v3657 = vpack.c.b16 %v3611, %v3609
        %v3658 = vpack.c.b16 %v3612, %v3610
        %v3659 = vpack.c.b16 %v3615, %v3613
        %v3660 = vpack.c.b16 %v3616, %v3614
        %v3661 = vpack.c.b16 %v3619, %v3617
        %v3662 = vpack.c.b16 %v3620, %v3618
        %v3663 = vpack.c.b16 %v3623, %v3621
        %v3664 = vpack.c.b16 %v3624, %v3622
        %v3665 = vpack.c.b16 %v3627, %v3625
        %v3666 = vpack.c.b16 %v3628, %v3626
        %v3667 = vpack.c.b16 %v3631, %v3629
        %v3668 = vpack.c.b16 %v3632, %v3630
        %v3669 = vpack.c.b16 %v3635, %v3633
        %v3670 = vpack.c.b16 %v3636, %v3634
        %v3671 = vpack.c.b16 %v3639, %v3637
        %v3672 = vpack.c.b16 %v3640, %v3638
        %3705 = vmatprep.subr.bf16.mxu0 %v3656
        %3706 = vmatpush1.bf16.msra.mxu0 %v3655
        %3707 = vmatprep.subr.bf16.mxu0 %v3654
        %3708 = vmatpush1.bf16.msra.mxu0 %v3653
        %3709 = vmatprep.subr.bf16.mxu0 %v3652
        %3710 = vmatpush1.bf16.msra.mxu0 %v3651
        %3711 = vmatprep.subr.bf16.mxu0 %v3650
        %3712 = vmatpush1.bf16.msra.mxu0 %v3649
        %3713 = vmatprep.subr.bf16.mxu0 %v3648
        %3714 = vmatpush1.bf16.msra.mxu0 %v3647
        %3715 = vmatprep.subr.bf16.mxu0 %v3646
        %3716 = vmatpush1.bf16.msra.mxu0 %v3645
        %3717 = vmatprep.subr.bf16.mxu0 %v3644
        %3718 = vmatpush1.bf16.msra.mxu0 %v3643
        %3719 = vmatprep.subr.bf16.mxu0 %v3642
        %3720 = vmatpush1.bf16.msra.mxu0 %v3641
        %3721 = vmatprep.subr.bf16.mxu0 %v3672
        %3722 = vmatpush2.bf16.msra.mxu0 %v3671
        %3723 = vmatprep.subr.bf16.mxu0 %v3670
        %3724 = vmatpush2.bf16.msra.mxu0 %v3669
        %3725 = vmatprep.subr.bf16.mxu0 %v3668
        %3726 = vmatpush2.bf16.msra.mxu0 %v3667
        %3727 = vmatprep.subr.bf16.mxu0 %v3666
        %3728 = vmatpush2.bf16.msra.mxu0 %v3665
        %3729 = vmatprep.subr.bf16.mxu0 %v3664
        %3730 = vmatpush2.bf16.msra.mxu0 %v3663
        %3731 = vmatprep.subr.bf16.mxu0 %v3662
        %3732 = vmatpush2.bf16.msra.mxu0 %v3661
        %3733 = vmatprep.subr.bf16.mxu0 %v3660
        %3734 = vmatpush2.bf16.msra.mxu0 %v3659
        %3735 = vmatprep.subr.bf16.mxu0 %v3658
        %3736 = vmatpush2.bf16.msra.mxu0 %v3657
        %3737 = vmatprep.mubr.bf16.mxu0 %v3514
        %3738 = vmatmul.mubr.bf16.gmra.mxu0 %v3513
        %v3739 = vpop.f32.mrf.mxu0
        %v3740 = vadd.f32 %v3458, %v3739
        %v3741 = vpop.f32.mrf.mxu0
        %v3742 = vadd.f32 %v3462, %v3741
        %v3743 = vpop.f32.mrf.mxu0
        %v3744 = vadd.f32 %v3458, %v3743
        %v3745 = vpop.f32.mrf.mxu0
        %v3746 = vadd.f32 %v3462, %v3745
        %3747 = vmatprep.mubr.bf16.mxu0 %v3516
        %3748 = vmatmul.mubr.bf16.gmra.mxu0 %v3515
        %v3749 = vpop.f32.mrf.mxu0
        %v3750 = vadd.f32 %v3458, %v3749
        %v3751 = vpop.f32.mrf.mxu0
        %v3752 = vadd.f32 %v3462, %v3751
        %v3753 = vpop.f32.mrf.mxu0
        %v3754 = vadd.f32 %v3458, %v3753
        %v3755 = vpop.f32.mrf.mxu0
        %v3756 = vadd.f32 %v3462, %v3755
        %3757 = vmatprep.mubr.bf16.mxu0 %v3518
        %3758 = vmatmul.mubr.bf16.gmra.mxu0 %v3517
        %v3759 = vpop.f32.mrf.mxu0
        %v3760 = vadd.f32 %v3458, %v3759
        %v3761 = vpop.f32.mrf.mxu0
        %v3762 = vadd.f32 %v3462, %v3761
        %v3763 = vpop.f32.mrf.mxu0
        %v3764 = vadd.f32 %v3458, %v3763
        %v3765 = vpop.f32.mrf.mxu0
        %v3766 = vadd.f32 %v3462, %v3765
        %3767 = vmatprep.mubr.bf16.mxu0 %v3520
        %3768 = vmatmul.mubr.bf16.gmra.mxu0 %v3519
        %v3769 = vpop.f32.mrf.mxu0
        %v3770 = vadd.f32 %v3458, %v3769
        %v3771 = vpop.f32.mrf.mxu0
        %v3772 = vadd.f32 %v3462, %v3771
        %v3773 = vpop.f32.mrf.mxu0
        %v3774 = vadd.f32 %v3458, %v3773
        %v3775 = vpop.f32.mrf.mxu0
        %v3776 = vadd.f32 %v3462, %v3775
        %3777 = vmatprep.mubr.bf16.mxu0 %v3522
        %3778 = vmatmul.mubr.bf16.gmra.mxu0 %v3521
        %v3779 = vpop.f32.mrf.mxu0
        %v3780 = vadd.f32 %v3458, %v3779
        %v3781 = vpop.f32.mrf.mxu0
        %v3782 = vadd.f32 %v3462, %v3781
        %v3783 = vpop.f32.mrf.mxu0
        %v3784 = vadd.f32 %v3458, %v3783
        %v3785 = vpop.f32.mrf.mxu0
        %v3786 = vadd.f32 %v3462, %v3785
        %3787 = vmatprep.mubr.bf16.mxu0 %v3524
        %3788 = vmatmul.mubr.bf16.gmra.mxu0 %v3523
        %v3789 = vpop.f32.mrf.mxu0
        %v3790 = vadd.f32 %v3458, %v3789
        %v3791 = vpop.f32.mrf.mxu0
        %v3792 = vadd.f32 %v3462, %v3791
        %v3793 = vpop.f32.mrf.mxu0
        %v3794 = vadd.f32 %v3458, %v3793
        %v3795 = vpop.f32.mrf.mxu0
        %v3796 = vadd.f32 %v3462, %v3795
        %3797 = vmatprep.mubr.bf16.mxu0 %v3526
        %3798 = vmatmul.mubr.bf16.gmra.mxu0 %v3525
        %v3799 = vpop.f32.mrf.mxu0
        %v3800 = vadd.f32 %v3458, %v3799
        %v3801 = vpop.f32.mrf.mxu0
        %v3802 = vadd.f32 %v3462, %v3801
        %v3803 = vpop.f32.mrf.mxu0
        %v3804 = vadd.f32 %v3458, %v3803
        %v3805 = vpop.f32.mrf.mxu0
        %v3806 = vadd.f32 %v3462, %v3805
        %3807 = vmatprep.mubr.bf16.mxu0 %v3528
        %3808 = vmatmul.mubr.bf16.gmra.mxu0 %v3527
        %v3809 = vpop.f32.mrf.mxu0
        %v3810 = vadd.f32 %v3458, %v3809
        %v3811 = vpop.f32.mrf.mxu0
        %v3812 = vadd.f32 %v3462, %v3811
        %v3813 = vpop.f32.mrf.mxu0
        %v3814 = vadd.f32 %v3458, %v3813
        %v3815 = vpop.f32.mrf.mxu0
        %v3816 = vadd.f32 %v3462, %v3815
        %3817 = vdwg.mxu0
        %3818 = vst [vmem:[%s298] sm:$0xff] %v3740
        %3819 = vst [vmem:[%s298 + $0x8] sm:$0xff] %v3742
        %3820 = vst [vmem:[%s298 + $0x10] sm:$0xff] %v3744
        %3821 = vst [vmem:[%s298 + $0x18] sm:$0xff] %v3746
        %3822 = vst [vmem:[%s298 + $0x20] sm:$0xff] %v3750
        %3823 = vst [vmem:[%s298 + $0x28] sm:$0xff] %v3752
        %3824 = vst [vmem:[%s298 + $0x30] sm:$0xff] %v3754
        %3825 = vst [vmem:[%s298 + $0x38] sm:$0xff] %v3756
        %3826 = vst [vmem:[%s298 + $0x40] sm:$0xff] %v3760
        %3827 = vst [vmem:[%s298 + $0x48] sm:$0xff] %v3762
        %3828 = vst [vmem:[%s298 + $0x50] sm:$0xff] %v3764
        %3829 = vst [vmem:[%s298 + $0x58] sm:$0xff] %v3766
        %3830 = vst [vmem:[%s298 + $0x60] sm:$0xff] %v3770
        %3831 = vst [vmem:[%s298 + $0x68] sm:$0xff] %v3772
        %3832 = vst [vmem:[%s298 + $0x70] sm:$0xff] %v3774
        %3833 = vst [vmem:[%s298 + $0x78] sm:$0xff] %v3776
        %3834 = vst [vmem:[%s298 + $0x80] sm:$0xff] %v3780
        %3835 = vst [vmem:[%s298 + $0x88] sm:$0xff] %v3782
        %3836 = vst [vmem:[%s298 + $0x90] sm:$0xff] %v3784
        %3837 = vst [vmem:[%s298 + $0x98] sm:$0xff] %v3786
        %3838 = vst [vmem:[%s298 + $0xa0] sm:$0xff] %v3790
        %3839 = vst [vmem:[%s298 + $0xa8] sm:$0xff] %v3792
        %3840 = vst [vmem:[%s298 + $0xb0] sm:$0xff] %v3794
        %3841 = vst [vmem:[%s298 + $0xb8] sm:$0xff] %v3796
        %3842 = vst [vmem:[%s298 + $0xc0] sm:$0xff] %v3800
        %3843 = vst [vmem:[%s298 + $0xc8] sm:$0xff] %v3802
        %3844 = vst [vmem:[%s298 + $0xd0] sm:$0xff] %v3804
        %3845 = vst [vmem:[%s298 + $0xd8] sm:$0xff] %v3806
        %3846 = vst [vmem:[%s298 + $0xe0] sm:$0xff] %v3810
        %3847 = vst [vmem:[%s298 + $0xe8] sm:$0xff] %v3812
        %3848 = vst [vmem:[%s298 + $0xf0] sm:$0xff] %v3814
        %3849 = vst [vmem:[%s298 + $0xf8] sm:$0xff] %v3816
        %s3850 = sand.u32 %s156, 1
        %s3851 = scalar_lea.sflag [#allocation6], %s3850
        %s3852 = sand.u32 %s156, 1
        %s3853 = smul.addr %s3852, 256
        %s3854 = scalar_lea.vmem [#allocation12], %s3853
        // Predicated region
        $region68: #{tpu_custom_call.1} parent=39 // pred_check
          %p3855 = pneg %p166
        $region69: #{tpu_custom_call.1} parent=39 // pred_check_branch
          %3857 = sbr.rel (%p3855) target = $region71
        $region70: #{tpu_custom_call.1} parent=39 // pred_region
          %s3858 = smul.u32 16, %s29
          %s3860 = ssub.s32 4096, 4096
          %3861 = vsyncadd %s3851, %s3860
          %s3862 = smul.addr %s3858, 2
          %s3863 = smul.addr %s28, 64
          %s3864 = sadd.s32 %s3862, %s3863
          %s3865 = smul.addr %s3864, 128
          %s3866 = scalar_lea.hbm %s5, %s3865
          %s3867 = sshll.u32 %s3854, 4
          %s3868 = int_to_ptr.vmem [resolvable:$true] %s3867
          %3873 = dma.vmem_to_hbm [thread:$0]  %s3868, 4096, %s3866, %s3851, 256, 256, 16
        $region71: #{tpu_custom_call.1} parent=39 // pred_fallthru
          _
      $region40: #{tpu_custom_call.1} parent=5 // pred_fallthru
        _
      %p3874 = scmp.le.s32.totalorder 2, %s19
      // Predicated region
      $region72: #{tpu_custom_call.1} parent=5 // pred_check
        %p3875 = pneg %p3874
      $region73: #{tpu_custom_call.1} parent=5 // pred_check_branch
        %3877 = sbr.rel (%p3875) target = $region75
      $region74: #{tpu_custom_call.1} parent=5 // pred_region
        %s3878 = ssub.s32 %s19, 2
        // Predicated region
        $region76: #{tpu_custom_call.1} parent=74 // pred_check
          %p3879 = pneg %p172
        $region77: #{tpu_custom_call.1} parent=74 // pred_check_branch
          %3881 = sbr.rel (%p3879) target = $region79
        $region78: #{tpu_custom_call.1} parent=74 // pred_region
          %s3882 = sand.u32 %s157, 1
          %s3883 = scalar_lea.sflag [#allocation6], %s3882
          %s3884 = sand.u32 %s157, 1
          %s3885 = smul.addr %s3884, 256
          %s3886 = scalar_lea.vmem [#allocation12], %s3885
          %3887 = dma.done %s3883, 4096
        $region79: #{tpu_custom_call.1} parent=74 // pred_fallthru
          _
      $region75: #{tpu_custom_call.1} parent=5 // pred_fallthru
        _
    $region6: #{tpu_custom_call.1} parent=1 // loop_footer
      %s23 = sadd.s32 1, %s19
    $region7: #{tpu_custom_call.1} parent=1 // loop_footer_branch
      %18 = sbr.rel target = $region3
    $region8: #{tpu_custom_call.1} parent=1 // loop_exit
      _
    %3888 = vsyncpa [#allocation5], 1
    %s3889 = scalar_lea.sflag [#allocation5], 1
    %3890 = vsyncpa %s3889, 1
    %3891 = vsyncpa [#allocation8], 1
    %3892 = vsyncpa [#allocation11], 1
    %3893 = vsyncpa [#allocation6], 1
    %s3894 = scalar_lea.sflag [#allocation6], 1
    %3895 = vsyncpa %s3894, 1

</llo_original>
